<compile_context>
chip_gen: v7x
topology: tpu7x:2x2x1
jax: 0.10.0
libtpu: 0.0.40
codegen_flags: <defaults>
</compile_context>

<pallas_src>
import functools

import jax
import jax.numpy as jnp
from jax.experimental import pallas as pl
from jax.experimental.pallas import tpu as pltpu


# ---------------------------------------------------------------------------
# Fused matmul + bias + (optional) sigmoid kernel
# ---------------------------------------------------------------------------

def _mm_bias_act_kernel(x_ref, w_ref, b_ref, o_ref, *, sigmoid):
    y = jnp.dot(x_ref[...], w_ref[...], preferred_element_type=jnp.float32)
    y = y + b_ref[...]
    if sigmoid:
        y = 1.0 / (1.0 + jnp.exp(-y))   # exp/div go to EUP; slot is free next to MXU
    o_ref[...] = y.astype(o_ref.dtype)


def matmul_bias_act(x, w, b, *, sigmoid):
    """y = act(x @ w + b).  x: (M, K), w: (K, N), b: (N,).

    LeNet operand sizes are tiny (M <= 1568, K <= 400, N <= 120), so everything is a
    single full-array block: weight stays VMEM-resident, no K-loop, no padding copies.
    """
    M, K = x.shape
    K2, N = w.shape
    assert K == K2
    cost = pl.CostEstimate(
        flops=2 * M * K * N,
        transcendentals=(M * N if sigmoid else 0),
        bytes_accessed=4 * (M * K + K * N + N + M * N),
    )
    return pl.pallas_call(
        functools.partial(_mm_bias_act_kernel, sigmoid=sigmoid),
        out_shape=jax.ShapeDtypeStruct((M, N), jnp.float32),
        cost_estimate=cost,
    )(x, w, b.reshape(1, N))


# ---------------------------------------------------------------------------
# 2x2 average pool kernel (stride 2), NHWC, no transpose glue
# ---------------------------------------------------------------------------

def _avgpool_kernel(x_ref, o_ref):
    # x_ref block: (N, 2, Wo, 2, C) -- two input rows; W split into (Wo, 2) column pairs.
    x = x_ref[...]
    s = (x[:, 0, :, 0, :] + x[:, 0, :, 1, :]
         + x[:, 1, :, 0, :] + x[:, 1, :, 1, :])          # (N, Wo, C)
    o_ref[:, 0] = s * 0.25


def avgpool2x2(x):
    """nn.AvgPool2d(2) on an NHWC tensor (H, W even)."""
    N, H, W, C = x.shape
    Ho, Wo = H // 2, W // 2
    # Contiguous (free) reshape only -- no transpose copy: (N, H, W, C) -> (N, H, Wo, 2, C).
    xr = x.reshape(N, H, Wo, 2, C)
    return pl.pallas_call(
        _avgpool_kernel,
        out_shape=jax.ShapeDtypeStruct((N, Ho, Wo, C), x.dtype),
        grid=(Ho,),
        in_specs=[pl.BlockSpec((N, 2, Wo, 2, C), lambda r: (0, r, 0, 0, 0))],
        out_specs=pl.BlockSpec((N, 1, Wo, C), lambda r: (0, r, 0, 0)),
        compiler_params=pltpu.CompilerParams(dimension_semantics=("parallel",)),
    )(xr)


# ---------------------------------------------------------------------------
# 5x5 'valid' conv + bias + sigmoid  (im2col + fused matmul)
# ---------------------------------------------------------------------------

def conv5x5_sigmoid(x, w2d, b):
    """x: NHWC, w2d: (25*Cin, Cout) pre-transposed in (kh, kw, cin) tap order."""
    N, H, W, C = x.shape
    Cout = w2d.shape[1]
    Ho, Wo = H - 4, W - 4
    # Glue: im2col.  At LeNet scale the patch matrix is < 160 KB, so materializing it
    # is negligible; tap order (kh, kw, cin) matches the pre-transposed weight matrix.
    patches = [x[:, i:i + Ho, j:j + Wo, :] for i in range(5) for j in range(5)]
    p = jnp.stack(patches, axis=3).reshape(N * Ho * Wo, 25 * C)
    y = matmul_bias_act(p, w2d, b, sigmoid=True)
    return y.reshape(N, Ho, Wo, Cout)


# ---------------------------------------------------------------------------
# LeNet parameters + forward
# ---------------------------------------------------------------------------

_CONV_DEFS = [(1, 6), (6, 16), (16, 120)]   # (Cin, Cout), kernel 5x5, 'valid'


def init_params(key, n_out):
    """Parameters in PyTorch layout: Conv2d (Cout, Cin, 5, 5); Linear (out, in)."""
    params = {"conv": [], "fc": []}
    for cin, cout in _CONV_DEFS:
        key, kw, kb = jax.random.split(key, 3)
        std = (1.0 / (cin * 25)) ** 0.5
        w = std * jax.random.normal(kw, (cout, cin, 5, 5), jnp.float32)
        b = 0.01 * jax.random.normal(kb, (cout,), jnp.float32)
        params["conv"].append((w, b))
    for fin, fout in [(120, 84), (84, n_out)]:
        key, kw, kb = jax.random.split(key, 3)
        std = (1.0 / fin) ** 0.5
        w = std * jax.random.normal(kw, (fout, fin), jnp.float32)
        b = 0.01 * jax.random.normal(kb, (fout,), jnp.float32)
        params["fc"].append((w, b))
    return params


def prepare_params(params):
    """One-time weight layout prep (per perf feedback: pre-transpose at init, not per forward).

    Conv: (Cout, Cin, 5, 5) -> (25*Cin, Cout) in (kh, kw, cin) im2col order.
    FC:   (out, in)         -> (in, out).
    """
    conv = [(jnp.transpose(w, (2, 3, 1, 0)).reshape(-1, w.shape[0]), b)
            for w, b in params["conv"]]
    fc = [(w.T, b) for w, b in params["fc"]]
    return {"conv": conv, "fc": fc}


def lenet_forward(params, x_nchw):
    x = jnp.transpose(x_nchw, (0, 2, 3, 1))                 # NCHW -> NHWC
    (w1, b1), (w2, b2), (w3, b3) = params["conv"]
    x = conv5x5_sigmoid(x, w1, b1)                          # (N, 28, 28, 6)
    x = avgpool2x2(x)                                       # (N, 14, 14, 6)
    x = conv5x5_sigmoid(x, w2, b2)                          # (N, 10, 10, 16)
    x = avgpool2x2(x)                                       # (N, 5, 5, 16)
    x = conv5x5_sigmoid(x, w3, b3)                          # (N, 1, 1, 120)
    # torch.flatten(x, 1) flattens NCHW -> restore (C, H, W) order before flatten.
    feats = jnp.transpose(x, (0, 3, 1, 2)).reshape(x.shape[0], -1)   # (N, 120)
    (fw1, fb1), (fw2, fb2) = params["fc"]
    h = matmul_bias_act(feats, fw1, fb1, sigmoid=True)      # Linear(120, 84) + Sigmoid
    out = matmul_bias_act(h, fw2, fb2, sigmoid=False)       # Linear(84, n_out), no activation
    return out


if __name__ == "__main__":
    key = jax.random.PRNGKey(0)
    pkey, xkey = jax.random.split(key)
    n_out = 10
    params = prepare_params(init_params(pkey, n_out))
    # Classic LeNet input: 32x32 single-channel -> conv/pool stack yields exactly 120 features.
    x = jax.random.normal(xkey, (2, 1, 32, 32), jnp.float32)
    out = jax.jit(lenet_forward)(params, x)
    out = jax.block_until_ready(out)
    assert out.shape == (2, n_out)
    assert bool(jnp.all(jnp.isfinite(out)))
    print("KERNEL_OK")
</pallas_src>

<mosaic_0001>
module attributes {stable_mosaic.version = 11 : i64} {
  func.func @_mm_bias_act_kernel(%arg0: memref<1568x25xf32, #tpu.memory_space<vmem>>, %arg1: memref<25x6xf32, #tpu.memory_space<vmem>>, %arg2: memref<1x6xf32, #tpu.memory_space<vmem>>, %arg3: memref<1568x6xf32, #tpu.memory_space<vmem>>) attributes {dimension_semantics = [], scalar_prefetch = 0 : i64, scratch_operands = 0 : i64, tpu.core_type = #tpu.core_type<tc>} {
    %c0 = arith.constant 0 : index
    %c0_0 = arith.constant 0 : index
    %0 = vector.load %arg0[%c0, %c0_0] : memref<1568x25xf32, #tpu.memory_space<vmem>>, vector<1568x25xf32>
    %c0_1 = arith.constant 0 : index
    %c0_2 = arith.constant 0 : index
    %1 = vector.load %arg1[%c0_1, %c0_2] : memref<25x6xf32, #tpu.memory_space<vmem>>, vector<25x6xf32>
    %cst = arith.constant dense<0.000000e+00> : vector<1568x6xf32>
    %2 = tpu.matmul %0, %1, %cst {dimension_numbers = #tpu.dot_dimension_numbers<[1], [0], [0], [1], [0, 0, 1, 1], [], []>} : vector<1568x25xf32>, vector<25x6xf32>, vector<1568x6xf32> -> vector<1568x6xf32>
    %c0_3 = arith.constant 0 : index
    %c0_4 = arith.constant 0 : index
    %3 = vector.load %arg2[%c0_3, %c0_4] : memref<1x6xf32, #tpu.memory_space<vmem>>, vector<1x6xf32>
    %4 = vector.broadcast %3 : vector<1x6xf32> to vector<1568x6xf32>
    %5 = arith.addf %2, %4 : vector<1568x6xf32>
    %cst_5 = arith.constant 0.000000e+00 : f32
    %6 = vector.broadcast %cst_5 : f32 to vector<1568x6xf32>
    %7 = arith.subf %6, %5 : vector<1568x6xf32>
    %8 = math.exp %7 : vector<1568x6xf32>
    %cst_6 = arith.constant 1.000000e+00 : f32
    %9 = vector.broadcast %cst_6 : f32 to vector<1568x6xf32>
    %10 = arith.addf %9, %8 : vector<1568x6xf32>
    %cst_7 = arith.constant 1.000000e+00 : f32
    %11 = vector.broadcast %cst_7 : f32 to vector<1568x6xf32>
    %12 = arith.divf %11, %10 : vector<1568x6xf32>
    %c0_8 = arith.constant 0 : index
    %c0_9 = arith.constant 0 : index
    %13 = vector.load %arg3[%c0_8, %c0_9] : memref<1568x6xf32, #tpu.memory_space<vmem>>, vector<1568x6xf32>
    tpu.vector_store %arg3[%c0_8, %c0_9], %12 {strides = array<i32>} : memref<1568x6xf32, #tpu.memory_space<vmem>>, vector<1568x6xf32>,
    return
  }
}

module attributes {stable_mosaic.version = 11 : i64} {
  func.func @_avgpool_kernel(%arg0: i32, %arg1: memref<2x2x14x2x6xf32, #tpu.memory_space<vmem>>, %arg2: memref<2x1x14x6xf32, #tpu.memory_space<vmem>>) attributes {dimension_semantics = [#tpu.dimension_semantics<parallel>], iteration_bounds = array<i64: 14>, scalar_prefetch = 0 : i64, scratch_operands = 0 : i64, tpu.core_type = #tpu.core_type<tc>, window_params = [{transform_indices = @transform_0, window_bounds = array<i64: 2, 2, 14, 2, 6>}, {transform_indices = @transform_1, window_bounds = array<i64: 2, 1, 14, 6>}]} {
    %c0 = arith.constant 0 : index
    %c0_0 = arith.constant 0 : index
    %c0_1 = arith.constant 0 : index
    %c0_2 = arith.constant 0 : index
    %c0_3 = arith.constant 0 : index
    %0 = vector.load %arg1[%c0, %c0_0, %c0_1, %c0_2, %c0_3] : memref<2x2x14x2x6xf32, #tpu.memory_space<vmem>>, vector<2x2x14x2x6xf32>
    %1 = vector.extract_strided_slice %0 {offsets = [0, 0, 0, 0, 0], sizes = [2, 1, 14, 1, 6], strides = [1, 1, 1, 1, 1]} : vector<2x2x14x2x6xf32> to vector<2x1x14x1x6xf32>
    %2 = vector.shape_cast %1 : vector<2x1x14x1x6xf32> to vector<2x14x6xf32>
    %3 = vector.extract_strided_slice %0 {offsets = [0, 0, 0, 1, 0], sizes = [2, 1, 14, 1, 6], strides = [1, 1, 1, 1, 1]} : vector<2x2x14x2x6xf32> to vector<2x1x14x1x6xf32>
    %4 = vector.shape_cast %3 : vector<2x1x14x1x6xf32> to vector<2x14x6xf32>
    %5 = arith.addf %2, %4 : vector<2x14x6xf32>
    %6 = vector.extract_strided_slice %0 {offsets = [0, 1, 0, 0, 0], sizes = [2, 1, 14, 1, 6], strides = [1, 1, 1, 1, 1]} : vector<2x2x14x2x6xf32> to vector<2x1x14x1x6xf32>
    %7 = vector.shape_cast %6 : vector<2x1x14x1x6xf32> to vector<2x14x6xf32>
    %8 = arith.addf %5, %7 : vector<2x14x6xf32>
    %9 = vector.extract_strided_slice %0 {offsets = [0, 1, 0, 1, 0], sizes = [2, 1, 14, 1, 6], strides = [1, 1, 1, 1, 1]} : vector<2x2x14x2x6xf32> to vector<2x1x14x1x6xf32>
    %10 = vector.shape_cast %9 : vector<2x1x14x1x6xf32> to vector<2x14x6xf32>
    %11 = arith.addf %8, %10 : vector<2x14x6xf32>
    %cst = arith.constant 2.500000e-01 : f32
    %12 = vector.broadcast %cst : f32 to vector<2x14x6xf32>
    %13 = arith.mulf %11, %12 : vector<2x14x6xf32>
    %c0_4 = arith.constant 0 : index
    %c0_5 = arith.constant 0 : index
    %c0_6 = arith.constant 0 : index
    %c0_7 = arith.constant 0 : index
    %14 = vector.load %arg2[%c0_4, %c0_5, %c0_6, %c0_7] : memref<2x1x14x6xf32, #tpu.memory_space<vmem>>, vector<2x1x14x6xf32>
    %15 = vector.shape_cast %14 : vector<2x1x14x6xf32> to vector<2x14x6xf32>
    %16 = vector.shape_cast %13 : vector<2x14x6xf32> to vector<2x1x14x6xf32>
    tpu.vector_store %arg2[%c0_4, %c0_5, %c0_6, %c0_7], %16 {strides = array<i32>} : memref<2x1x14x6xf32, #tpu.memory_space<vmem>>, vector<2x1x14x6xf32>,
    return
  }
  func.func @transform_0(%arg0: i32) -> (i32, i32, i32, i32, i32) {
    %c0_i32 = arith.constant 0 : i32
    %c0_i32_0 = arith.constant 0 : i32
    %c0_i32_1 = arith.constant 0 : i32
    %c0_i32_2 = arith.constant 0 : i32
    %c0_i32_3 = arith.constant 0 : i32
    return %c0_i32, %arg0, %c0_i32_0, %c0_i32_1, %c0_i32_2 : i32, i32, i32, i32, i32
  }
  func.func @transform_1(%arg0: i32) -> (i32, i32, i32, i32) {
    %c0_i32 = arith.constant 0 : i32
    %c0_i32_0 = arith.constant 0 : i32
    %c0_i32_1 = arith.constant 0 : i32
    %c0_i32_2 = arith.constant 0 : i32
    return %c0_i32, %arg0, %c0_i32_0, %c0_i32_1 : i32, i32, i32, i32
  }
}

module attributes {stable_mosaic.version = 11 : i64} {
  func.func @_mm_bias_act_kernel(%arg0: memref<200x150xf32, #tpu.memory_space<vmem>>, %arg1: memref<150x16xf32, #tpu.memory_space<vmem>>, %arg2: memref<1x16xf32, #tpu.memory_space<vmem>>, %arg3: memref<200x16xf32, #tpu.memory_space<vmem>>) attributes {dimension_semantics = [], scalar_prefetch = 0 : i64, scratch_operands = 0 : i64, tpu.core_type = #tpu.core_type<tc>} {
    %c0 = arith.constant 0 : index
    %c0_0 = arith.constant 0 : index
    %0 = vector.load %arg0[%c0, %c0_0] : memref<200x150xf32, #tpu.memory_space<vmem>>, vector<200x150xf32>
    %c0_1 = arith.constant 0 : index
    %c0_2 = arith.constant 0 : index
    %1 = vector.load %arg1[%c0_1, %c0_2] : memref<150x16xf32, #tpu.memory_space<vmem>>, vector<150x16xf32>
    %cst = arith.constant dense<0.000000e+00> : vector<200x16xf32>
    %2 = tpu.matmul %0, %1, %cst {dimension_numbers = #tpu.dot_dimension_numbers<[1], [0], [0], [1], [0, 0, 1, 1], [], []>} : vector<200x150xf32>, vector<150x16xf32>, vector<200x16xf32> -> vector<200x16xf32>
    %c0_3 = arith.constant 0 : index
    %c0_4 = arith.constant 0 : index
    %3 = vector.load %arg2[%c0_3, %c0_4] : memref<1x16xf32, #tpu.memory_space<vmem>>, vector<1x16xf32>
    %4 = vector.broadcast %3 : vector<1x16xf32> to vector<200x16xf32>
    %5 = arith.addf %2, %4 : vector<200x16xf32>
    %cst_5 = arith.constant 0.000000e+00 : f32
    %6 = vector.broadcast %cst_5 : f32 to vector<200x16xf32>
    %7 = arith.subf %6, %5 : vector<200x16xf32>
    %8 = math.exp %7 : vector<200x16xf32>
    %cst_6 = arith.constant 1.000000e+00 : f32
    %9 = vector.broadcast %cst_6 : f32 to vector<200x16xf32>
    %10 = arith.addf %9, %8 : vector<200x16xf32>
    %cst_7 = arith.constant 1.000000e+00 : f32
    %11 = vector.broadcast %cst_7 : f32 to vector<200x16xf32>
    %12 = arith.divf %11, %10 : vector<200x16xf32>
    %c0_8 = arith.constant 0 : index
    %c0_9 = arith.constant 0 : index
    %13 = vector.load %arg3[%c0_8, %c0_9] : memref<200x16xf32, #tpu.memory_space<vmem>>, vector<200x16xf32>
    tpu.vector_store %arg3[%c0_8, %c0_9], %12 {strides = array<i32>} : memref<200x16xf32, #tpu.memory_space<vmem>>, vector<200x16xf32>,
    return
  }
}

module attributes {stable_mosaic.version = 11 : i64} {
  func.func @_avgpool_kernel(%arg0: i32, %arg1: memref<2x2x5x2x16xf32, #tpu.memory_space<vmem>>, %arg2: memref<2x1x5x16xf32, #tpu.memory_space<vmem>>) attributes {dimension_semantics = [#tpu.dimension_semantics<parallel>], iteration_bounds = array<i64: 5>, scalar_prefetch = 0 : i64, scratch_operands = 0 : i64, tpu.core_type = #tpu.core_type<tc>, window_params = [{transform_indices = @transform_0, window_bounds = array<i64: 2, 2, 5, 2, 16>}, {transform_indices = @transform_1, window_bounds = array<i64: 2, 1, 5, 16>}]} {
    %c0 = arith.constant 0 : index
    %c0_0 = arith.constant 0 : index
    %c0_1 = arith.constant 0 : index
    %c0_2 = arith.constant 0 : index
    %c0_3 = arith.constant 0 : index
    %0 = vector.load %arg1[%c0, %c0_0, %c0_1, %c0_2, %c0_3] : memref<2x2x5x2x16xf32, #tpu.memory_space<vmem>>, vector<2x2x5x2x16xf32>
    %1 = vector.extract_strided_slice %0 {offsets = [0, 0, 0, 0, 0], sizes = [2, 1, 5, 1, 16], strides = [1, 1, 1, 1, 1]} : vector<2x2x5x2x16xf32> to vector<2x1x5x1x16xf32>
    %2 = vector.shape_cast %1 : vector<2x1x5x1x16xf32> to vector<2x5x16xf32>
    %3 = vector.extract_strided_slice %0 {offsets = [0, 0, 0, 1, 0], sizes = [2, 1, 5, 1, 16], strides = [1, 1, 1, 1, 1]} : vector<2x2x5x2x16xf32> to vector<2x1x5x1x16xf32>
    %4 = vector.shape_cast %3 : vector<2x1x5x1x16xf32> to vector<2x5x16xf32>
    %5 = arith.addf %2, %4 : vector<2x5x16xf32>
    %6 = vector.extract_strided_slice %0 {offsets = [0, 1, 0, 0, 0], sizes = [2, 1, 5, 1, 16], strides = [1, 1, 1, 1, 1]} : vector<2x2x5x2x16xf32> to vector<2x1x5x1x16xf32>
    %7 = vector.shape_cast %6 : vector<2x1x5x1x16xf32> to vector<2x5x16xf32>
    %8 = arith.addf %5, %7 : vector<2x5x16xf32>
    %9 = vector.extract_strided_slice %0 {offsets = [0, 1, 0, 1, 0], sizes = [2, 1, 5, 1, 16], strides = [1, 1, 1, 1, 1]} : vector<2x2x5x2x16xf32> to vector<2x1x5x1x16xf32>
    %10 = vector.shape_cast %9 : vector<2x1x5x1x16xf32> to vector<2x5x16xf32>
    %11 = arith.addf %8, %10 : vector<2x5x16xf32>
    %cst = arith.constant 2.500000e-01 : f32
    %12 = vector.broadcast %cst : f32 to vector<2x5x16xf32>
    %13 = arith.mulf %11, %12 : vector<2x5x16xf32>
    %c0_4 = arith.constant 0 : index
    %c0_5 = arith.constant 0 : index
    %c0_6 = arith.constant 0 : index
    %c0_7 = arith.constant 0 : index
    %14 = vector.load %arg2[%c0_4, %c0_5, %c0_6, %c0_7] : memref<2x1x5x16xf32, #tpu.memory_space<vmem>>, vector<2x1x5x16xf32>
    %15 = vector.shape_cast %14 : vector<2x1x5x16xf32> to vector<2x5x16xf32>
    %16 = vector.shape_cast %13 : vector<2x5x16xf32> to vector<2x1x5x16xf32>
    tpu.vector_store %arg2[%c0_4, %c0_5, %c0_6, %c0_7], %16 {strides = array<i32>} : memref<2x1x5x16xf32, #tpu.memory_space<vmem>>, vector<2x1x5x16xf32>,
    return
  }
  func.func @transform_0(%arg0: i32) -> (i32, i32, i32, i32, i32) {
    %c0_i32 = arith.constant 0 : i32
    %c0_i32_0 = arith.constant 0 : i32
    %c0_i32_1 = arith.constant 0 : i32
    %c0_i32_2 = arith.constant 0 : i32
    %c0_i32_3 = arith.constant 0 : i32
    return %c0_i32, %arg0, %c0_i32_0, %c0_i32_1, %c0_i32_2 : i32, i32, i32, i32, i32
  }
  func.func @transform_1(%arg0: i32) -> (i32, i32, i32, i32) {
    %c0_i32 = arith.constant 0 : i32
    %c0_i32_0 = arith.constant 0 : i32
    %c0_i32_1 = arith.constant 0 : i32
    %c0_i32_2 = arith.constant 0 : i32
    return %c0_i32, %arg0, %c0_i32_0, %c0_i32_1 : i32, i32, i32, i32
  }
}

module attributes {stable_mosaic.version = 11 : i64} {
  func.func @_mm_bias_act_kernel(%arg0: memref<2x400xf32, #tpu.memory_space<vmem>>, %arg1: memref<400x120xf32, #tpu.memory_space<vmem>>, %arg2: memref<1x120xf32, #tpu.memory_space<vmem>>, %arg3: memref<2x120xf32, #tpu.memory_space<vmem>>) attributes {dimension_semantics = [], scalar_prefetch = 0 : i64, scratch_operands = 0 : i64, tpu.core_type = #tpu.core_type<tc>} {
    %c0 = arith.constant 0 : index
    %c0_0 = arith.constant 0 : index
    %0 = vector.load %arg0[%c0, %c0_0] : memref<2x400xf32, #tpu.memory_space<vmem>>, vector<2x400xf32>
    %c0_1 = arith.constant 0 : index
    %c0_2 = arith.constant 0 : index
    %1 = vector.load %arg1[%c0_1, %c0_2] : memref<400x120xf32, #tpu.memory_space<vmem>>, vector<400x120xf32>
    %cst = arith.constant dense<0.000000e+00> : vector<2x120xf32>
    %2 = tpu.matmul %0, %1, %cst {dimension_numbers = #tpu.dot_dimension_numbers<[1], [0], [0], [1], [0, 0, 1, 1], [], []>} : vector<2x400xf32>, vector<400x120xf32>, vector<2x120xf32> -> vector<2x120xf32>
    %c0_3 = arith.constant 0 : index
    %c0_4 = arith.constant 0 : index
    %3 = vector.load %arg2[%c0_3, %c0_4] : memref<1x120xf32, #tpu.memory_space<vmem>>, vector<1x120xf32>
    %4 = vector.broadcast %3 : vector<1x120xf32> to vector<2x120xf32>
    %5 = arith.addf %2, %4 : vector<2x120xf32>
    %cst_5 = arith.constant 0.000000e+00 : f32
    %6 = vector.broadcast %cst_5 : f32 to vector<2x120xf32>
    %7 = arith.subf %6, %5 : vector<2x120xf32>
    %8 = math.exp %7 : vector<2x120xf32>
    %cst_6 = arith.constant 1.000000e+00 : f32
    %9 = vector.broadcast %cst_6 : f32 to vector<2x120xf32>
    %10 = arith.addf %9, %8 : vector<2x120xf32>
    %cst_7 = arith.constant 1.000000e+00 : f32
    %11 = vector.broadcast %cst_7 : f32 to vector<2x120xf32>
    %12 = arith.divf %11, %10 : vector<2x120xf32>
    %c0_8 = arith.constant 0 : index
    %c0_9 = arith.constant 0 : index
    %13 = vector.load %arg3[%c0_8, %c0_9] : memref<2x120xf32, #tpu.memory_space<vmem>>, vector<2x120xf32>
    tpu.vector_store %arg3[%c0_8, %c0_9], %12 {strides = array<i32>} : memref<2x120xf32, #tpu.memory_space<vmem>>, vector<2x120xf32>,
    return
  }
}

module attributes {stable_mosaic.version = 11 : i64} {
  func.func @_mm_bias_act_kernel(%arg0: memref<2x120xf32, #tpu.memory_space<vmem>>, %arg1: memref<120x84xf32, #tpu.memory_space<vmem>>, %arg2: memref<1x84xf32, #tpu.memory_space<vmem>>, %arg3: memref<2x84xf32, #tpu.memory_space<vmem>>) attributes {dimension_semantics = [], scalar_prefetch = 0 : i64, scratch_operands = 0 : i64, tpu.core_type = #tpu.core_type<tc>} {
    %c0 = arith.constant 0 : index
    %c0_0 = arith.constant 0 : index
    %0 = vector.load %arg0[%c0, %c0_0] : memref<2x120xf32, #tpu.memory_space<vmem>>, vector<2x120xf32>
    %c0_1 = arith.constant 0 : index
    %c0_2 = arith.constant 0 : index
    %1 = vector.load %arg1[%c0_1, %c0_2] : memref<120x84xf32, #tpu.memory_space<vmem>>, vector<120x84xf32>
    %cst = arith.constant dense<0.000000e+00> : vector<2x84xf32>
    %2 = tpu.matmul %0, %1, %cst {dimension_numbers = #tpu.dot_dimension_numbers<[1], [0], [0], [1], [0, 0, 1, 1], [], []>} : vector<2x120xf32>, vector<120x84xf32>, vector<2x84xf32> -> vector<2x84xf32>
    %c0_3 = arith.constant 0 : index
    %c0_4 = arith.constant 0 : index
    %3 = vector.load %arg2[%c0_3, %c0_4] : memref<1x84xf32, #tpu.memory_space<vmem>>, vector<1x84xf32>
    %4 = vector.broadcast %3 : vector<1x84xf32> to vector<2x84xf32>
    %5 = arith.addf %2, %4 : vector<2x84xf32>
    %cst_5 = arith.constant 0.000000e+00 : f32
    %6 = vector.broadcast %cst_5 : f32 to vector<2x84xf32>
    %7 = arith.subf %6, %5 : vector<2x84xf32>
    %8 = math.exp %7 : vector<2x84xf32>
    %cst_6 = arith.constant 1.000000e+00 : f32
    %9 = vector.broadcast %cst_6 : f32 to vector<2x84xf32>
    %10 = arith.addf %9, %8 : vector<2x84xf32>
    %cst_7 = arith.constant 1.000000e+00 : f32
    %11 = vector.broadcast %cst_7 : f32 to vector<2x84xf32>
    %12 = arith.divf %11, %10 : vector<2x84xf32>
    %c0_8 = arith.constant 0 : index
    %c0_9 = arith.constant 0 : index
    %13 = vector.load %arg3[%c0_8, %c0_9] : memref<2x84xf32, #tpu.memory_space<vmem>>, vector<2x84xf32>
    tpu.vector_store %arg3[%c0_8, %c0_9], %12 {strides = array<i32>} : memref<2x84xf32, #tpu.memory_space<vmem>>, vector<2x84xf32>,
    return
  }
}

module attributes {stable_mosaic.version = 11 : i64} {
  func.func @_mm_bias_act_kernel(%arg0: memref<2x84xf32, #tpu.memory_space<vmem>>, %arg1: memref<84x10xf32, #tpu.memory_space<vmem>>, %arg2: memref<1x10xf32, #tpu.memory_space<vmem>>, %arg3: memref<2x10xf32, #tpu.memory_space<vmem>>) attributes {dimension_semantics = [], scalar_prefetch = 0 : i64, scratch_operands = 0 : i64, tpu.core_type = #tpu.core_type<tc>} {
    %c0 = arith.constant 0 : index
    %c0_0 = arith.constant 0 : index
    %0 = vector.load %arg0[%c0, %c0_0] : memref<2x84xf32, #tpu.memory_space<vmem>>, vector<2x84xf32>
    %c0_1 = arith.constant 0 : index
    %c0_2 = arith.constant 0 : index
    %1 = vector.load %arg1[%c0_1, %c0_2] : memref<84x10xf32, #tpu.memory_space<vmem>>, vector<84x10xf32>
    %cst = arith.constant dense<0.000000e+00> : vector<2x10xf32>
    %2 = tpu.matmul %0, %1, %cst {dimension_numbers = #tpu.dot_dimension_numbers<[1], [0], [0], [1], [0, 0, 1, 1], [], []>} : vector<2x84xf32>, vector<84x10xf32>, vector<2x10xf32> -> vector<2x10xf32>
    %c0_3 = arith.constant 0 : index
    %c0_4 = arith.constant 0 : index
    %3 = vector.load %arg2[%c0_3, %c0_4] : memref<1x10xf32, #tpu.memory_space<vmem>>, vector<1x10xf32>
    %4 = vector.broadcast %3 : vector<1x10xf32> to vector<2x10xf32>
    %5 = arith.addf %2, %4 : vector<2x10xf32>
    %c0_5 = arith.constant 0 : index
    %c0_6 = arith.constant 0 : index
    %6 = vector.load %arg3[%c0_5, %c0_6] : memref<2x10xf32, #tpu.memory_space<vmem>>, vector<2x10xf32>
    tpu.vector_store %arg3[%c0_5, %c0_6], %5 {strides = array<i32>} : memref<2x10xf32, #tpu.memory_space<vmem>>, vector<2x10xf32>,
    return
  }
}

</mosaic_0001>

<llo_original>
// kernel: lenet_forward.8
$region0: #{lenet_forward.8}
  #allocation0 [shape = 'u32[]', space=smem, size = 0x4, offset = 0x4, fixed_abs, tag = 'smem constant byte address 0x4 - core index']
  #allocation1 [shape = 'u32[144,128]{1,0:T(1,128)}', space=vmem, size = 0x12000, scoped, tag = 'internal scratch']
  %s0 = inlined_call_operand.vmem [shape: f32[2,28,14,2,6], index: 0, kind: input, shape index: {}]
  %s1 = inlined_call_operand.vmem [shape: f32[2,14,14,6], index: 1, kind: output, shape index: {}]
  %s2 = sld [smem:[#allocation0]]
  $region112: #{lenet_forward.8} parent=0
    _
  %s4 = ssub.s32 1, %s2
  %s5 = scalar_select 0, %s4, %s2
  $region1: #{lenet_forward.8} parent=0
    #allocation2 [shape = 'u8[114688]{0}', space=vmem, size = 0x1c000, scoped, tag = 'input window, operand 0']
    #allocation3 [shape = 'u8[32768]{0}', space=vmem, size = 0x8000, scoped, tag = 'output window, operand 0']
    loop: start=0, step=1, limit=16
    $region2: #{lenet_forward.8} parent=1 // loop_pre_header
      _
    $region3: #{lenet_forward.8} parent=1 // loop_header
      %s7 = sphi 0, %s11
      %p8 = scmp.ge.s32.totalorder %s7, 16
      %s17 = sphi 0, %s19
      %s20 = sphi 0, %s17
      %s21 = sphi 0, %s20
      %s37 = sphi 0, %s21
      %s43 = sphi 0, %s45
      %s46 = sphi 0, %s43
      %s47 = sphi 0, %s46
      %s63 = sphi 0, %s47
    $region4: #{lenet_forward.8} parent=1 // loop_header_branch
      %10 = sbr.rel (%p8) target = $region8
    $region5: #{lenet_forward.8} parent=1 // loop_body
      %s12 = ssub.s32 %s7, 1
      %s13 = ssub.s32 %s7, 2
      %s14 = sadd.s32 %s7, 1
      %s15 = ssub.s32 %s7, %s14
      %p16 = scmp.eq.s32.totalorder %s15, 0
      %s18 = sadd.s32 %s17, 1
      %s19 = scalar_select %p16, %s17, %s18
      %p22 = pneg %p16
      %p23 = scmp.eq.s32.totalorder %s7, 13
      %p24 = por %p22, %p23
      %p25 = scmp.ne.s32.totalorder %s17, %s20
      %p26 = scmp.eq.s32.totalorder %s7, 0
      %p27 = por %p25, %p26
      %p28 = scmp.ne.s32.totalorder %s17, %s20
      %p29 = scmp.eq.s32.totalorder %s12, 13
      %p30 = por %p28, %p29
      %p31 = scmp.ne.s32.totalorder %s20, %s21
      %p32 = scmp.eq.s32.totalorder %s12, 0
      %p33 = por %p31, %p32
      %p34 = scmp.ne.s32.totalorder %s20, %s21
      %p35 = scmp.eq.s32.totalorder %s13, 13
      %p36 = por %p34, %p35
      %p38 = scmp.ne.s32.totalorder %s21, %s37
      %p39 = scmp.eq.s32.totalorder %s13, 0
      %p40 = por %p38, %p39
      %s41 = ssub.s32 %s7, %s14
      %p42 = scmp.eq.s32.totalorder %s41, 0
      %s44 = sadd.s32 %s43, 1
      %s45 = scalar_select %p42, %s43, %s44
      %p48 = pneg %p42
      %p49 = scmp.eq.s32.totalorder %s7, 13
      %p50 = por %p48, %p49
      %p51 = scmp.ne.s32.totalorder %s43, %s46
      %p52 = scmp.eq.s32.totalorder %s7, 0
      %p53 = por %p51, %p52
      %p54 = scmp.ne.s32.totalorder %s43, %s46
      %p55 = scmp.eq.s32.totalorder %s12, 13
      %p56 = por %p54, %p55
      %p57 = scmp.ne.s32.totalorder %s46, %s47
      %p58 = scmp.eq.s32.totalorder %s12, 0
      %p59 = por %p57, %p58
      %p60 = scmp.ne.s32.totalorder %s46, %s47
      %p61 = scmp.eq.s32.totalorder %s13, 13
      %p62 = por %p60, %p61
      %p64 = scmp.ne.s32.totalorder %s47, %s63
      %p65 = scmp.eq.s32.totalorder %s13, 0
      %p66 = por %p64, %p65
      %p67 = scmp.le.s32.totalorder 1, %s7
      %p68 = scmp.lt.s32.totalorder %s7, 15
      %p69 = pnand %p67, %p68
      %p70 = pneg %p69
      // Predicated region
      $region9: #{lenet_forward.8} parent=5 // pred_check
        _
      $region10: #{lenet_forward.8} parent=5 // pred_check_branch
        %72 = sbr.rel (%p69) target = $region12
      $region11: #{lenet_forward.8} parent=5 // pred_region
        %s73 = ssub.s32 %s7, 1
      $region12: #{lenet_forward.8} parent=5 // pred_fallthru
        _
      %p74 = scmp.lt.s32.totalorder %s7, 14
      // Predicated region
      $region13: #{lenet_forward.8} parent=5 // pred_check
        %p75 = pneg %p74
      $region14: #{lenet_forward.8} parent=5 // pred_check_branch
        %77 = sbr.rel (%p75) target = $region16
      $region15: #{lenet_forward.8} parent=5 // pred_region
        // Predicated region
        $region17: #{lenet_forward.8} parent=15 // pred_check
          %p78 = pneg %p27
        $region18: #{lenet_forward.8} parent=15 // pred_check_branch
          %80 = sbr.rel (%p78) target = $region20
        $region19: #{lenet_forward.8} parent=15 // pred_region
          %s81 = sand.u32 %s17, 1
          %s82 = sand.u32 %s17, 1
          %s83 = smul.addr %s82, 112
          %s84 = scalar_lea.vmem [#allocation2], %s83
          %s85 = smul.u32 2, %s7
          %s86 = smul.addr %s85, 14
          %s87 = smul.addr %s86, 2
          %s88 = scalar_lea.vmem %s0, %s87
          // Predicated region
          $region21: #{lenet_forward.8} parent=19 // pred_check
            _
          $region22: #{lenet_forward.8} parent=19 // pred_check_branch
            %90 = sbr.rel (0) target = $region24
          $region23: #{lenet_forward.8} parent=19 // pred_region
            // Predicated region
            $region25: #{lenet_forward.8} parent=23 // pred_check
              _
            $region26: #{lenet_forward.8} parent=23 // pred_check_branch
              %92 = sbr.rel target = $region28
            $region27: #{lenet_forward.8} parent=23 // pred_region
              // Predicated region
              $region40: #{lenet_forward.8} parent=27 // pred_check
                _
              $region41: #{lenet_forward.8} parent=27 // pred_check_branch
                %217 = sbr.rel (0) target = $region43
              $region42: #{lenet_forward.8} parent=27 // pred_region
                loop: start=0, step=1, limit=1
                $region44: #{lenet_forward.8} parent=42 // loop_pre_header
                  _
                $region45: #{lenet_forward.8} parent=42 // loop_header
                  %s219 = sphi 0, %s223
                  %p220 = scmp.ge.s32.totalorder %s219, 1
                  %s224 = sphi %s88, %s88
                  %s225 = sphi %s84, %s84
                $region46: #{lenet_forward.8} parent=42 // loop_header_branch
                  %222 = sbr.rel (%p220) target = $region50
                $region47: #{lenet_forward.8} parent=42 // loop_body
                  _
                $region48: #{lenet_forward.8} parent=42 // loop_footer
                  %s223 = sadd.s32 1, %s219
                $region49: #{lenet_forward.8} parent=42 // loop_footer_branch
                  %218 = sbr.rel target = $region45
                $region50: #{lenet_forward.8} parent=42 // loop_exit
                  _
                loop: start=0, step=1, limit=1
                $region51: #{lenet_forward.8} parent=42 // loop_pre_header
                  _
                $region52: #{lenet_forward.8} parent=42 // loop_header
                  %s228 = sphi 0, %s232
                  %p229 = scmp.ge.s32.totalorder %s228, 1
                  %s233 = sphi %s88, %s88
                  %s234 = sphi %s84, %s84
                $region53: #{lenet_forward.8} parent=42 // loop_header_branch
                  %231 = sbr.rel (%p229) target = $region57
                $region54: #{lenet_forward.8} parent=42 // loop_body
                  %v235 = vld [vmem:[%s233] sm:$0x3]
                  %236 = vst [vmem:[%s234] sm:$0x3] %v235
                  %v237 = vld [vmem:[%s233 + $0x2] sm:$0x3]
                  %238 = vst [vmem:[%s234 + $0x2] sm:$0x3] %v237
                  %v239 = vld [vmem:[%s233 + $0x4] sm:$0x3]
                  %240 = vst [vmem:[%s234 + $0x4] sm:$0x3] %v239
                  %v241 = vld [vmem:[%s233 + $0x6] sm:$0x3]
                  %242 = vst [vmem:[%s234 + $0x6] sm:$0x3] %v241
                  %v243 = vld [vmem:[%s233 + $0x8] sm:$0x3]
                  %244 = vst [vmem:[%s234 + $0x8] sm:$0x3] %v243
                  %v245 = vld [vmem:[%s233 + $0xa] sm:$0x3]
                  %246 = vst [vmem:[%s234 + $0xa] sm:$0x3] %v245
                  %v247 = vld [vmem:[%s233 + $0xc] sm:$0x3]
                  %248 = vst [vmem:[%s234 + $0xc] sm:$0x3] %v247
                  %v249 = vld [vmem:[%s233 + $0xe] sm:$0x3]
                  %250 = vst [vmem:[%s234 + $0xe] sm:$0x3] %v249
                  %v251 = vld [vmem:[%s233 + $0x10] sm:$0x3]
                  %252 = vst [vmem:[%s234 + $0x10] sm:$0x3] %v251
                  %v253 = vld [vmem:[%s233 + $0x12] sm:$0x3]
                  %254 = vst [vmem:[%s234 + $0x12] sm:$0x3] %v253
                  %v255 = vld [vmem:[%s233 + $0x14] sm:$0x3]
                  %256 = vst [vmem:[%s234 + $0x14] sm:$0x3] %v255
                  %v257 = vld [vmem:[%s233 + $0x16] sm:$0x3]
                  %258 = vst [vmem:[%s234 + $0x16] sm:$0x3] %v257
                  %v259 = vld [vmem:[%s233 + $0x18] sm:$0x3]
                  %260 = vst [vmem:[%s234 + $0x18] sm:$0x3] %v259
                  %v261 = vld [vmem:[%s233 + $0x1a] sm:$0x3]
                  %262 = vst [vmem:[%s234 + $0x1a] sm:$0x3] %v261
                  %v263 = vld [vmem:[%s233 + $0x1c] sm:$0x3]
                  %264 = vst [vmem:[%s234 + $0x1c] sm:$0x3] %v263
                  %v265 = vld [vmem:[%s233 + $0x1e] sm:$0x3]
                  %266 = vst [vmem:[%s234 + $0x1e] sm:$0x3] %v265
                  %v267 = vld [vmem:[%s233 + $0x20] sm:$0x3]
                  %268 = vst [vmem:[%s234 + $0x20] sm:$0x3] %v267
                  %v269 = vld [vmem:[%s233 + $0x22] sm:$0x3]
                  %270 = vst [vmem:[%s234 + $0x22] sm:$0x3] %v269
                  %v271 = vld [vmem:[%s233 + $0x24] sm:$0x3]
                  %272 = vst [vmem:[%s234 + $0x24] sm:$0x3] %v271
                  %v273 = vld [vmem:[%s233 + $0x26] sm:$0x3]
                  %274 = vst [vmem:[%s234 + $0x26] sm:$0x3] %v273
                  %v275 = vld [vmem:[%s233 + $0x28] sm:$0x3]
                  %276 = vst [vmem:[%s234 + $0x28] sm:$0x3] %v275
                  %v277 = vld [vmem:[%s233 + $0x2a] sm:$0x3]
                  %278 = vst [vmem:[%s234 + $0x2a] sm:$0x3] %v277
                  %v279 = vld [vmem:[%s233 + $0x2c] sm:$0x3]
                  %280 = vst [vmem:[%s234 + $0x2c] sm:$0x3] %v279
                  %v281 = vld [vmem:[%s233 + $0x2e] sm:$0x3]
                  %282 = vst [vmem:[%s234 + $0x2e] sm:$0x3] %v281
                  %v283 = vld [vmem:[%s233 + $0x30] sm:$0x3]
                  %284 = vst [vmem:[%s234 + $0x30] sm:$0x3] %v283
                  %v285 = vld [vmem:[%s233 + $0x32] sm:$0x3]
                  %286 = vst [vmem:[%s234 + $0x32] sm:$0x3] %v285
                  %v287 = vld [vmem:[%s233 + $0x34] sm:$0x3]
                  %288 = vst [vmem:[%s234 + $0x34] sm:$0x3] %v287
                  %v289 = vld [vmem:[%s233 + $0x36] sm:$0x3]
                  %290 = vst [vmem:[%s234 + $0x36] sm:$0x3] %v289
                  %v291 = vld [vmem:[%s233 + $0x310] sm:$0x3]
                  %292 = vst [vmem:[%s234 + $0x38] sm:$0x3] %v291
                  %v293 = vld [vmem:[%s233 + $0x312] sm:$0x3]
                  %294 = vst [vmem:[%s234 + $0x3a] sm:$0x3] %v293
                  %v295 = vld [vmem:[%s233 + $0x314] sm:$0x3]
                  %296 = vst [vmem:[%s234 + $0x3c] sm:$0x3] %v295
                  %v297 = vld [vmem:[%s233 + $0x316] sm:$0x3]
                  %298 = vst [vmem:[%s234 + $0x3e] sm:$0x3] %v297
                  %v299 = vld [vmem:[%s233 + $0x318] sm:$0x3]
                  %300 = vst [vmem:[%s234 + $0x40] sm:$0x3] %v299
                  %v301 = vld [vmem:[%s233 + $0x31a] sm:$0x3]
                  %302 = vst [vmem:[%s234 + $0x42] sm:$0x3] %v301
                  %v303 = vld [vmem:[%s233 + $0x31c] sm:$0x3]
                  %304 = vst [vmem:[%s234 + $0x44] sm:$0x3] %v303
                  %v305 = vld [vmem:[%s233 + $0x31e] sm:$0x3]
                  %306 = vst [vmem:[%s234 + $0x46] sm:$0x3] %v305
                  %v307 = vld [vmem:[%s233 + $0x320] sm:$0x3]
                  %308 = vst [vmem:[%s234 + $0x48] sm:$0x3] %v307
                  %v309 = vld [vmem:[%s233 + $0x322] sm:$0x3]
                  %310 = vst [vmem:[%s234 + $0x4a] sm:$0x3] %v309
                  %v311 = vld [vmem:[%s233 + $0x324] sm:$0x3]
                  %312 = vst [vmem:[%s234 + $0x4c] sm:$0x3] %v311
                  %v313 = vld [vmem:[%s233 + $0x326] sm:$0x3]
                  %314 = vst [vmem:[%s234 + $0x4e] sm:$0x3] %v313
                  %v315 = vld [vmem:[%s233 + $0x328] sm:$0x3]
                  %316 = vst [vmem:[%s234 + $0x50] sm:$0x3] %v315
                  %v317 = vld [vmem:[%s233 + $0x32a] sm:$0x3]
                  %318 = vst [vmem:[%s234 + $0x52] sm:$0x3] %v317
                  %v319 = vld [vmem:[%s233 + $0x32c] sm:$0x3]
                  %320 = vst [vmem:[%s234 + $0x54] sm:$0x3] %v319
                  %v321 = vld [vmem:[%s233 + $0x32e] sm:$0x3]
                  %322 = vst [vmem:[%s234 + $0x56] sm:$0x3] %v321
                  %v323 = vld [vmem:[%s233 + $0x330] sm:$0x3]
                  %324 = vst [vmem:[%s234 + $0x58] sm:$0x3] %v323
                  %v325 = vld [vmem:[%s233 + $0x332] sm:$0x3]
                  %326 = vst [vmem:[%s234 + $0x5a] sm:$0x3] %v325
                  %v327 = vld [vmem:[%s233 + $0x334] sm:$0x3]
                  %328 = vst [vmem:[%s234 + $0x5c] sm:$0x3] %v327
                  %v329 = vld [vmem:[%s233 + $0x336] sm:$0x3]
                  %330 = vst [vmem:[%s234 + $0x5e] sm:$0x3] %v329
                  %v331 = vld [vmem:[%s233 + $0x338] sm:$0x3]
                  %332 = vst [vmem:[%s234 + $0x60] sm:$0x3] %v331
                  %v333 = vld [vmem:[%s233 + $0x33a] sm:$0x3]
                  %334 = vst [vmem:[%s234 + $0x62] sm:$0x3] %v333
                  %v335 = vld [vmem:[%s233 + $0x33c] sm:$0x3]
                  %336 = vst [vmem:[%s234 + $0x64] sm:$0x3] %v335
                  %v337 = vld [vmem:[%s233 + $0x33e] sm:$0x3]
                  %338 = vst [vmem:[%s234 + $0x66] sm:$0x3] %v337
                  %v339 = vld [vmem:[%s233 + $0x340] sm:$0x3]
                  %340 = vst [vmem:[%s234 + $0x68] sm:$0x3] %v339
                  %v341 = vld [vmem:[%s233 + $0x342] sm:$0x3]
                  %342 = vst [vmem:[%s234 + $0x6a] sm:$0x3] %v341
                  %v343 = vld [vmem:[%s233 + $0x344] sm:$0x3]
                  %344 = vst [vmem:[%s234 + $0x6c] sm:$0x3] %v343
                  %v345 = vld [vmem:[%s233 + $0x346] sm:$0x3]
                  %346 = vst [vmem:[%s234 + $0x6e] sm:$0x3] %v345
                $region55: #{lenet_forward.8} parent=42 // loop_footer
                  %s232 = sadd.s32 1, %s228
                $region56: #{lenet_forward.8} parent=42 // loop_footer_branch
                  %227 = sbr.rel target = $region52
                $region57: #{lenet_forward.8} parent=42 // loop_exit
                  _
              $region43: #{lenet_forward.8} parent=27 // pred_fallthru
                _
            $region28: #{lenet_forward.8} parent=23 // pred_fallthru
              _
            // Predicated region
            $region29: #{lenet_forward.8} parent=23 // pred_check
              _
            $region30: #{lenet_forward.8} parent=23 // pred_check_branch
              %94 = sbr.rel (0) target = $region32
            $region31: #{lenet_forward.8} parent=23 // pred_region
              loop: start=0, step=1, limit=1
              $region33: #{lenet_forward.8} parent=31 // loop_pre_header
                _
              $region34: #{lenet_forward.8} parent=31 // loop_header
                %s97 = sphi 0, %s101
                %p98 = scmp.ge.s32.totalorder %s97, 1
                %s102 = sphi %s88, %s88
                %s103 = sphi %s84, %s84
              $region35: #{lenet_forward.8} parent=31 // loop_header_branch
                %100 = sbr.rel (%p98) target = $region39
              $region36: #{lenet_forward.8} parent=31 // loop_body
                %v104 = vld [vmem:[%s102] sm:$0x3]
                %105 = vst [vmem:[%s103] sm:$0x3] %v104
                %v106 = vld [vmem:[%s102 + $0x2] sm:$0x3]
                %107 = vst [vmem:[%s103 + $0x2] sm:$0x3] %v106
                %v108 = vld [vmem:[%s102 + $0x4] sm:$0x3]
                %109 = vst [vmem:[%s103 + $0x4] sm:$0x3] %v108
                %v110 = vld [vmem:[%s102 + $0x6] sm:$0x3]
                %111 = vst [vmem:[%s103 + $0x6] sm:$0x3] %v110
                %v112 = vld [vmem:[%s102 + $0x8] sm:$0x3]
                %113 = vst [vmem:[%s103 + $0x8] sm:$0x3] %v112
                %v114 = vld [vmem:[%s102 + $0xa] sm:$0x3]
                %115 = vst [vmem:[%s103 + $0xa] sm:$0x3] %v114
                %v116 = vld [vmem:[%s102 + $0xc] sm:$0x3]
                %117 = vst [vmem:[%s103 + $0xc] sm:$0x3] %v116
                %v118 = vld [vmem:[%s102 + $0xe] sm:$0x3]
                %119 = vst [vmem:[%s103 + $0xe] sm:$0x3] %v118
                %v120 = vld [vmem:[%s102 + $0x10] sm:$0x3]
                %121 = vst [vmem:[%s103 + $0x10] sm:$0x3] %v120
                %v122 = vld [vmem:[%s102 + $0x12] sm:$0x3]
                %123 = vst [vmem:[%s103 + $0x12] sm:$0x3] %v122
                %v124 = vld [vmem:[%s102 + $0x14] sm:$0x3]
                %125 = vst [vmem:[%s103 + $0x14] sm:$0x3] %v124
                %v126 = vld [vmem:[%s102 + $0x16] sm:$0x3]
                %127 = vst [vmem:[%s103 + $0x16] sm:$0x3] %v126
                %v128 = vld [vmem:[%s102 + $0x18] sm:$0x3]
                %129 = vst [vmem:[%s103 + $0x18] sm:$0x3] %v128
                %v130 = vld [vmem:[%s102 + $0x1a] sm:$0x3]
                %131 = vst [vmem:[%s103 + $0x1a] sm:$0x3] %v130
                %v132 = vld [vmem:[%s102 + $0x1c] sm:$0x3]
                %133 = vst [vmem:[%s103 + $0x1c] sm:$0x3] %v132
                %v134 = vld [vmem:[%s102 + $0x1e] sm:$0x3]
                %135 = vst [vmem:[%s103 + $0x1e] sm:$0x3] %v134
                %v136 = vld [vmem:[%s102 + $0x20] sm:$0x3]
                %137 = vst [vmem:[%s103 + $0x20] sm:$0x3] %v136
                %v138 = vld [vmem:[%s102 + $0x22] sm:$0x3]
                %139 = vst [vmem:[%s103 + $0x22] sm:$0x3] %v138
                %v140 = vld [vmem:[%s102 + $0x24] sm:$0x3]
                %141 = vst [vmem:[%s103 + $0x24] sm:$0x3] %v140
                %v142 = vld [vmem:[%s102 + $0x26] sm:$0x3]
                %143 = vst [vmem:[%s103 + $0x26] sm:$0x3] %v142
                %v144 = vld [vmem:[%s102 + $0x28] sm:$0x3]
                %145 = vst [vmem:[%s103 + $0x28] sm:$0x3] %v144
                %v146 = vld [vmem:[%s102 + $0x2a] sm:$0x3]
                %147 = vst [vmem:[%s103 + $0x2a] sm:$0x3] %v146
                %v148 = vld [vmem:[%s102 + $0x2c] sm:$0x3]
                %149 = vst [vmem:[%s103 + $0x2c] sm:$0x3] %v148
                %v150 = vld [vmem:[%s102 + $0x2e] sm:$0x3]
                %151 = vst [vmem:[%s103 + $0x2e] sm:$0x3] %v150
                %v152 = vld [vmem:[%s102 + $0x30] sm:$0x3]
                %153 = vst [vmem:[%s103 + $0x30] sm:$0x3] %v152
                %v154 = vld [vmem:[%s102 + $0x32] sm:$0x3]
                %155 = vst [vmem:[%s103 + $0x32] sm:$0x3] %v154
                %v156 = vld [vmem:[%s102 + $0x34] sm:$0x3]
                %157 = vst [vmem:[%s103 + $0x34] sm:$0x3] %v156
                %v158 = vld [vmem:[%s102 + $0x36] sm:$0x3]
                %159 = vst [vmem:[%s103 + $0x36] sm:$0x3] %v158
                %v160 = vld [vmem:[%s102 + $0x310] sm:$0x3]
                %161 = vst [vmem:[%s103 + $0x38] sm:$0x3] %v160
                %v162 = vld [vmem:[%s102 + $0x312] sm:$0x3]
                %163 = vst [vmem:[%s103 + $0x3a] sm:$0x3] %v162
                %v164 = vld [vmem:[%s102 + $0x314] sm:$0x3]
                %165 = vst [vmem:[%s103 + $0x3c] sm:$0x3] %v164
                %v166 = vld [vmem:[%s102 + $0x316] sm:$0x3]
                %167 = vst [vmem:[%s103 + $0x3e] sm:$0x3] %v166
                %v168 = vld [vmem:[%s102 + $0x318] sm:$0x3]
                %169 = vst [vmem:[%s103 + $0x40] sm:$0x3] %v168
                %v170 = vld [vmem:[%s102 + $0x31a] sm:$0x3]
                %171 = vst [vmem:[%s103 + $0x42] sm:$0x3] %v170
                %v172 = vld [vmem:[%s102 + $0x31c] sm:$0x3]
                %173 = vst [vmem:[%s103 + $0x44] sm:$0x3] %v172
                %v174 = vld [vmem:[%s102 + $0x31e] sm:$0x3]
                %175 = vst [vmem:[%s103 + $0x46] sm:$0x3] %v174
                %v176 = vld [vmem:[%s102 + $0x320] sm:$0x3]
                %177 = vst [vmem:[%s103 + $0x48] sm:$0x3] %v176
                %v178 = vld [vmem:[%s102 + $0x322] sm:$0x3]
                %179 = vst [vmem:[%s103 + $0x4a] sm:$0x3] %v178
                %v180 = vld [vmem:[%s102 + $0x324] sm:$0x3]
                %181 = vst [vmem:[%s103 + $0x4c] sm:$0x3] %v180
                %v182 = vld [vmem:[%s102 + $0x326] sm:$0x3]
                %183 = vst [vmem:[%s103 + $0x4e] sm:$0x3] %v182
                %v184 = vld [vmem:[%s102 + $0x328] sm:$0x3]
                %185 = vst [vmem:[%s103 + $0x50] sm:$0x3] %v184
                %v186 = vld [vmem:[%s102 + $0x32a] sm:$0x3]
                %187 = vst [vmem:[%s103 + $0x52] sm:$0x3] %v186
                %v188 = vld [vmem:[%s102 + $0x32c] sm:$0x3]
                %189 = vst [vmem:[%s103 + $0x54] sm:$0x3] %v188
                %v190 = vld [vmem:[%s102 + $0x32e] sm:$0x3]
                %191 = vst [vmem:[%s103 + $0x56] sm:$0x3] %v190
                %v192 = vld [vmem:[%s102 + $0x330] sm:$0x3]
                %193 = vst [vmem:[%s103 + $0x58] sm:$0x3] %v192
                %v194 = vld [vmem:[%s102 + $0x332] sm:$0x3]
                %195 = vst [vmem:[%s103 + $0x5a] sm:$0x3] %v194
                %v196 = vld [vmem:[%s102 + $0x334] sm:$0x3]
                %197 = vst [vmem:[%s103 + $0x5c] sm:$0x3] %v196
                %v198 = vld [vmem:[%s102 + $0x336] sm:$0x3]
                %199 = vst [vmem:[%s103 + $0x5e] sm:$0x3] %v198
                %v200 = vld [vmem:[%s102 + $0x338] sm:$0x3]
                %201 = vst [vmem:[%s103 + $0x60] sm:$0x3] %v200
                %v202 = vld [vmem:[%s102 + $0x33a] sm:$0x3]
                %203 = vst [vmem:[%s103 + $0x62] sm:$0x3] %v202
                %v204 = vld [vmem:[%s102 + $0x33c] sm:$0x3]
                %205 = vst [vmem:[%s103 + $0x64] sm:$0x3] %v204
                %v206 = vld [vmem:[%s102 + $0x33e] sm:$0x3]
                %207 = vst [vmem:[%s103 + $0x66] sm:$0x3] %v206
                %v208 = vld [vmem:[%s102 + $0x340] sm:$0x3]
                %209 = vst [vmem:[%s103 + $0x68] sm:$0x3] %v208
                %v210 = vld [vmem:[%s102 + $0x342] sm:$0x3]
                %211 = vst [vmem:[%s103 + $0x6a] sm:$0x3] %v210
                %v212 = vld [vmem:[%s102 + $0x344] sm:$0x3]
                %213 = vst [vmem:[%s103 + $0x6c] sm:$0x3] %v212
                %v214 = vld [vmem:[%s102 + $0x346] sm:$0x3]
                %215 = vst [vmem:[%s103 + $0x6e] sm:$0x3] %v214
              $region37: #{lenet_forward.8} parent=31 // loop_footer
                %s101 = sadd.s32 1, %s97
              $region38: #{lenet_forward.8} parent=31 // loop_footer_branch
                %96 = sbr.rel target = $region34
              $region39: #{lenet_forward.8} parent=31 // loop_exit
                _
            $region32: #{lenet_forward.8} parent=23 // pred_fallthru
              _
          $region24: #{lenet_forward.8} parent=19 // pred_fallthru
            _
          %347 = vnop
        $region20: #{lenet_forward.8} parent=15 // pred_fallthru
          _
      $region16: #{lenet_forward.8} parent=5 // pred_fallthru
        _
      %p348 = scmp.le.s32.totalorder 1, %s7
      %p349 = scmp.lt.s32.totalorder %s7, 15
      %p350 = pnand %p348, %p349
      %p351 = pneg %p350
      // Predicated region
      $region58: #{lenet_forward.8} parent=5 // pred_check
        _
      $region59: #{lenet_forward.8} parent=5 // pred_check_branch
        %353 = sbr.rel (%p350) target = $region61
      $region60: #{lenet_forward.8} parent=5 // pred_region
        %s354 = ssub.s32 %s7, 1
        %s355 = sand.u32 %s20, 1
        %s356 = sand.u32 %s20, 1
        %s357 = smul.addr %s356, 112
        %s358 = scalar_lea.vmem [#allocation2], %s357
        // Predicated region
        $region62: #{lenet_forward.8} parent=60 // pred_check
          %p359 = pneg %p33
        $region63: #{lenet_forward.8} parent=60 // pred_check_branch
          %361 = sbr.rel (%p359) target = $region65
        $region64: #{lenet_forward.8} parent=60 // pred_region
          _
        $region65: #{lenet_forward.8} parent=60 // pred_fallthru
          _
        %s362 = sand.u32 %s20, 1
        %s363 = sand.u32 %s20, 1
        %s364 = smul.addr %s363, 112
        %s365 = scalar_lea.vmem [#allocation2], %s364
        %p366 = pneg %p33
        %p367 = pneg %p30
        %p368 = pneg %p59
        %p369 = pneg %p56
        %s370 = sand.u32 %s46, 1
        %s371 = sand.u32 %s46, 1
        %s372 = smul.addr %s371, 32
        %s373 = scalar_lea.vmem [#allocation3], %s372
        %s374 = smul.u32 2, %s12
        %v375 = vld [vmem:[%s358] sm:$0x3]
        %v376 = vld [vmem:[%s358 + $0x2] sm:$0x3]
        %v377 = vld [vmem:[%s358 + $0x4] sm:$0x3]
        %v378 = vld [vmem:[%s358 + $0x6] sm:$0x3]
        %v379 = vld [vmem:[%s358 + $0x8] sm:$0x3]
        %v380 = vld [vmem:[%s358 + $0xa] sm:$0x3]
        %v381 = vld [vmem:[%s358 + $0xc] sm:$0x3]
        %v382 = vld [vmem:[%s358 + $0xe] sm:$0x3]
        %v383 = vld [vmem:[%s358 + $0x10] sm:$0x3]
        %v384 = vld [vmem:[%s358 + $0x12] sm:$0x3]
        %v385 = vld [vmem:[%s358 + $0x14] sm:$0x3]
        %v386 = vld [vmem:[%s358 + $0x16] sm:$0x3]
        %v387 = vld [vmem:[%s358 + $0x18] sm:$0x3]
        %v388 = vld [vmem:[%s358 + $0x1a] sm:$0x3]
        %v389 = vld [vmem:[%s358 + $0x1c] sm:$0x3]
        %v390 = vld [vmem:[%s358 + $0x1e] sm:$0x3]
        %v391 = vld [vmem:[%s358 + $0x20] sm:$0x3]
        %v392 = vld [vmem:[%s358 + $0x22] sm:$0x3]
        %v393 = vld [vmem:[%s358 + $0x24] sm:$0x3]
        %v394 = vld [vmem:[%s358 + $0x26] sm:$0x3]
        %v395 = vld [vmem:[%s358 + $0x28] sm:$0x3]
        %v396 = vld [vmem:[%s358 + $0x2a] sm:$0x3]
        %v397 = vld [vmem:[%s358 + $0x2c] sm:$0x3]
        %v398 = vld [vmem:[%s358 + $0x2e] sm:$0x3]
        %v399 = vld [vmem:[%s358 + $0x30] sm:$0x3]
        %v400 = vld [vmem:[%s358 + $0x32] sm:$0x3]
        %v401 = vld [vmem:[%s358 + $0x34] sm:$0x3]
        %v402 = vld [vmem:[%s358 + $0x36] sm:$0x3]
        %v403 = vld [vmem:[%s358 + $0x38] sm:$0x3]
        %v404 = vld [vmem:[%s358 + $0x3a] sm:$0x3]
        %v405 = vld [vmem:[%s358 + $0x3c] sm:$0x3]
        %v406 = vld [vmem:[%s358 + $0x3e] sm:$0x3]
        %v407 = vld [vmem:[%s358 + $0x40] sm:$0x3]
        %v408 = vld [vmem:[%s358 + $0x42] sm:$0x3]
        %v409 = vld [vmem:[%s358 + $0x44] sm:$0x3]
        %v410 = vld [vmem:[%s358 + $0x46] sm:$0x3]
        %v411 = vld [vmem:[%s358 + $0x48] sm:$0x3]
        %v412 = vld [vmem:[%s358 + $0x4a] sm:$0x3]
        %v413 = vld [vmem:[%s358 + $0x4c] sm:$0x3]
        %v414 = vld [vmem:[%s358 + $0x4e] sm:$0x3]
        %v415 = vld [vmem:[%s358 + $0x50] sm:$0x3]
        %v416 = vld [vmem:[%s358 + $0x52] sm:$0x3]
        %v417 = vld [vmem:[%s358 + $0x54] sm:$0x3]
        %v418 = vld [vmem:[%s358 + $0x56] sm:$0x3]
        %v419 = vld [vmem:[%s358 + $0x58] sm:$0x3]
        %v420 = vld [vmem:[%s358 + $0x5a] sm:$0x3]
        %v421 = vld [vmem:[%s358 + $0x5c] sm:$0x3]
        %v422 = vld [vmem:[%s358 + $0x5e] sm:$0x3]
        %v423 = vld [vmem:[%s358 + $0x60] sm:$0x3]
        %v424 = vld [vmem:[%s358 + $0x62] sm:$0x3]
        %v425 = vld [vmem:[%s358 + $0x64] sm:$0x3]
        %v426 = vld [vmem:[%s358 + $0x66] sm:$0x3]
        %v427 = vld [vmem:[%s358 + $0x68] sm:$0x3]
        %v428 = vld [vmem:[%s358 + $0x6a] sm:$0x3]
        %v429 = vld [vmem:[%s358 + $0x6c] sm:$0x3]
        %v430 = vld [vmem:[%s358 + $0x6e] sm:$0x3]
        %v459 = vrot.slane %v375, 1
        %v460 = vrot.slane %v376, 1
        %v461 = vrot.slane %v377, 1
        %v462 = vrot.slane %v378, 1
        %v463 = vrot.slane %v379, 1
        %v464 = vrot.slane %v380, 1
        %v465 = vrot.slane %v381, 1
        %v466 = vrot.slane %v382, 1
        %v467 = vrot.slane %v383, 1
        %v468 = vrot.slane %v384, 1
        %v469 = vrot.slane %v385, 1
        %v470 = vrot.slane %v386, 1
        %v471 = vrot.slane %v387, 1
        %v472 = vrot.slane %v388, 1
        %v473 = vrot.slane %v403, 1
        %v474 = vrot.slane %v404, 1
        %v475 = vrot.slane %v405, 1
        %v476 = vrot.slane %v406, 1
        %v477 = vrot.slane %v407, 1
        %v478 = vrot.slane %v408, 1
        %v479 = vrot.slane %v409, 1
        %v480 = vrot.slane %v410, 1
        %v481 = vrot.slane %v411, 1
        %v482 = vrot.slane %v412, 1
        %v483 = vrot.slane %v413, 1
        %v484 = vrot.slane %v414, 1
        %v485 = vrot.slane %v415, 1
        %v486 = vrot.slane %v416, 1
        %v515 = vadd.f32 %v375, %v459
        %v516 = vadd.f32 %v376, %v460
        %v517 = vadd.f32 %v377, %v461
        %v518 = vadd.f32 %v378, %v462
        %v519 = vadd.f32 %v379, %v463
        %v520 = vadd.f32 %v380, %v464
        %v521 = vadd.f32 %v381, %v465
        %v522 = vadd.f32 %v382, %v466
        %v523 = vadd.f32 %v383, %v467
        %v524 = vadd.f32 %v384, %v468
        %v525 = vadd.f32 %v385, %v469
        %v526 = vadd.f32 %v386, %v470
        %v527 = vadd.f32 %v387, %v471
        %v528 = vadd.f32 %v388, %v472
        %v529 = vadd.f32 %v403, %v473
        %v530 = vadd.f32 %v404, %v474
        %v531 = vadd.f32 %v405, %v475
        %v532 = vadd.f32 %v406, %v476
        %v533 = vadd.f32 %v407, %v477
        %v534 = vadd.f32 %v408, %v478
        %v535 = vadd.f32 %v409, %v479
        %v536 = vadd.f32 %v410, %v480
        %v537 = vadd.f32 %v411, %v481
        %v538 = vadd.f32 %v412, %v482
        %v539 = vadd.f32 %v413, %v483
        %v540 = vadd.f32 %v414, %v484
        %v541 = vadd.f32 %v415, %v485
        %v542 = vadd.f32 %v416, %v486
        %v543 = vadd.f32 %v515, %v389
        %v544 = vadd.f32 %v516, %v390
        %v545 = vadd.f32 %v517, %v391
        %v546 = vadd.f32 %v518, %v392
        %v547 = vadd.f32 %v519, %v393
        %v548 = vadd.f32 %v520, %v394
        %v549 = vadd.f32 %v521, %v395
        %v550 = vadd.f32 %v522, %v396
        %v551 = vadd.f32 %v523, %v397
        %v552 = vadd.f32 %v524, %v398
        %v553 = vadd.f32 %v525, %v399
        %v554 = vadd.f32 %v526, %v400
        %v555 = vadd.f32 %v527, %v401
        %v556 = vadd.f32 %v528, %v402
        %v557 = vadd.f32 %v529, %v417
        %v558 = vadd.f32 %v530, %v418
        %v559 = vadd.f32 %v531, %v419
        %v560 = vadd.f32 %v532, %v420
        %v561 = vadd.f32 %v533, %v421
        %v562 = vadd.f32 %v534, %v422
        %v563 = vadd.f32 %v535, %v423
        %v564 = vadd.f32 %v536, %v424
        %v565 = vadd.f32 %v537, %v425
        %v566 = vadd.f32 %v538, %v426
        %v567 = vadd.f32 %v539, %v427
        %v568 = vadd.f32 %v540, %v428
        %v569 = vadd.f32 %v541, %v429
        %v570 = vadd.f32 %v542, %v430
        %v599 = vrot.slane %v389, 1
        %v600 = vrot.slane %v390, 1
        %v601 = vrot.slane %v391, 1
        %v602 = vrot.slane %v392, 1
        %v603 = vrot.slane %v393, 1
        %v604 = vrot.slane %v394, 1
        %v605 = vrot.slane %v395, 1
        %v606 = vrot.slane %v396, 1
        %v607 = vrot.slane %v397, 1
        %v608 = vrot.slane %v398, 1
        %v609 = vrot.slane %v399, 1
        %v610 = vrot.slane %v400, 1
        %v611 = vrot.slane %v401, 1
        %v612 = vrot.slane %v402, 1
        %v613 = vrot.slane %v417, 1
        %v614 = vrot.slane %v418, 1
        %v615 = vrot.slane %v419, 1
        %v616 = vrot.slane %v420, 1
        %v617 = vrot.slane %v421, 1
        %v618 = vrot.slane %v422, 1
        %v619 = vrot.slane %v423, 1
        %v620 = vrot.slane %v424, 1
        %v621 = vrot.slane %v425, 1
        %v622 = vrot.slane %v426, 1
        %v623 = vrot.slane %v427, 1
        %v624 = vrot.slane %v428, 1
        %v625 = vrot.slane %v429, 1
        %v626 = vrot.slane %v430, 1
        %v655 = vadd.f32 %v543, %v599
        %v656 = vadd.f32 %v544, %v600
        %v657 = vadd.f32 %v545, %v601
        %v658 = vadd.f32 %v546, %v602
        %v659 = vadd.f32 %v547, %v603
        %v660 = vadd.f32 %v548, %v604
        %v661 = vadd.f32 %v549, %v605
        %v662 = vadd.f32 %v550, %v606
        %v663 = vadd.f32 %v551, %v607
        %v664 = vadd.f32 %v552, %v608
        %v665 = vadd.f32 %v553, %v609
        %v666 = vadd.f32 %v554, %v610
        %v667 = vadd.f32 %v555, %v611
        %v668 = vadd.f32 %v556, %v612
        %v669 = vadd.f32 %v557, %v613
        %v670 = vadd.f32 %v558, %v614
        %v671 = vadd.f32 %v559, %v615
        %v672 = vadd.f32 %v560, %v616
        %v673 = vadd.f32 %v561, %v617
        %v674 = vadd.f32 %v562, %v618
        %v675 = vadd.f32 %v563, %v619
        %v676 = vadd.f32 %v564, %v620
        %v677 = vadd.f32 %v565, %v621
        %v678 = vadd.f32 %v566, %v622
        %v679 = vadd.f32 %v567, %v623
        %v680 = vadd.f32 %v568, %v624
        %v681 = vadd.f32 %v569, %v625
        %v682 = vadd.f32 %v570, %v626
        %v683 = vmul.f32 %v655, 0.25
        %v684 = vmul.f32 %v656, 0.25
        %v685 = vmul.f32 %v657, 0.25
        %v686 = vmul.f32 %v658, 0.25
        %v687 = vmul.f32 %v659, 0.25
        %v688 = vmul.f32 %v660, 0.25
        %v689 = vmul.f32 %v661, 0.25
        %v690 = vmul.f32 %v662, 0.25
        %v691 = vmul.f32 %v663, 0.25
        %v692 = vmul.f32 %v664, 0.25
        %v693 = vmul.f32 %v665, 0.25
        %v694 = vmul.f32 %v666, 0.25
        %v695 = vmul.f32 %v667, 0.25
        %v696 = vmul.f32 %v668, 0.25
        %v697 = vmul.f32 %v669, 0.25
        %v698 = vmul.f32 %v670, 0.25
        %v699 = vmul.f32 %v671, 0.25
        %v700 = vmul.f32 %v672, 0.25
        %v701 = vmul.f32 %v673, 0.25
        %v702 = vmul.f32 %v674, 0.25
        %v703 = vmul.f32 %v675, 0.25
        %v704 = vmul.f32 %v676, 0.25
        %v705 = vmul.f32 %v677, 0.25
        %v706 = vmul.f32 %v678, 0.25
        %v707 = vmul.f32 %v679, 0.25
        %v708 = vmul.f32 %v680, 0.25
        %v709 = vmul.f32 %v681, 0.25
        %v710 = vmul.f32 %v682, 0.25
        %v739 = vrot.slane %v684, 7
        %vm740 = vcmask 1041409
        %v741 = vsel %vm740, %v739, %v683
        %v742 = vrot.slane %v685, 6
        %vm743 = vcmask 1042434
        %v744 = vsel %vm743, %v742, %v741
        %v745 = vrot.slane %v686, 5
        %vm746 = vcmask 1043459
        %v747 = vsel %vm746, %v745, %v744
        %v748 = vrot.slane %v687, 4
        %vm749 = vcmask 1044484
        %v750 = vsel %vm749, %v748, %v747
        %v751 = vrot.slane %v688, 3
        %vm752 = vcmask 1045509
        %v753 = vsel %vm752, %v751, %v750
        %v754 = vrot.slane %v689, 2
        %vm755 = vcmask 1046534
        %v756 = vsel %vm755, %v754, %v753
        %v757 = vrot.slane %v690, 1
        %vm758 = vcmask 1047559
        %v759 = vsel %vm758, %v757, %v756
        %v760 = vrot.slane %v692, 7
        %v761 = vsel %vm740, %v760, %v691
        %v762 = vrot.slane %v693, 6
        %v763 = vsel %vm743, %v762, %v761
        %v764 = vrot.slane %v694, 5
        %v765 = vsel %vm746, %v764, %v763
        %v766 = vrot.slane %v695, 4
        %v767 = vsel %vm749, %v766, %v765
        %v768 = vrot.slane %v696, 3
        %v769 = vsel %vm752, %v768, %v767
        %v770 = vrot.slane %v698, 7
        %v771 = vsel %vm740, %v770, %v697
        %v772 = vrot.slane %v699, 6
        %v773 = vsel %vm743, %v772, %v771
        %v774 = vrot.slane %v700, 5
        %v775 = vsel %vm746, %v774, %v773
        %v776 = vrot.slane %v701, 4
        %v777 = vsel %vm749, %v776, %v775
        %v778 = vrot.slane %v702, 3
        %v779 = vsel %vm752, %v778, %v777
        %v780 = vrot.slane %v703, 2
        %v781 = vsel %vm755, %v780, %v779
        %v782 = vrot.slane %v704, 1
        %v783 = vsel %vm758, %v782, %v781
        %v784 = vrot.slane %v706, 7
        %v785 = vsel %vm740, %v784, %v705
        %v786 = vrot.slane %v707, 6
        %v787 = vsel %vm743, %v786, %v785
        %v788 = vrot.slane %v708, 5
        %v789 = vsel %vm746, %v788, %v787
        %v790 = vrot.slane %v709, 4
        %v791 = vsel %vm749, %v790, %v789
        %v792 = vrot.slane %v710, 3
        %v793 = vsel %vm752, %v792, %v791
        %vm798 = vcmask 48128
        %799 = vst.msk [vmem:[%s373] sm:$0xff] %vm798, %v759
        %vm800 = vcmask 46080
        %801 = vst.msk [vmem:[%s373 + $0x8] sm:$0x3f] %vm800, %v769
        %802 = vst.msk [vmem:[%s373 + $0x10] sm:$0xff] %vm798, %v783
        %803 = vst.msk [vmem:[%s373 + $0x18] sm:$0x3f] %vm800, %v793
        %s804 = sand.u32 %s46, 1
        %s805 = sand.u32 %s46, 1
        %s806 = smul.addr %s805, 32
        %s807 = scalar_lea.vmem [#allocation3], %s806
        // Predicated region
        $region66: #{lenet_forward.8} parent=60 // pred_check
          %p808 = pneg %p56
        $region67: #{lenet_forward.8} parent=60 // pred_check_branch
          %810 = sbr.rel (%p808) target = $region69
        $region68: #{lenet_forward.8} parent=60 // pred_region
          %s811 = smul.addr %s12, 2
          %s812 = smul.addr %s811, 8
          %s813 = scalar_lea.vmem %s1, %s812
          // Predicated region
          $region70: #{lenet_forward.8} parent=68 // pred_check
            _
          $region71: #{lenet_forward.8} parent=68 // pred_check_branch
            %815 = sbr.rel (0) target = $region73
          $region72: #{lenet_forward.8} parent=68 // pred_region
            // Predicated region
            $region74: #{lenet_forward.8} parent=72 // pred_check
              _
            $region75: #{lenet_forward.8} parent=72 // pred_check_branch
              %817 = sbr.rel (0) target = $region77
            $region76: #{lenet_forward.8} parent=72 // pred_region
              // Predicated region
              $region89: #{lenet_forward.8} parent=76 // pred_check
                _
              $region90: #{lenet_forward.8} parent=76 // pred_check_branch
                %838 = sbr.rel (0) target = $region92
              $region91: #{lenet_forward.8} parent=76 // pred_region
                loop: start=0, step=1, limit=1
                $region93: #{lenet_forward.8} parent=91 // loop_pre_header
                  _
                $region94: #{lenet_forward.8} parent=91 // loop_header
                  %s840 = sphi 0, %s844
                  %p841 = scmp.ge.s32.totalorder %s840, 1
                  %s845 = sphi %s807, %s807
                  %s846 = sphi %s813, %s813
                $region95: #{lenet_forward.8} parent=91 // loop_header_branch
                  %843 = sbr.rel (%p841) target = $region99
                $region96: #{lenet_forward.8} parent=91 // loop_body
                  %v847 = vld [vmem:[%s845] sm:$0xff]
                  %848 = vst [vmem:[%s846] sm:$0xff] %v847
                  %v849 = vld [vmem:[%s845 + $0x8] sm:$0xff]
                  %850 = vst [vmem:[%s846 + $0x8] sm:$0xff] %v849
                  %v851 = vld [vmem:[%s845 + $0x10] sm:$0xff]
                  %852 = vst [vmem:[%s846 + $0xe0] sm:$0xff] %v851
                  %v853 = vld [vmem:[%s845 + $0x18] sm:$0xff]
                  %854 = vst [vmem:[%s846 + $0xe8] sm:$0xff] %v853
                $region97: #{lenet_forward.8} parent=91 // loop_footer
                  %s844 = sadd.s32 1, %s840
                $region98: #{lenet_forward.8} parent=91 // loop_footer_branch
                  %839 = sbr.rel target = $region94
                $region99: #{lenet_forward.8} parent=91 // loop_exit
                  _
              $region92: #{lenet_forward.8} parent=76 // pred_fallthru
                _
              // Predicated region
              $region100: #{lenet_forward.8} parent=76 // pred_check
                _
              $region101: #{lenet_forward.8} parent=76 // pred_check_branch
                %856 = sbr.rel target = $region103
              $region102: #{lenet_forward.8} parent=76 // pred_region
                _
              $region103: #{lenet_forward.8} parent=76 // pred_fallthru
                _
            $region77: #{lenet_forward.8} parent=72 // pred_fallthru
              _
            // Predicated region
            $region78: #{lenet_forward.8} parent=72 // pred_check
              _
            $region79: #{lenet_forward.8} parent=72 // pred_check_branch
              %819 = sbr.rel target = $region81
            $region80: #{lenet_forward.8} parent=72 // pred_region
              loop: start=0, step=1, limit=1
              $region82: #{lenet_forward.8} parent=80 // loop_pre_header
                _
              $region83: #{lenet_forward.8} parent=80 // loop_header
                %s822 = sphi 0, %s826
                %p823 = scmp.ge.s32.totalorder %s822, 1
                %s827 = sphi %s807, %s807
                %s828 = sphi %s813, %s813
              $region84: #{lenet_forward.8} parent=80 // loop_header_branch
                %825 = sbr.rel (%p823) target = $region88
              $region85: #{lenet_forward.8} parent=80 // loop_body
                %v829 = vld [vmem:[%s827] sm:$0xff]
                %830 = vst [vmem:[%s828] sm:$0xff] %v829
                %v831 = vld [vmem:[%s827 + $0x8] sm:$0xff]
                %832 = vst [vmem:[%s828 + $0x8] sm:$0xff] %v831
                %v833 = vld [vmem:[%s827 + $0x10] sm:$0xff]
                %834 = vst [vmem:[%s828 + $0xe0] sm:$0xff] %v833
                %v835 = vld [vmem:[%s827 + $0x18] sm:$0xff]
                %836 = vst [vmem:[%s828 + $0xe8] sm:$0xff] %v835
              $region86: #{lenet_forward.8} parent=80 // loop_footer
                %s826 = sadd.s32 1, %s822
              $region87: #{lenet_forward.8} parent=80 // loop_footer_branch
                %821 = sbr.rel target = $region83
              $region88: #{lenet_forward.8} parent=80 // loop_exit
                _
            $region81: #{lenet_forward.8} parent=72 // pred_fallthru
              _
          $region73: #{lenet_forward.8} parent=68 // pred_fallthru
            _
          %857 = vnop
        $region69: #{lenet_forward.8} parent=60 // pred_fallthru
          _
      $region61: #{lenet_forward.8} parent=5 // pred_fallthru
        _
      %p858 = scmp.le.s32.totalorder 2, %s7
      // Predicated region
      $region104: #{lenet_forward.8} parent=5 // pred_check
        %p859 = pneg %p858
      $region105: #{lenet_forward.8} parent=5 // pred_check_branch
        %861 = sbr.rel (%p859) target = $region107
      $region106: #{lenet_forward.8} parent=5 // pred_region
        %s862 = ssub.s32 %s7, 2
        // Predicated region
        $region108: #{lenet_forward.8} parent=106 // pred_check
          %p863 = pneg %p62
        $region109: #{lenet_forward.8} parent=106 // pred_check_branch
          %865 = sbr.rel (%p863) target = $region111
        $region110: #{lenet_forward.8} parent=106 // pred_region
          %s866 = sand.u32 %s47, 1
          %s867 = sand.u32 %s47, 1
          %s868 = smul.addr %s867, 32
          %s869 = scalar_lea.vmem [#allocation3], %s868
        $region111: #{lenet_forward.8} parent=106 // pred_fallthru
          _
      $region107: #{lenet_forward.8} parent=5 // pred_fallthru
        _
    $region6: #{lenet_forward.8} parent=1 // loop_footer
      %s11 = sadd.s32 1, %s7
    $region7: #{lenet_forward.8} parent=1 // loop_footer_branch
      %6 = sbr.rel target = $region3
    $region8: #{lenet_forward.8} parent=1 // loop_exit
      _

// kernel: lenet_forward.7
$region0: #{lenet_forward.7}
  #allocation0 [shape = 'u32[]', space=smem, size = 0x4, offset = 0x4, fixed_abs, tag = 'smem constant byte address 0x4 - core index']
  #allocation1 [shape = 'u32[144,128]{1,0:T(1,128)}', space=vmem, size = 0x12000, scoped, tag = 'internal scratch']
  %s0 = inlined_call_operand.vmem [shape: f32[1568,25], index: 0, kind: input, shape index: {}]
  %s1 = inlined_call_operand.vmem [shape: f32[25,6], index: 1, kind: input, shape index: {}]
  %s2 = inlined_call_operand.vmem [shape: f32[1,6], index: 2, kind: input, shape index: {}]
  %s3 = inlined_call_operand.vmem [shape: f32[1568,6], index: 3, kind: output, shape index: {}]
  %s4 = sld [smem:[#allocation0]]
  $region22: #{lenet_forward.7} parent=0
    _
  %s6 = ssub.s32 1, %s4
  %s7 = scalar_select 0, %s6, %s4
  // Predicated region
  $region2: #{lenet_forward.7} parent=0 // pred_check
    _
  $region3: #{lenet_forward.7} parent=0 // pred_check_branch
    %9 = sbr.rel (0) target = $region5
  $region4: #{lenet_forward.7} parent=0 // pred_region
    _
  $region5: #{lenet_forward.7} parent=0 // pred_fallthru
    _
  // Predicated region
  $region6: #{lenet_forward.7} parent=0 // pred_check
    _
  $region7: #{lenet_forward.7} parent=0 // pred_check_branch
    %11 = sbr.rel (0) target = $region9
  $region8: #{lenet_forward.7} parent=0 // pred_region
    _
  $region9: #{lenet_forward.7} parent=0 // pred_fallthru
    _
  // Predicated region
  $region10: #{lenet_forward.7} parent=0 // pred_check
    _
  $region11: #{lenet_forward.7} parent=0 // pred_check_branch
    %13 = sbr.rel (0) target = $region13
  $region12: #{lenet_forward.7} parent=0 // pred_region
    _
  $region13: #{lenet_forward.7} parent=0 // pred_fallthru
    _
  %v14 = vld [vmem:[%s0] sm:$0xff]
  %v15 = vld [vmem:[%s0 + $0x8] sm:$0xff]
  %v16 = vld [vmem:[%s0 + $0x10] sm:$0xff]
  %v17 = vld [vmem:[%s0 + $0x18] sm:$0xff]
  %v18 = vld [vmem:[%s0 + $0x20] sm:$0xff]
  %v19 = vld [vmem:[%s0 + $0x28] sm:$0xff]
  %v20 = vld [vmem:[%s0 + $0x30] sm:$0xff]
  %v21 = vld [vmem:[%s0 + $0x38] sm:$0xff]
  %v22 = vld [vmem:[%s0 + $0x40] sm:$0xff]
  %v23 = vld [vmem:[%s0 + $0x48] sm:$0xff]
  %v24 = vld [vmem:[%s0 + $0x50] sm:$0xff]
  %v25 = vld [vmem:[%s0 + $0x58] sm:$0xff]
  %v26 = vld [vmem:[%s0 + $0x60] sm:$0xff]
  %v27 = vld [vmem:[%s0 + $0x68] sm:$0xff]
  %v28 = vld [vmem:[%s0 + $0x70] sm:$0xff]
  %v29 = vld [vmem:[%s0 + $0x78] sm:$0xff]
  %v30 = vld [vmem:[%s0 + $0x80] sm:$0xff]
  %v31 = vld [vmem:[%s0 + $0x88] sm:$0xff]
  %v32 = vld [vmem:[%s0 + $0x90] sm:$0xff]
  %v33 = vld [vmem:[%s0 + $0x98] sm:$0xff]
  %v34 = vld [vmem:[%s0 + $0xa0] sm:$0xff]
  %v35 = vld [vmem:[%s0 + $0xa8] sm:$0xff]
  %v36 = vld [vmem:[%s0 + $0xb0] sm:$0xff]
  %v37 = vld [vmem:[%s0 + $0xb8] sm:$0xff]
  %v38 = vld [vmem:[%s0 + $0xc0] sm:$0xff]
  %v39 = vld [vmem:[%s0 + $0xc8] sm:$0xff]
  %v40 = vld [vmem:[%s0 + $0xd0] sm:$0xff]
  %v41 = vld [vmem:[%s0 + $0xd8] sm:$0xff]
  %v42 = vld [vmem:[%s0 + $0xe0] sm:$0xff]
  %v43 = vld [vmem:[%s0 + $0xe8] sm:$0xff]
  %v44 = vld [vmem:[%s0 + $0xf0] sm:$0xff]
  %v45 = vld [vmem:[%s0 + $0xf8] sm:$0xff]
  %v46 = vld [vmem:[%s0 + $0x100] sm:$0xff]
  %v47 = vld [vmem:[%s0 + $0x108] sm:$0xff]
  %v48 = vld [vmem:[%s0 + $0x110] sm:$0xff]
  %v49 = vld [vmem:[%s0 + $0x118] sm:$0xff]
  %v50 = vld [vmem:[%s0 + $0x120] sm:$0xff]
  %v51 = vld [vmem:[%s0 + $0x128] sm:$0xff]
  %v52 = vld [vmem:[%s0 + $0x130] sm:$0xff]
  %v53 = vld [vmem:[%s0 + $0x138] sm:$0xff]
  %v54 = vld [vmem:[%s0 + $0x140] sm:$0xff]
  %v55 = vld [vmem:[%s0 + $0x148] sm:$0xff]
  %v56 = vld [vmem:[%s0 + $0x150] sm:$0xff]
  %v57 = vld [vmem:[%s0 + $0x158] sm:$0xff]
  %v58 = vld [vmem:[%s0 + $0x160] sm:$0xff]
  %v59 = vld [vmem:[%s0 + $0x168] sm:$0xff]
  %v60 = vld [vmem:[%s0 + $0x170] sm:$0xff]
  %v61 = vld [vmem:[%s0 + $0x178] sm:$0xff]
  %v62 = vld [vmem:[%s0 + $0x180] sm:$0xff]
  %v63 = vld [vmem:[%s0 + $0x188] sm:$0xff]
  %v64 = vld [vmem:[%s0 + $0x190] sm:$0xff]
  %v65 = vld [vmem:[%s0 + $0x198] sm:$0xff]
  %v66 = vld [vmem:[%s0 + $0x1a0] sm:$0xff]
  %v67 = vld [vmem:[%s0 + $0x1a8] sm:$0xff]
  %v68 = vld [vmem:[%s0 + $0x1b0] sm:$0xff]
  %v69 = vld [vmem:[%s0 + $0x1b8] sm:$0xff]
  %v70 = vld [vmem:[%s0 + $0x1c0] sm:$0xff]
  %v71 = vld [vmem:[%s0 + $0x1c8] sm:$0xff]
  %v72 = vld [vmem:[%s0 + $0x1d0] sm:$0xff]
  %v73 = vld [vmem:[%s0 + $0x1d8] sm:$0xff]
  %v74 = vld [vmem:[%s0 + $0x1e0] sm:$0xff]
  %v75 = vld [vmem:[%s0 + $0x1e8] sm:$0xff]
  %v76 = vld [vmem:[%s0 + $0x1f0] sm:$0xff]
  %v77 = vld [vmem:[%s0 + $0x1f8] sm:$0xff]
  %v78 = vld [vmem:[%s0 + $0x200] sm:$0xff]
  %v79 = vld [vmem:[%s0 + $0x208] sm:$0xff]
  %v80 = vld [vmem:[%s0 + $0x210] sm:$0xff]
  %v81 = vld [vmem:[%s0 + $0x218] sm:$0xff]
  %v82 = vld [vmem:[%s0 + $0x220] sm:$0xff]
  %v83 = vld [vmem:[%s0 + $0x228] sm:$0xff]
  %v84 = vld [vmem:[%s0 + $0x230] sm:$0xff]
  %v85 = vld [vmem:[%s0 + $0x238] sm:$0xff]
  %v86 = vld [vmem:[%s0 + $0x240] sm:$0xff]
  %v87 = vld [vmem:[%s0 + $0x248] sm:$0xff]
  %v88 = vld [vmem:[%s0 + $0x250] sm:$0xff]
  %v89 = vld [vmem:[%s0 + $0x258] sm:$0xff]
  %v90 = vld [vmem:[%s0 + $0x260] sm:$0xff]
  %v91 = vld [vmem:[%s0 + $0x268] sm:$0xff]
  %v92 = vld [vmem:[%s0 + $0x270] sm:$0xff]
  %v93 = vld [vmem:[%s0 + $0x278] sm:$0xff]
  %v94 = vld [vmem:[%s0 + $0x280] sm:$0xff]
  %v95 = vld [vmem:[%s0 + $0x288] sm:$0xff]
  %v96 = vld [vmem:[%s0 + $0x290] sm:$0xff]
  %v97 = vld [vmem:[%s0 + $0x298] sm:$0xff]
  %v98 = vld [vmem:[%s0 + $0x2a0] sm:$0xff]
  %v99 = vld [vmem:[%s0 + $0x2a8] sm:$0xff]
  %v100 = vld [vmem:[%s0 + $0x2b0] sm:$0xff]
  %v101 = vld [vmem:[%s0 + $0x2b8] sm:$0xff]
  %v102 = vld [vmem:[%s0 + $0x2c0] sm:$0xff]
  %v103 = vld [vmem:[%s0 + $0x2c8] sm:$0xff]
  %v104 = vld [vmem:[%s0 + $0x2d0] sm:$0xff]
  %v105 = vld [vmem:[%s0 + $0x2d8] sm:$0xff]
  %v106 = vld [vmem:[%s0 + $0x2e0] sm:$0xff]
  %v107 = vld [vmem:[%s0 + $0x2e8] sm:$0xff]
  %v108 = vld [vmem:[%s0 + $0x2f0] sm:$0xff]
  %v109 = vld [vmem:[%s0 + $0x2f8] sm:$0xff]
  %v110 = vld [vmem:[%s0 + $0x300] sm:$0xff]
  %v111 = vld [vmem:[%s0 + $0x308] sm:$0xff]
  %v112 = vld [vmem:[%s0 + $0x310] sm:$0xff]
  %v113 = vld [vmem:[%s0 + $0x318] sm:$0xff]
  %v114 = vld [vmem:[%s0 + $0x320] sm:$0xff]
  %v115 = vld [vmem:[%s0 + $0x328] sm:$0xff]
  %v116 = vld [vmem:[%s0 + $0x330] sm:$0xff]
  %v117 = vld [vmem:[%s0 + $0x338] sm:$0xff]
  %v118 = vld [vmem:[%s0 + $0x340] sm:$0xff]
  %v119 = vld [vmem:[%s0 + $0x348] sm:$0xff]
  %v120 = vld [vmem:[%s0 + $0x350] sm:$0xff]
  %v121 = vld [vmem:[%s0 + $0x358] sm:$0xff]
  %v122 = vld [vmem:[%s0 + $0x360] sm:$0xff]
  %v123 = vld [vmem:[%s0 + $0x368] sm:$0xff]
  %v124 = vld [vmem:[%s0 + $0x370] sm:$0xff]
  %v125 = vld [vmem:[%s0 + $0x378] sm:$0xff]
  %v126 = vld [vmem:[%s0 + $0x380] sm:$0xff]
  %v127 = vld [vmem:[%s0 + $0x388] sm:$0xff]
  %v128 = vld [vmem:[%s0 + $0x390] sm:$0xff]
  %v129 = vld [vmem:[%s0 + $0x398] sm:$0xff]
  %v130 = vld [vmem:[%s0 + $0x3a0] sm:$0xff]
  %v131 = vld [vmem:[%s0 + $0x3a8] sm:$0xff]
  %v132 = vld [vmem:[%s0 + $0x3b0] sm:$0xff]
  %v133 = vld [vmem:[%s0 + $0x3b8] sm:$0xff]
  %v134 = vld [vmem:[%s0 + $0x3c0] sm:$0xff]
  %v135 = vld [vmem:[%s0 + $0x3c8] sm:$0xff]
  %v136 = vld [vmem:[%s0 + $0x3d0] sm:$0xff]
  %v137 = vld [vmem:[%s0 + $0x3d8] sm:$0xff]
  %v138 = vld [vmem:[%s0 + $0x3e0] sm:$0xff]
  %v139 = vld [vmem:[%s0 + $0x3e8] sm:$0xff]
  %v140 = vld [vmem:[%s0 + $0x3f0] sm:$0xff]
  %v141 = vld [vmem:[%s0 + $0x3f8] sm:$0xff]
  %v142 = vld [vmem:[%s0 + $0x400] sm:$0xff]
  %v143 = vld [vmem:[%s0 + $0x408] sm:$0xff]
  %v144 = vld [vmem:[%s0 + $0x410] sm:$0xff]
  %v145 = vld [vmem:[%s0 + $0x418] sm:$0xff]
  %v146 = vld [vmem:[%s0 + $0x420] sm:$0xff]
  %v147 = vld [vmem:[%s0 + $0x428] sm:$0xff]
  %v148 = vld [vmem:[%s0 + $0x430] sm:$0xff]
  %v149 = vld [vmem:[%s0 + $0x438] sm:$0xff]
  %v150 = vld [vmem:[%s0 + $0x440] sm:$0xff]
  %v151 = vld [vmem:[%s0 + $0x448] sm:$0xff]
  %v152 = vld [vmem:[%s0 + $0x450] sm:$0xff]
  %v153 = vld [vmem:[%s0 + $0x458] sm:$0xff]
  %v154 = vld [vmem:[%s0 + $0x460] sm:$0xff]
  %v155 = vld [vmem:[%s0 + $0x468] sm:$0xff]
  %v156 = vld [vmem:[%s0 + $0x470] sm:$0xff]
  %v157 = vld [vmem:[%s0 + $0x478] sm:$0xff]
  %v158 = vld [vmem:[%s0 + $0x480] sm:$0xff]
  %v159 = vld [vmem:[%s0 + $0x488] sm:$0xff]
  %v160 = vld [vmem:[%s0 + $0x490] sm:$0xff]
  %v161 = vld [vmem:[%s0 + $0x498] sm:$0xff]
  %v162 = vld [vmem:[%s0 + $0x4a0] sm:$0xff]
  %v163 = vld [vmem:[%s0 + $0x4a8] sm:$0xff]
  %v164 = vld [vmem:[%s0 + $0x4b0] sm:$0xff]
  %v165 = vld [vmem:[%s0 + $0x4b8] sm:$0xff]
  %v166 = vld [vmem:[%s0 + $0x4c0] sm:$0xff]
  %v167 = vld [vmem:[%s0 + $0x4c8] sm:$0xff]
  %v168 = vld [vmem:[%s0 + $0x4d0] sm:$0xff]
  %v169 = vld [vmem:[%s0 + $0x4d8] sm:$0xff]
  %v170 = vld [vmem:[%s0 + $0x4e0] sm:$0xff]
  %v171 = vld [vmem:[%s0 + $0x4e8] sm:$0xff]
  %v172 = vld [vmem:[%s0 + $0x4f0] sm:$0xff]
  %v173 = vld [vmem:[%s0 + $0x4f8] sm:$0xff]
  %v174 = vld [vmem:[%s0 + $0x500] sm:$0xff]
  %v175 = vld [vmem:[%s0 + $0x508] sm:$0xff]
  %v176 = vld [vmem:[%s0 + $0x510] sm:$0xff]
  %v177 = vld [vmem:[%s0 + $0x518] sm:$0xff]
  %v178 = vld [vmem:[%s0 + $0x520] sm:$0xff]
  %v179 = vld [vmem:[%s0 + $0x528] sm:$0xff]
  %v180 = vld [vmem:[%s0 + $0x530] sm:$0xff]
  %v181 = vld [vmem:[%s0 + $0x538] sm:$0xff]
  %v182 = vld [vmem:[%s0 + $0x540] sm:$0xff]
  %v183 = vld [vmem:[%s0 + $0x548] sm:$0xff]
  %v184 = vld [vmem:[%s0 + $0x550] sm:$0xff]
  %v185 = vld [vmem:[%s0 + $0x558] sm:$0xff]
  %v186 = vld [vmem:[%s0 + $0x560] sm:$0xff]
  %v187 = vld [vmem:[%s0 + $0x568] sm:$0xff]
  %v188 = vld [vmem:[%s0 + $0x570] sm:$0xff]
  %v189 = vld [vmem:[%s0 + $0x578] sm:$0xff]
  %v190 = vld [vmem:[%s0 + $0x580] sm:$0xff]
  %v191 = vld [vmem:[%s0 + $0x588] sm:$0xff]
  %v192 = vld [vmem:[%s0 + $0x590] sm:$0xff]
  %v193 = vld [vmem:[%s0 + $0x598] sm:$0xff]
  %v194 = vld [vmem:[%s0 + $0x5a0] sm:$0xff]
  %v195 = vld [vmem:[%s0 + $0x5a8] sm:$0xff]
  %v196 = vld [vmem:[%s0 + $0x5b0] sm:$0xff]
  %v197 = vld [vmem:[%s0 + $0x5b8] sm:$0xff]
  %v198 = vld [vmem:[%s0 + $0x5c0] sm:$0xff]
  %v199 = vld [vmem:[%s0 + $0x5c8] sm:$0xff]
  %v200 = vld [vmem:[%s0 + $0x5d0] sm:$0xff]
  %v201 = vld [vmem:[%s0 + $0x5d8] sm:$0xff]
  %v202 = vld [vmem:[%s0 + $0x5e0] sm:$0xff]
  %v203 = vld [vmem:[%s0 + $0x5e8] sm:$0xff]
  %v204 = vld [vmem:[%s0 + $0x5f0] sm:$0xff]
  %v205 = vld [vmem:[%s0 + $0x5f8] sm:$0xff]
  %v206 = vld [vmem:[%s0 + $0x600] sm:$0xff]
  %v207 = vld [vmem:[%s0 + $0x608] sm:$0xff]
  %v208 = vld [vmem:[%s0 + $0x610] sm:$0xff]
  %v209 = vld [vmem:[%s0 + $0x618] sm:$0xff]
  %v210 = vld [vmem:[%s1] sm:$0xff]
  %v211 = vld [vmem:[%s1 + $0x8] sm:$0xff]
  %v212 = vld [vmem:[%s1 + $0x10] sm:$0xff]
  %v213 = vld [vmem:[%s1 + $0x18] sm:$0x1]
  %v214 = vld [vmem:[%s2] sm:$0x1]
  %v216 = vlaneseq
  %v217 = vshrl.u32 %v216, 7
  %v218 = vsub.s32 0, %v217
  %v219 = vrot.slane %v214, %v218
  %vm221 = vcmask 203776
  %v223 = vsel %vm221, %v14, 0
  %v226 = vsel %vm221, %v15, 0
  %v229 = vsel %vm221, %v16, 0
  %v232 = vsel %vm221, %v17, 0
  %v235 = vsel %vm221, %v18, 0
  %v238 = vsel %vm221, %v19, 0
  %v241 = vsel %vm221, %v20, 0
  %v244 = vsel %vm221, %v21, 0
  %v247 = vsel %vm221, %v22, 0
  %v250 = vsel %vm221, %v23, 0
  %v253 = vsel %vm221, %v24, 0
  %v256 = vsel %vm221, %v25, 0
  %v259 = vsel %vm221, %v26, 0
  %v262 = vsel %vm221, %v27, 0
  %v265 = vsel %vm221, %v28, 0
  %v268 = vsel %vm221, %v29, 0
  %v271 = vsel %vm221, %v30, 0
  %v274 = vsel %vm221, %v31, 0
  %v277 = vsel %vm221, %v32, 0
  %v280 = vsel %vm221, %v33, 0
  %v283 = vsel %vm221, %v34, 0
  %v286 = vsel %vm221, %v35, 0
  %v289 = vsel %vm221, %v36, 0
  %v292 = vsel %vm221, %v37, 0
  %v295 = vsel %vm221, %v38, 0
  %v298 = vsel %vm221, %v39, 0
  %v301 = vsel %vm221, %v40, 0
  %v304 = vsel %vm221, %v41, 0
  %v307 = vsel %vm221, %v42, 0
  %v310 = vsel %vm221, %v43, 0
  %v313 = vsel %vm221, %v44, 0
  %v316 = vsel %vm221, %v45, 0
  %v319 = vsel %vm221, %v46, 0
  %v322 = vsel %vm221, %v47, 0
  %v325 = vsel %vm221, %v48, 0
  %v328 = vsel %vm221, %v49, 0
  %v331 = vsel %vm221, %v50, 0
  %v334 = vsel %vm221, %v51, 0
  %v337 = vsel %vm221, %v52, 0
  %v340 = vsel %vm221, %v53, 0
  %v343 = vsel %vm221, %v54, 0
  %v346 = vsel %vm221, %v55, 0
  %v349 = vsel %vm221, %v56, 0
  %v352 = vsel %vm221, %v57, 0
  %v355 = vsel %vm221, %v58, 0
  %v358 = vsel %vm221, %v59, 0
  %v361 = vsel %vm221, %v60, 0
  %v364 = vsel %vm221, %v61, 0
  %v367 = vsel %vm221, %v62, 0
  %v370 = vsel %vm221, %v63, 0
  %v373 = vsel %vm221, %v64, 0
  %v376 = vsel %vm221, %v65, 0
  %v379 = vsel %vm221, %v66, 0
  %v382 = vsel %vm221, %v67, 0
  %v385 = vsel %vm221, %v68, 0
  %v388 = vsel %vm221, %v69, 0
  %v391 = vsel %vm221, %v70, 0
  %v394 = vsel %vm221, %v71, 0
  %v397 = vsel %vm221, %v72, 0
  %v400 = vsel %vm221, %v73, 0
  %v403 = vsel %vm221, %v74, 0
  %v406 = vsel %vm221, %v75, 0
  %v409 = vsel %vm221, %v76, 0
  %v412 = vsel %vm221, %v77, 0
  %v415 = vsel %vm221, %v78, 0
  %v418 = vsel %vm221, %v79, 0
  %v421 = vsel %vm221, %v80, 0
  %v424 = vsel %vm221, %v81, 0
  %v427 = vsel %vm221, %v82, 0
  %v430 = vsel %vm221, %v83, 0
  %v433 = vsel %vm221, %v84, 0
  %v436 = vsel %vm221, %v85, 0
  %v439 = vsel %vm221, %v86, 0
  %v442 = vsel %vm221, %v87, 0
  %v445 = vsel %vm221, %v88, 0
  %v448 = vsel %vm221, %v89, 0
  %v451 = vsel %vm221, %v90, 0
  %v454 = vsel %vm221, %v91, 0
  %v457 = vsel %vm221, %v92, 0
  %v460 = vsel %vm221, %v93, 0
  %v463 = vsel %vm221, %v94, 0
  %v466 = vsel %vm221, %v95, 0
  %v469 = vsel %vm221, %v96, 0
  %v472 = vsel %vm221, %v97, 0
  %v475 = vsel %vm221, %v98, 0
  %v478 = vsel %vm221, %v99, 0
  %v481 = vsel %vm221, %v100, 0
  %v484 = vsel %vm221, %v101, 0
  %v487 = vsel %vm221, %v102, 0
  %v490 = vsel %vm221, %v103, 0
  %v493 = vsel %vm221, %v104, 0
  %v496 = vsel %vm221, %v105, 0
  %v499 = vsel %vm221, %v106, 0
  %v502 = vsel %vm221, %v107, 0
  %v505 = vsel %vm221, %v108, 0
  %v508 = vsel %vm221, %v109, 0
  %v511 = vsel %vm221, %v110, 0
  %v514 = vsel %vm221, %v111, 0
  %v517 = vsel %vm221, %v112, 0
  %v520 = vsel %vm221, %v113, 0
  %v523 = vsel %vm221, %v114, 0
  %v526 = vsel %vm221, %v115, 0
  %v529 = vsel %vm221, %v116, 0
  %v532 = vsel %vm221, %v117, 0
  %v535 = vsel %vm221, %v118, 0
  %v538 = vsel %vm221, %v119, 0
  %v541 = vsel %vm221, %v120, 0
  %v544 = vsel %vm221, %v121, 0
  %v547 = vsel %vm221, %v122, 0
  %v550 = vsel %vm221, %v123, 0
  %v553 = vsel %vm221, %v124, 0
  %v556 = vsel %vm221, %v125, 0
  %v559 = vsel %vm221, %v126, 0
  %v562 = vsel %vm221, %v127, 0
  %v565 = vsel %vm221, %v128, 0
  %v568 = vsel %vm221, %v129, 0
  %v571 = vsel %vm221, %v130, 0
  %v574 = vsel %vm221, %v131, 0
  %v577 = vsel %vm221, %v132, 0
  %v580 = vsel %vm221, %v133, 0
  %v583 = vsel %vm221, %v134, 0
  %v586 = vsel %vm221, %v135, 0
  %v589 = vsel %vm221, %v136, 0
  %v592 = vsel %vm221, %v137, 0
  %v595 = vsel %vm221, %v138, 0
  %v598 = vsel %vm221, %v139, 0
  %v601 = vsel %vm221, %v140, 0
  %v604 = vsel %vm221, %v141, 0
  %v607 = vsel %vm221, %v142, 0
  %v610 = vsel %vm221, %v143, 0
  %v613 = vsel %vm221, %v144, 0
  %v616 = vsel %vm221, %v145, 0
  %v619 = vsel %vm221, %v146, 0
  %v622 = vsel %vm221, %v147, 0
  %v625 = vsel %vm221, %v148, 0
  %v628 = vsel %vm221, %v149, 0
  %v631 = vsel %vm221, %v150, 0
  %v634 = vsel %vm221, %v151, 0
  %v637 = vsel %vm221, %v152, 0
  %v640 = vsel %vm221, %v153, 0
  %v643 = vsel %vm221, %v154, 0
  %v646 = vsel %vm221, %v155, 0
  %v649 = vsel %vm221, %v156, 0
  %v652 = vsel %vm221, %v157, 0
  %v655 = vsel %vm221, %v158, 0
  %v658 = vsel %vm221, %v159, 0
  %v661 = vsel %vm221, %v160, 0
  %v664 = vsel %vm221, %v161, 0
  %v667 = vsel %vm221, %v162, 0
  %v670 = vsel %vm221, %v163, 0
  %v673 = vsel %vm221, %v164, 0
  %v676 = vsel %vm221, %v165, 0
  %v679 = vsel %vm221, %v166, 0
  %v682 = vsel %vm221, %v167, 0
  %v685 = vsel %vm221, %v168, 0
  %v688 = vsel %vm221, %v169, 0
  %v691 = vsel %vm221, %v170, 0
  %v694 = vsel %vm221, %v171, 0
  %v697 = vsel %vm221, %v172, 0
  %v700 = vsel %vm221, %v173, 0
  %v703 = vsel %vm221, %v174, 0
  %v706 = vsel %vm221, %v175, 0
  %v709 = vsel %vm221, %v176, 0
  %v712 = vsel %vm221, %v177, 0
  %v715 = vsel %vm221, %v178, 0
  %v718 = vsel %vm221, %v179, 0
  %v721 = vsel %vm221, %v180, 0
  %v724 = vsel %vm221, %v181, 0
  %v727 = vsel %vm221, %v182, 0
  %v730 = vsel %vm221, %v183, 0
  %v733 = vsel %vm221, %v184, 0
  %v736 = vsel %vm221, %v185, 0
  %v739 = vsel %vm221, %v186, 0
  %v742 = vsel %vm221, %v187, 0
  %v745 = vsel %vm221, %v188, 0
  %v748 = vsel %vm221, %v189, 0
  %v751 = vsel %vm221, %v190, 0
  %v754 = vsel %vm221, %v191, 0
  %v757 = vsel %vm221, %v192, 0
  %v760 = vsel %vm221, %v193, 0
  %v763 = vsel %vm221, %v194, 0
  %v766 = vsel %vm221, %v195, 0
  %v769 = vsel %vm221, %v196, 0
  %v772 = vsel %vm221, %v197, 0
  %v775 = vsel %vm221, %v198, 0
  %v778 = vsel %vm221, %v199, 0
  %v781 = vsel %vm221, %v200, 0
  %v784 = vsel %vm221, %v201, 0
  %v787 = vsel %vm221, %v202, 0
  %v790 = vsel %vm221, %v203, 0
  %v793 = vsel %vm221, %v204, 0
  %v796 = vsel %vm221, %v205, 0
  %v799 = vsel %vm221, %v206, 0
  %v802 = vsel %vm221, %v207, 0
  %v805 = vsel %vm221, %v208, 0
  %v808 = vsel %vm221, %v209, 0
  %vm810 = vcmask 1040384
  %v812 = vsel %vm810, %v213, 0
  %814 = vmatprep.subr.mxu0 0.0
  %815 = vmatpush1.msra.mxu0 %v210
  %816 = vmatprep.subr.mxu0 0.0
  %817 = vmatpush1.msra.mxu0 %v211
  %818 = vmatprep.subr.mxu0 0.0
  %819 = vmatpush1.msra.mxu0 %v212
  %820 = vmatprep.subr.mxu0 0.0
  %821 = vmatpush1.msra.mxu0 %v812
  %822 = vmatprep.subr.mxu0 0.0
  %823 = vmatpush1.msra.mxu0 0.0
  %824 = vmatprep.subr.mxu0 0.0
  %825 = vmatpush1.msra.mxu0 0.0
  %826 = vmatprep.subr.mxu0 0.0
  %827 = vmatpush1.msra.mxu0 0.0
  %828 = vmatprep.subr.mxu0 0.0
  %829 = vmatpush1.msra.mxu0 0.0
  %830 = vmatprep.subr.mxu0 0.0
  %831 = vmatpush1.msra.mxu0 0.0
  %832 = vmatprep.subr.mxu0 0.0
  %833 = vmatpush1.msra.mxu0 0.0
  %834 = vmatprep.subr.mxu0 0.0
  %835 = vmatpush1.msra.mxu0 0.0
  %836 = vmatprep.subr.mxu0 0.0
  %837 = vmatpush1.msra.mxu0 0.0
  %838 = vmatprep.subr.mxu0 0.0
  %839 = vmatpush1.msra.mxu0 0.0
  %840 = vmatprep.subr.mxu0 0.0
  %841 = vmatpush1.msra.mxu0 0.0
  %842 = vmatprep.subr.mxu0 0.0
  %843 = vmatpush1.msra.mxu0 0.0
  %844 = vmatprep.subr.mxu0 0.0
  %845 = vmatpush1.msra.mxu0 0.0
  %846 = vmatprep.subr.mxu0 0.0
  %847 = vmatpush1.msra.mxu0 0.0
  %848 = vmatprep.subr.mxu0 0.0
  %849 = vmatpush1.msra.mxu0 0.0
  %850 = vmatprep.subr.mxu0 0.0
  %851 = vmatpush1.msra.mxu0 0.0
  %852 = vmatprep.subr.mxu0 0.0
  %853 = vmatpush1.msra.mxu0 0.0
  %854 = vmatprep.subr.mxu0 0.0
  %855 = vmatpush1.msra.mxu0 0.0
  %856 = vmatprep.subr.mxu0 0.0
  %857 = vmatpush1.msra.mxu0 0.0
  %858 = vmatprep.subr.mxu0 0.0
  %859 = vmatpush1.msra.mxu0 0.0
  %860 = vmatprep.subr.mxu0 0.0
  %861 = vmatpush1.msra.mxu0 0.0
  %862 = vmatprep.subr.mxu0 0.0
  %863 = vmatpush1.msra.mxu0 0.0
  %864 = vmatprep.subr.mxu0 0.0
  %865 = vmatpush1.msra.mxu0 0.0
  %866 = vmatprep.subr.mxu0 0.0
  %867 = vmatpush1.msra.mxu0 0.0
  %868 = vmatprep.subr.mxu0 0.0
  %869 = vmatpush1.msra.mxu0 0.0
  %870 = vmatprep.subr.mxu0 0.0
  %871 = vmatpush1.msra.mxu0 0.0
  %872 = vmatprep.subr.mxu0 0.0
  %873 = vmatpush1.msra.mxu0 0.0
  %874 = vmatprep.subr.mxu0 0.0
  %875 = vmatpush1.msra.mxu0 0.0
  %876 = vmatprep.subr.mxu0 0.0
  %877 = vmatpush1.msra.mxu0 0.0
  %878 = vmatprep.mubr.f32.mxu0 0.0
  %879 = vmatmul.mubr.f32.gmra.mrb[0].mxu0 %v223
  %v880 = vpop.f32.mrb[0].mxu0
  %v881 = vadd.f32 %v219, %v880
  %v882 = vpop.f32.mrb[0].mxu0
  %883 = vmatprep.mubr.f32.mxu0 0.0
  %884 = vmatmul.mubr.f32.gmra.mrb[0].mxu0 %v226
  %v885 = vpop.f32.mrb[0].mxu0
  %v886 = vadd.f32 %v219, %v885
  %v887 = vpop.f32.mrb[0].mxu0
  %888 = vmatprep.mubr.f32.mxu0 0.0
  %889 = vmatmul.mubr.f32.gmra.mrb[0].mxu0 %v229
  %v890 = vpop.f32.mrb[0].mxu0
  %v891 = vadd.f32 %v219, %v890
  %v892 = vpop.f32.mrb[0].mxu0
  %893 = vmatprep.mubr.f32.mxu0 0.0
  %894 = vmatmul.mubr.f32.gmra.mrb[0].mxu0 %v232
  %v895 = vpop.f32.mrb[0].mxu0
  %v896 = vadd.f32 %v219, %v895
  %v897 = vpop.f32.mrb[0].mxu0
  %898 = vmatprep.mubr.f32.mxu0 0.0
  %899 = vmatmul.mubr.f32.gmra.mrb[0].mxu0 %v235
  %v900 = vpop.f32.mrb[0].mxu0
  %v901 = vadd.f32 %v219, %v900
  %v902 = vpop.f32.mrb[0].mxu0
  %903 = vmatprep.mubr.f32.mxu0 0.0
  %904 = vmatmul.mubr.f32.gmra.mrb[0].mxu0 %v238
  %v905 = vpop.f32.mrb[0].mxu0
  %v906 = vadd.f32 %v219, %v905
  %v907 = vpop.f32.mrb[0].mxu0
  %908 = vmatprep.mubr.f32.mxu0 0.0
  %909 = vmatmul.mubr.f32.gmra.mrb[0].mxu0 %v241
  %v910 = vpop.f32.mrb[0].mxu0
  %v911 = vadd.f32 %v219, %v910
  %v912 = vpop.f32.mrb[0].mxu0
  %913 = vmatprep.mubr.f32.mxu0 0.0
  %914 = vmatmul.mubr.f32.gmra.mrb[0].mxu0 %v244
  %v915 = vpop.f32.mrb[0].mxu0
  %v916 = vadd.f32 %v219, %v915
  %v917 = vpop.f32.mrb[0].mxu0
  %918 = vmatprep.mubr.f32.mxu0 0.0
  %919 = vmatmul.mubr.f32.gmra.mrb[0].mxu0 %v247
  %v920 = vpop.f32.mrb[0].mxu0
  %v921 = vadd.f32 %v219, %v920
  %v922 = vpop.f32.mrb[0].mxu0
  %923 = vmatprep.mubr.f32.mxu0 0.0
  %924 = vmatmul.mubr.f32.gmra.mrb[0].mxu0 %v250
  %v925 = vpop.f32.mrb[0].mxu0
  %v926 = vadd.f32 %v219, %v925
  %v927 = vpop.f32.mrb[0].mxu0
  %928 = vmatprep.mubr.f32.mxu0 0.0
  %929 = vmatmul.mubr.f32.gmra.mrb[0].mxu0 %v253
  %v930 = vpop.f32.mrb[0].mxu0
  %v931 = vadd.f32 %v219, %v930
  %v932 = vpop.f32.mrb[0].mxu0
  %933 = vmatprep.mubr.f32.mxu0 0.0
  %934 = vmatmul.mubr.f32.gmra.mrb[0].mxu0 %v256
  %v935 = vpop.f32.mrb[0].mxu0
  %v936 = vadd.f32 %v219, %v935
  %v937 = vpop.f32.mrb[0].mxu0
  %938 = vmatprep.mubr.f32.mxu0 0.0
  %939 = vmatmul.mubr.f32.gmra.mrb[0].mxu0 %v259
  %v940 = vpop.f32.mrb[0].mxu0
  %v941 = vadd.f32 %v219, %v940
  %v942 = vpop.f32.mrb[0].mxu0
  %943 = vmatprep.mubr.f32.mxu0 0.0
  %944 = vmatmul.mubr.f32.gmra.mrb[0].mxu0 %v262
  %v945 = vpop.f32.mrb[0].mxu0
  %v946 = vadd.f32 %v219, %v945
  %v947 = vpop.f32.mrb[0].mxu0
  %948 = vmatprep.mubr.f32.mxu0 0.0
  %949 = vmatmul.mubr.f32.gmra.mrb[0].mxu0 %v265
  %v950 = vpop.f32.mrb[0].mxu0
  %v951 = vadd.f32 %v219, %v950
  %v952 = vpop.f32.mrb[0].mxu0
  %953 = vmatprep.mubr.f32.mxu0 0.0
  %954 = vmatmul.mubr.f32.gmra.mrb[0].mxu0 %v268
  %v955 = vpop.f32.mrb[0].mxu0
  %v956 = vadd.f32 %v219, %v955
  %v957 = vpop.f32.mrb[0].mxu0
  %958 = vmatprep.mubr.f32.mxu0 0.0
  %959 = vmatmul.mubr.f32.gmra.mrb[0].mxu0 %v271
  %v960 = vpop.f32.mrb[0].mxu0
  %v961 = vadd.f32 %v219, %v960
  %v962 = vpop.f32.mrb[0].mxu0
  %963 = vmatprep.mubr.f32.mxu0 0.0
  %964 = vmatmul.mubr.f32.gmra.mrb[0].mxu0 %v274
  %v965 = vpop.f32.mrb[0].mxu0
  %v966 = vadd.f32 %v219, %v965
  %v967 = vpop.f32.mrb[0].mxu0
  %968 = vmatprep.mubr.f32.mxu0 0.0
  %969 = vmatmul.mubr.f32.gmra.mrb[0].mxu0 %v277
  %v970 = vpop.f32.mrb[0].mxu0
  %v971 = vadd.f32 %v219, %v970
  %v972 = vpop.f32.mrb[0].mxu0
  %973 = vmatprep.mubr.f32.mxu0 0.0
  %974 = vmatmul.mubr.f32.gmra.mrb[0].mxu0 %v280
  %v975 = vpop.f32.mrb[0].mxu0
  %v976 = vadd.f32 %v219, %v975
  %v977 = vpop.f32.mrb[0].mxu0
  %978 = vmatprep.mubr.f32.mxu0 0.0
  %979 = vmatmul.mubr.f32.gmra.mrb[0].mxu0 %v283
  %v980 = vpop.f32.mrb[0].mxu0
  %v981 = vadd.f32 %v219, %v980
  %v982 = vpop.f32.mrb[0].mxu0
  %983 = vmatprep.mubr.f32.mxu0 0.0
  %984 = vmatmul.mubr.f32.gmra.mrb[0].mxu0 %v286
  %v985 = vpop.f32.mrb[0].mxu0
  %v986 = vadd.f32 %v219, %v985
  %v987 = vpop.f32.mrb[0].mxu0
  %988 = vmatprep.mubr.f32.mxu0 0.0
  %989 = vmatmul.mubr.f32.gmra.mrb[0].mxu0 %v289
  %v990 = vpop.f32.mrb[0].mxu0
  %v991 = vadd.f32 %v219, %v990
  %v992 = vpop.f32.mrb[0].mxu0
  %993 = vmatprep.mubr.f32.mxu0 0.0
  %994 = vmatmul.mubr.f32.gmra.mrb[0].mxu0 %v292
  %v995 = vpop.f32.mrb[0].mxu0
  %v996 = vadd.f32 %v219, %v995
  %v997 = vpop.f32.mrb[0].mxu0
  %998 = vmatprep.mubr.f32.mxu0 0.0
  %999 = vmatmul.mubr.f32.gmra.mrb[0].mxu0 %v295
  %v1000 = vpop.f32.mrb[0].mxu0
  %v1001 = vadd.f32 %v219, %v1000
  %v1002 = vpop.f32.mrb[0].mxu0
  %1003 = vmatprep.mubr.f32.mxu0 0.0
  %1004 = vmatmul.mubr.f32.gmra.mrb[0].mxu0 %v298
  %v1005 = vpop.f32.mrb[0].mxu0
  %v1006 = vadd.f32 %v219, %v1005
  %v1007 = vpop.f32.mrb[0].mxu0
  %1008 = vmatprep.mubr.f32.mxu0 0.0
  %1009 = vmatmul.mubr.f32.gmra.mrb[0].mxu0 %v301
  %v1010 = vpop.f32.mrb[0].mxu0
  %v1011 = vadd.f32 %v219, %v1010
  %v1012 = vpop.f32.mrb[0].mxu0
  %1013 = vmatprep.mubr.f32.mxu0 0.0
  %1014 = vmatmul.mubr.f32.gmra.mrb[0].mxu0 %v304
  %v1015 = vpop.f32.mrb[0].mxu0
  %v1016 = vadd.f32 %v219, %v1015
  %v1017 = vpop.f32.mrb[0].mxu0
  %1018 = vmatprep.mubr.f32.mxu0 0.0
  %1019 = vmatmul.mubr.f32.gmra.mrb[0].mxu0 %v307
  %v1020 = vpop.f32.mrb[0].mxu0
  %v1021 = vadd.f32 %v219, %v1020
  %v1022 = vpop.f32.mrb[0].mxu0
  %1023 = vmatprep.mubr.f32.mxu0 0.0
  %1024 = vmatmul.mubr.f32.gmra.mrb[0].mxu0 %v310
  %v1025 = vpop.f32.mrb[0].mxu0
  %v1026 = vadd.f32 %v219, %v1025
  %v1027 = vpop.f32.mrb[0].mxu0
  %1028 = vmatprep.mubr.f32.mxu0 0.0
  %1029 = vmatmul.mubr.f32.gmra.mrb[0].mxu0 %v313
  %v1030 = vpop.f32.mrb[0].mxu0
  %v1031 = vadd.f32 %v219, %v1030
  %v1032 = vpop.f32.mrb[0].mxu0
  %1033 = vmatprep.mubr.f32.mxu0 0.0
  %1034 = vmatmul.mubr.f32.gmra.mrb[0].mxu0 %v316
  %v1035 = vpop.f32.mrb[0].mxu0
  %v1036 = vadd.f32 %v219, %v1035
  %v1037 = vpop.f32.mrb[0].mxu0
  %1038 = vmatprep.mubr.f32.mxu0 0.0
  %1039 = vmatmul.mubr.f32.gmra.mrb[0].mxu0 %v319
  %v1040 = vpop.f32.mrb[0].mxu0
  %v1041 = vadd.f32 %v219, %v1040
  %v1042 = vpop.f32.mrb[0].mxu0
  %1043 = vmatprep.mubr.f32.mxu0 0.0
  %1044 = vmatmul.mubr.f32.gmra.mrb[0].mxu0 %v322
  %v1045 = vpop.f32.mrb[0].mxu0
  %v1046 = vadd.f32 %v219, %v1045
  %v1047 = vpop.f32.mrb[0].mxu0
  %1048 = vmatprep.mubr.f32.mxu0 0.0
  %1049 = vmatmul.mubr.f32.gmra.mrb[0].mxu0 %v325
  %v1050 = vpop.f32.mrb[0].mxu0
  %v1051 = vadd.f32 %v219, %v1050
  %v1052 = vpop.f32.mrb[0].mxu0
  %1053 = vmatprep.mubr.f32.mxu0 0.0
  %1054 = vmatmul.mubr.f32.gmra.mrb[0].mxu0 %v328
  %v1055 = vpop.f32.mrb[0].mxu0
  %v1056 = vadd.f32 %v219, %v1055
  %v1057 = vpop.f32.mrb[0].mxu0
  %1058 = vmatprep.mubr.f32.mxu0 0.0
  %1059 = vmatmul.mubr.f32.gmra.mrb[0].mxu0 %v331
  %v1060 = vpop.f32.mrb[0].mxu0
  %v1061 = vadd.f32 %v219, %v1060
  %v1062 = vpop.f32.mrb[0].mxu0
  %1063 = vmatprep.mubr.f32.mxu0 0.0
  %1064 = vmatmul.mubr.f32.gmra.mrb[0].mxu0 %v334
  %v1065 = vpop.f32.mrb[0].mxu0
  %v1066 = vadd.f32 %v219, %v1065
  %v1067 = vpop.f32.mrb[0].mxu0
  %1068 = vmatprep.mubr.f32.mxu0 0.0
  %1069 = vmatmul.mubr.f32.gmra.mrb[0].mxu0 %v337
  %v1070 = vpop.f32.mrb[0].mxu0
  %v1071 = vadd.f32 %v219, %v1070
  %v1072 = vpop.f32.mrb[0].mxu0
  %1073 = vmatprep.mubr.f32.mxu0 0.0
  %1074 = vmatmul.mubr.f32.gmra.mrb[0].mxu0 %v340
  %v1075 = vpop.f32.mrb[0].mxu0
  %v1076 = vadd.f32 %v219, %v1075
  %v1077 = vpop.f32.mrb[0].mxu0
  %1078 = vmatprep.mubr.f32.mxu0 0.0
  %1079 = vmatmul.mubr.f32.gmra.mrb[0].mxu0 %v343
  %v1080 = vpop.f32.mrb[0].mxu0
  %v1081 = vadd.f32 %v219, %v1080
  %v1082 = vpop.f32.mrb[0].mxu0
  %1083 = vmatprep.mubr.f32.mxu0 0.0
  %1084 = vmatmul.mubr.f32.gmra.mrb[0].mxu0 %v346
  %v1085 = vpop.f32.mrb[0].mxu0
  %v1086 = vadd.f32 %v219, %v1085
  %v1087 = vpop.f32.mrb[0].mxu0
  %1088 = vmatprep.mubr.f32.mxu0 0.0
  %1089 = vmatmul.mubr.f32.gmra.mrb[0].mxu0 %v349
  %v1090 = vpop.f32.mrb[0].mxu0
  %v1091 = vadd.f32 %v219, %v1090
  %v1092 = vpop.f32.mrb[0].mxu0
  %1093 = vmatprep.mubr.f32.mxu0 0.0
  %1094 = vmatmul.mubr.f32.gmra.mrb[0].mxu0 %v352
  %v1095 = vpop.f32.mrb[0].mxu0
  %v1096 = vadd.f32 %v219, %v1095
  %v1097 = vpop.f32.mrb[0].mxu0
  %1098 = vmatprep.mubr.f32.mxu0 0.0
  %1099 = vmatmul.mubr.f32.gmra.mrb[0].mxu0 %v355
  %v1100 = vpop.f32.mrb[0].mxu0
  %v1101 = vadd.f32 %v219, %v1100
  %v1102 = vpop.f32.mrb[0].mxu0
  %1103 = vmatprep.mubr.f32.mxu0 0.0
  %1104 = vmatmul.mubr.f32.gmra.mrb[0].mxu0 %v358
  %v1105 = vpop.f32.mrb[0].mxu0
  %v1106 = vadd.f32 %v219, %v1105
  %v1107 = vpop.f32.mrb[0].mxu0
  %1108 = vmatprep.mubr.f32.mxu0 0.0
  %1109 = vmatmul.mubr.f32.gmra.mrb[0].mxu0 %v361
  %v1110 = vpop.f32.mrb[0].mxu0
  %v1111 = vadd.f32 %v219, %v1110
  %v1112 = vpop.f32.mrb[0].mxu0
  %1113 = vmatprep.mubr.f32.mxu0 0.0
  %1114 = vmatmul.mubr.f32.gmra.mrb[0].mxu0 %v364
  %v1115 = vpop.f32.mrb[0].mxu0
  %v1116 = vadd.f32 %v219, %v1115
  %v1117 = vpop.f32.mrb[0].mxu0
  %1118 = vmatprep.mubr.f32.mxu0 0.0
  %1119 = vmatmul.mubr.f32.gmra.mrb[0].mxu0 %v367
  %v1120 = vpop.f32.mrb[0].mxu0
  %v1121 = vadd.f32 %v219, %v1120
  %v1122 = vpop.f32.mrb[0].mxu0
  %1123 = vmatprep.mubr.f32.mxu0 0.0
  %1124 = vmatmul.mubr.f32.gmra.mrb[0].mxu0 %v370
  %v1125 = vpop.f32.mrb[0].mxu0
  %v1126 = vadd.f32 %v219, %v1125
  %v1127 = vpop.f32.mrb[0].mxu0
  %1128 = vmatprep.mubr.f32.mxu0 0.0
  %1129 = vmatmul.mubr.f32.gmra.mrb[0].mxu0 %v373
  %v1130 = vpop.f32.mrb[0].mxu0
  %v1131 = vadd.f32 %v219, %v1130
  %v1132 = vpop.f32.mrb[0].mxu0
  %1133 = vmatprep.mubr.f32.mxu0 0.0
  %1134 = vmatmul.mubr.f32.gmra.mrb[0].mxu0 %v376
  %v1135 = vpop.f32.mrb[0].mxu0
  %v1136 = vadd.f32 %v219, %v1135
  %v1137 = vpop.f32.mrb[0].mxu0
  %1138 = vmatprep.mubr.f32.mxu0 0.0
  %1139 = vmatmul.mubr.f32.gmra.mrb[0].mxu0 %v379
  %v1140 = vpop.f32.mrb[0].mxu0
  %v1141 = vadd.f32 %v219, %v1140
  %v1142 = vpop.f32.mrb[0].mxu0
  %1143 = vmatprep.mubr.f32.mxu0 0.0
  %1144 = vmatmul.mubr.f32.gmra.mrb[0].mxu0 %v382
  %v1145 = vpop.f32.mrb[0].mxu0
  %v1146 = vadd.f32 %v219, %v1145
  %v1147 = vpop.f32.mrb[0].mxu0
  %1148 = vmatprep.mubr.f32.mxu0 0.0
  %1149 = vmatmul.mubr.f32.gmra.mrb[0].mxu0 %v385
  %v1150 = vpop.f32.mrb[0].mxu0
  %v1151 = vadd.f32 %v219, %v1150
  %v1152 = vpop.f32.mrb[0].mxu0
  %1153 = vmatprep.mubr.f32.mxu0 0.0
  %1154 = vmatmul.mubr.f32.gmra.mrb[0].mxu0 %v388
  %v1155 = vpop.f32.mrb[0].mxu0
  %v1156 = vadd.f32 %v219, %v1155
  %v1157 = vpop.f32.mrb[0].mxu0
  %1158 = vmatprep.mubr.f32.mxu0 0.0
  %1159 = vmatmul.mubr.f32.gmra.mrb[0].mxu0 %v391
  %v1160 = vpop.f32.mrb[0].mxu0
  %v1161 = vadd.f32 %v219, %v1160
  %v1162 = vpop.f32.mrb[0].mxu0
  %1163 = vmatprep.mubr.f32.mxu0 0.0
  %1164 = vmatmul.mubr.f32.gmra.mrb[0].mxu0 %v394
  %v1165 = vpop.f32.mrb[0].mxu0
  %v1166 = vadd.f32 %v219, %v1165
  %v1167 = vpop.f32.mrb[0].mxu0
  %1168 = vmatprep.mubr.f32.mxu0 0.0
  %1169 = vmatmul.mubr.f32.gmra.mrb[0].mxu0 %v397
  %v1170 = vpop.f32.mrb[0].mxu0
  %v1171 = vadd.f32 %v219, %v1170
  %v1172 = vpop.f32.mrb[0].mxu0
  %1173 = vmatprep.mubr.f32.mxu0 0.0
  %1174 = vmatmul.mubr.f32.gmra.mrb[0].mxu0 %v400
  %v1175 = vpop.f32.mrb[0].mxu0
  %v1176 = vadd.f32 %v219, %v1175
  %v1177 = vpop.f32.mrb[0].mxu0
  %1178 = vmatprep.mubr.f32.mxu0 0.0
  %1179 = vmatmul.mubr.f32.gmra.mrb[0].mxu0 %v403
  %v1180 = vpop.f32.mrb[0].mxu0
  %v1181 = vadd.f32 %v219, %v1180
  %v1182 = vpop.f32.mrb[0].mxu0
  %1183 = vmatprep.mubr.f32.mxu0 0.0
  %1184 = vmatmul.mubr.f32.gmra.mrb[0].mxu0 %v406
  %v1185 = vpop.f32.mrb[0].mxu0
  %v1186 = vadd.f32 %v219, %v1185
  %v1187 = vpop.f32.mrb[0].mxu0
  %1188 = vmatprep.mubr.f32.mxu0 0.0
  %1189 = vmatmul.mubr.f32.gmra.mrb[0].mxu0 %v409
  %v1190 = vpop.f32.mrb[0].mxu0
  %v1191 = vadd.f32 %v219, %v1190
  %v1192 = vpop.f32.mrb[0].mxu0
  %1193 = vmatprep.mubr.f32.mxu0 0.0
  %1194 = vmatmul.mubr.f32.gmra.mrb[0].mxu0 %v412
  %v1195 = vpop.f32.mrb[0].mxu0
  %v1196 = vadd.f32 %v219, %v1195
  %v1197 = vpop.f32.mrb[0].mxu0
  %1198 = vmatprep.mubr.f32.mxu0 0.0
  %1199 = vmatmul.mubr.f32.gmra.mrb[0].mxu0 %v415
  %v1200 = vpop.f32.mrb[0].mxu0
  %v1201 = vadd.f32 %v219, %v1200
  %v1202 = vpop.f32.mrb[0].mxu0
  %1203 = vmatprep.mubr.f32.mxu0 0.0
  %1204 = vmatmul.mubr.f32.gmra.mrb[0].mxu0 %v418
  %v1205 = vpop.f32.mrb[0].mxu0
  %v1206 = vadd.f32 %v219, %v1205
  %v1207 = vpop.f32.mrb[0].mxu0
  %1208 = vmatprep.mubr.f32.mxu0 0.0
  %1209 = vmatmul.mubr.f32.gmra.mrb[0].mxu0 %v421
  %v1210 = vpop.f32.mrb[0].mxu0
  %v1211 = vadd.f32 %v219, %v1210
  %v1212 = vpop.f32.mrb[0].mxu0
  %1213 = vmatprep.mubr.f32.mxu0 0.0
  %1214 = vmatmul.mubr.f32.gmra.mrb[0].mxu0 %v424
  %v1215 = vpop.f32.mrb[0].mxu0
  %v1216 = vadd.f32 %v219, %v1215
  %v1217 = vpop.f32.mrb[0].mxu0
  %1218 = vmatprep.mubr.f32.mxu0 0.0
  %1219 = vmatmul.mubr.f32.gmra.mrb[0].mxu0 %v427
  %v1220 = vpop.f32.mrb[0].mxu0
  %v1221 = vadd.f32 %v219, %v1220
  %v1222 = vpop.f32.mrb[0].mxu0
  %1223 = vmatprep.mubr.f32.mxu0 0.0
  %1224 = vmatmul.mubr.f32.gmra.mrb[0].mxu0 %v430
  %v1225 = vpop.f32.mrb[0].mxu0
  %v1226 = vadd.f32 %v219, %v1225
  %v1227 = vpop.f32.mrb[0].mxu0
  %1228 = vmatprep.mubr.f32.mxu0 0.0
  %1229 = vmatmul.mubr.f32.gmra.mrb[0].mxu0 %v433
  %v1230 = vpop.f32.mrb[0].mxu0
  %v1231 = vadd.f32 %v219, %v1230
  %v1232 = vpop.f32.mrb[0].mxu0
  %1233 = vmatprep.mubr.f32.mxu0 0.0
  %1234 = vmatmul.mubr.f32.gmra.mrb[0].mxu0 %v436
  %v1235 = vpop.f32.mrb[0].mxu0
  %v1236 = vadd.f32 %v219, %v1235
  %v1237 = vpop.f32.mrb[0].mxu0
  %1238 = vmatprep.mubr.f32.mxu0 0.0
  %1239 = vmatmul.mubr.f32.gmra.mrb[0].mxu0 %v439
  %v1240 = vpop.f32.mrb[0].mxu0
  %v1241 = vadd.f32 %v219, %v1240
  %v1242 = vpop.f32.mrb[0].mxu0
  %1243 = vmatprep.mubr.f32.mxu0 0.0
  %1244 = vmatmul.mubr.f32.gmra.mrb[0].mxu0 %v442
  %v1245 = vpop.f32.mrb[0].mxu0
  %v1246 = vadd.f32 %v219, %v1245
  %v1247 = vpop.f32.mrb[0].mxu0
  %1248 = vmatprep.mubr.f32.mxu0 0.0
  %1249 = vmatmul.mubr.f32.gmra.mrb[0].mxu0 %v445
  %v1250 = vpop.f32.mrb[0].mxu0
  %v1251 = vadd.f32 %v219, %v1250
  %v1252 = vpop.f32.mrb[0].mxu0
  %1253 = vmatprep.mubr.f32.mxu0 0.0
  %1254 = vmatmul.mubr.f32.gmra.mrb[0].mxu0 %v448
  %v1255 = vpop.f32.mrb[0].mxu0
  %v1256 = vadd.f32 %v219, %v1255
  %v1257 = vpop.f32.mrb[0].mxu0
  %1258 = vmatprep.mubr.f32.mxu0 0.0
  %1259 = vmatmul.mubr.f32.gmra.mrb[0].mxu0 %v451
  %v1260 = vpop.f32.mrb[0].mxu0
  %v1261 = vadd.f32 %v219, %v1260
  %v1262 = vpop.f32.mrb[0].mxu0
  %1263 = vmatprep.mubr.f32.mxu0 0.0
  %1264 = vmatmul.mubr.f32.gmra.mrb[0].mxu0 %v454
  %v1265 = vpop.f32.mrb[0].mxu0
  %v1266 = vadd.f32 %v219, %v1265
  %v1267 = vpop.f32.mrb[0].mxu0
  %1268 = vmatprep.mubr.f32.mxu0 0.0
  %1269 = vmatmul.mubr.f32.gmra.mrb[0].mxu0 %v457
  %v1270 = vpop.f32.mrb[0].mxu0
  %v1271 = vadd.f32 %v219, %v1270
  %v1272 = vpop.f32.mrb[0].mxu0
  %1273 = vmatprep.mubr.f32.mxu0 0.0
  %1274 = vmatmul.mubr.f32.gmra.mrb[0].mxu0 %v460
  %v1275 = vpop.f32.mrb[0].mxu0
  %v1276 = vadd.f32 %v219, %v1275
  %v1277 = vpop.f32.mrb[0].mxu0
  %1278 = vmatprep.mubr.f32.mxu0 0.0
  %1279 = vmatmul.mubr.f32.gmra.mrb[0].mxu0 %v463
  %v1280 = vpop.f32.mrb[0].mxu0
  %v1281 = vadd.f32 %v219, %v1280
  %v1282 = vpop.f32.mrb[0].mxu0
  %1283 = vmatprep.mubr.f32.mxu0 0.0
  %1284 = vmatmul.mubr.f32.gmra.mrb[0].mxu0 %v466
  %v1285 = vpop.f32.mrb[0].mxu0
  %v1286 = vadd.f32 %v219, %v1285
  %v1287 = vpop.f32.mrb[0].mxu0
  %1288 = vmatprep.mubr.f32.mxu0 0.0
  %1289 = vmatmul.mubr.f32.gmra.mrb[0].mxu0 %v469
  %v1290 = vpop.f32.mrb[0].mxu0
  %v1291 = vadd.f32 %v219, %v1290
  %v1292 = vpop.f32.mrb[0].mxu0
  %1293 = vmatprep.mubr.f32.mxu0 0.0
  %1294 = vmatmul.mubr.f32.gmra.mrb[0].mxu0 %v472
  %v1295 = vpop.f32.mrb[0].mxu0
  %v1296 = vadd.f32 %v219, %v1295
  %v1297 = vpop.f32.mrb[0].mxu0
  %1298 = vmatprep.mubr.f32.mxu0 0.0
  %1299 = vmatmul.mubr.f32.gmra.mrb[0].mxu0 %v475
  %v1300 = vpop.f32.mrb[0].mxu0
  %v1301 = vadd.f32 %v219, %v1300
  %v1302 = vpop.f32.mrb[0].mxu0
  %1303 = vmatprep.mubr.f32.mxu0 0.0
  %1304 = vmatmul.mubr.f32.gmra.mrb[0].mxu0 %v478
  %v1305 = vpop.f32.mrb[0].mxu0
  %v1306 = vadd.f32 %v219, %v1305
  %v1307 = vpop.f32.mrb[0].mxu0
  %1308 = vmatprep.mubr.f32.mxu0 0.0
  %1309 = vmatmul.mubr.f32.gmra.mrb[0].mxu0 %v481
  %v1310 = vpop.f32.mrb[0].mxu0
  %v1311 = vadd.f32 %v219, %v1310
  %v1312 = vpop.f32.mrb[0].mxu0
  %1313 = vmatprep.mubr.f32.mxu0 0.0
  %1314 = vmatmul.mubr.f32.gmra.mrb[0].mxu0 %v484
  %v1315 = vpop.f32.mrb[0].mxu0
  %v1316 = vadd.f32 %v219, %v1315
  %v1317 = vpop.f32.mrb[0].mxu0
  %1318 = vmatprep.mubr.f32.mxu0 0.0
  %1319 = vmatmul.mubr.f32.gmra.mrb[0].mxu0 %v487
  %v1320 = vpop.f32.mrb[0].mxu0
  %v1321 = vadd.f32 %v219, %v1320
  %v1322 = vpop.f32.mrb[0].mxu0
  %1323 = vmatprep.mubr.f32.mxu0 0.0
  %1324 = vmatmul.mubr.f32.gmra.mrb[0].mxu0 %v490
  %v1325 = vpop.f32.mrb[0].mxu0
  %v1326 = vadd.f32 %v219, %v1325
  %v1327 = vpop.f32.mrb[0].mxu0
  %1328 = vmatprep.mubr.f32.mxu0 0.0
  %1329 = vmatmul.mubr.f32.gmra.mrb[0].mxu0 %v493
  %v1330 = vpop.f32.mrb[0].mxu0
  %v1331 = vadd.f32 %v219, %v1330
  %v1332 = vpop.f32.mrb[0].mxu0
  %1333 = vmatprep.mubr.f32.mxu0 0.0
  %1334 = vmatmul.mubr.f32.gmra.mrb[0].mxu0 %v496
  %v1335 = vpop.f32.mrb[0].mxu0
  %v1336 = vadd.f32 %v219, %v1335
  %v1337 = vpop.f32.mrb[0].mxu0
  %1338 = vmatprep.mubr.f32.mxu0 0.0
  %1339 = vmatmul.mubr.f32.gmra.mrb[0].mxu0 %v499
  %v1340 = vpop.f32.mrb[0].mxu0
  %v1341 = vadd.f32 %v219, %v1340
  %v1342 = vpop.f32.mrb[0].mxu0
  %1343 = vmatprep.mubr.f32.mxu0 0.0
  %1344 = vmatmul.mubr.f32.gmra.mrb[0].mxu0 %v502
  %v1345 = vpop.f32.mrb[0].mxu0
  %v1346 = vadd.f32 %v219, %v1345
  %v1347 = vpop.f32.mrb[0].mxu0
  %1348 = vmatprep.mubr.f32.mxu0 0.0
  %1349 = vmatmul.mubr.f32.gmra.mrb[0].mxu0 %v505
  %v1350 = vpop.f32.mrb[0].mxu0
  %v1351 = vadd.f32 %v219, %v1350
  %v1352 = vpop.f32.mrb[0].mxu0
  %1353 = vmatprep.mubr.f32.mxu0 0.0
  %1354 = vmatmul.mubr.f32.gmra.mrb[0].mxu0 %v508
  %v1355 = vpop.f32.mrb[0].mxu0
  %v1356 = vadd.f32 %v219, %v1355
  %v1357 = vpop.f32.mrb[0].mxu0
  %1358 = vmatprep.mubr.f32.mxu0 0.0
  %1359 = vmatmul.mubr.f32.gmra.mrb[0].mxu0 %v511
  %v1360 = vpop.f32.mrb[0].mxu0
  %v1361 = vadd.f32 %v219, %v1360
  %v1362 = vpop.f32.mrb[0].mxu0
  %1363 = vmatprep.mubr.f32.mxu0 0.0
  %1364 = vmatmul.mubr.f32.gmra.mrb[0].mxu0 %v514
  %v1365 = vpop.f32.mrb[0].mxu0
  %v1366 = vadd.f32 %v219, %v1365
  %v1367 = vpop.f32.mrb[0].mxu0
  %1368 = vmatprep.mubr.f32.mxu0 0.0
  %1369 = vmatmul.mubr.f32.gmra.mrb[0].mxu0 %v517
  %v1370 = vpop.f32.mrb[0].mxu0
  %v1371 = vadd.f32 %v219, %v1370
  %v1372 = vpop.f32.mrb[0].mxu0
  %1373 = vmatprep.mubr.f32.mxu0 0.0
  %1374 = vmatmul.mubr.f32.gmra.mrb[0].mxu0 %v520
  %v1375 = vpop.f32.mrb[0].mxu0
  %v1376 = vadd.f32 %v219, %v1375
  %v1377 = vpop.f32.mrb[0].mxu0
  %1378 = vmatprep.mubr.f32.mxu0 0.0
  %1379 = vmatmul.mubr.f32.gmra.mrb[0].mxu0 %v523
  %v1380 = vpop.f32.mrb[0].mxu0
  %v1381 = vadd.f32 %v219, %v1380
  %v1382 = vpop.f32.mrb[0].mxu0
  %1383 = vmatprep.mubr.f32.mxu0 0.0
  %1384 = vmatmul.mubr.f32.gmra.mrb[0].mxu0 %v526
  %v1385 = vpop.f32.mrb[0].mxu0
  %v1386 = vadd.f32 %v219, %v1385
  %v1387 = vpop.f32.mrb[0].mxu0
  %1388 = vmatprep.mubr.f32.mxu0 0.0
  %1389 = vmatmul.mubr.f32.gmra.mrb[0].mxu0 %v529
  %v1390 = vpop.f32.mrb[0].mxu0
  %v1391 = vadd.f32 %v219, %v1390
  %v1392 = vpop.f32.mrb[0].mxu0
  %1393 = vmatprep.mubr.f32.mxu0 0.0
  %1394 = vmatmul.mubr.f32.gmra.mrb[0].mxu0 %v532
  %v1395 = vpop.f32.mrb[0].mxu0
  %v1396 = vadd.f32 %v219, %v1395
  %v1397 = vpop.f32.mrb[0].mxu0
  %1398 = vmatprep.mubr.f32.mxu0 0.0
  %1399 = vmatmul.mubr.f32.gmra.mrb[0].mxu0 %v535
  %v1400 = vpop.f32.mrb[0].mxu0
  %v1401 = vadd.f32 %v219, %v1400
  %v1402 = vpop.f32.mrb[0].mxu0
  %1403 = vmatprep.mubr.f32.mxu0 0.0
  %1404 = vmatmul.mubr.f32.gmra.mrb[0].mxu0 %v538
  %v1405 = vpop.f32.mrb[0].mxu0
  %v1406 = vadd.f32 %v219, %v1405
  %v1407 = vpop.f32.mrb[0].mxu0
  %1408 = vmatprep.mubr.f32.mxu0 0.0
  %1409 = vmatmul.mubr.f32.gmra.mrb[0].mxu0 %v541
  %v1410 = vpop.f32.mrb[0].mxu0
  %v1411 = vadd.f32 %v219, %v1410
  %v1412 = vpop.f32.mrb[0].mxu0
  %1413 = vmatprep.mubr.f32.mxu0 0.0
  %1414 = vmatmul.mubr.f32.gmra.mrb[0].mxu0 %v544
  %v1415 = vpop.f32.mrb[0].mxu0
  %v1416 = vadd.f32 %v219, %v1415
  %v1417 = vpop.f32.mrb[0].mxu0
  %1418 = vmatprep.mubr.f32.mxu0 0.0
  %1419 = vmatmul.mubr.f32.gmra.mrb[0].mxu0 %v547
  %v1420 = vpop.f32.mrb[0].mxu0
  %v1421 = vadd.f32 %v219, %v1420
  %v1422 = vpop.f32.mrb[0].mxu0
  %1423 = vmatprep.mubr.f32.mxu0 0.0
  %1424 = vmatmul.mubr.f32.gmra.mrb[0].mxu0 %v550
  %v1425 = vpop.f32.mrb[0].mxu0
  %v1426 = vadd.f32 %v219, %v1425
  %v1427 = vpop.f32.mrb[0].mxu0
  %1428 = vmatprep.mubr.f32.mxu0 0.0
  %1429 = vmatmul.mubr.f32.gmra.mrb[0].mxu0 %v553
  %v1430 = vpop.f32.mrb[0].mxu0
  %v1431 = vadd.f32 %v219, %v1430
  %v1432 = vpop.f32.mrb[0].mxu0
  %1433 = vmatprep.mubr.f32.mxu0 0.0
  %1434 = vmatmul.mubr.f32.gmra.mrb[0].mxu0 %v556
  %v1435 = vpop.f32.mrb[0].mxu0
  %v1436 = vadd.f32 %v219, %v1435
  %v1437 = vpop.f32.mrb[0].mxu0
  %1438 = vmatprep.mubr.f32.mxu0 0.0
  %1439 = vmatmul.mubr.f32.gmra.mrb[0].mxu0 %v559
  %v1440 = vpop.f32.mrb[0].mxu0
  %v1441 = vadd.f32 %v219, %v1440
  %v1442 = vpop.f32.mrb[0].mxu0
  %1443 = vmatprep.mubr.f32.mxu0 0.0
  %1444 = vmatmul.mubr.f32.gmra.mrb[0].mxu0 %v562
  %v1445 = vpop.f32.mrb[0].mxu0
  %v1446 = vadd.f32 %v219, %v1445
  %v1447 = vpop.f32.mrb[0].mxu0
  %1448 = vmatprep.mubr.f32.mxu0 0.0
  %1449 = vmatmul.mubr.f32.gmra.mrb[0].mxu0 %v565
  %v1450 = vpop.f32.mrb[0].mxu0
  %v1451 = vadd.f32 %v219, %v1450
  %v1452 = vpop.f32.mrb[0].mxu0
  %1453 = vmatprep.mubr.f32.mxu0 0.0
  %1454 = vmatmul.mubr.f32.gmra.mrb[0].mxu0 %v568
  %v1455 = vpop.f32.mrb[0].mxu0
  %v1456 = vadd.f32 %v219, %v1455
  %v1457 = vpop.f32.mrb[0].mxu0
  %1458 = vmatprep.mubr.f32.mxu0 0.0
  %1459 = vmatmul.mubr.f32.gmra.mrb[0].mxu0 %v571
  %v1460 = vpop.f32.mrb[0].mxu0
  %v1461 = vadd.f32 %v219, %v1460
  %v1462 = vpop.f32.mrb[0].mxu0
  %1463 = vmatprep.mubr.f32.mxu0 0.0
  %1464 = vmatmul.mubr.f32.gmra.mrb[0].mxu0 %v574
  %v1465 = vpop.f32.mrb[0].mxu0
  %v1466 = vadd.f32 %v219, %v1465
  %v1467 = vpop.f32.mrb[0].mxu0
  %1468 = vmatprep.mubr.f32.mxu0 0.0
  %1469 = vmatmul.mubr.f32.gmra.mrb[0].mxu0 %v577
  %v1470 = vpop.f32.mrb[0].mxu0
  %v1471 = vadd.f32 %v219, %v1470
  %v1472 = vpop.f32.mrb[0].mxu0
  %1473 = vmatprep.mubr.f32.mxu0 0.0
  %1474 = vmatmul.mubr.f32.gmra.mrb[0].mxu0 %v580
  %v1475 = vpop.f32.mrb[0].mxu0
  %v1476 = vadd.f32 %v219, %v1475
  %v1477 = vpop.f32.mrb[0].mxu0
  %1478 = vmatprep.mubr.f32.mxu0 0.0
  %1479 = vmatmul.mubr.f32.gmra.mrb[0].mxu0 %v583
  %v1480 = vpop.f32.mrb[0].mxu0
  %v1481 = vadd.f32 %v219, %v1480
  %v1482 = vpop.f32.mrb[0].mxu0
  %1483 = vmatprep.mubr.f32.mxu0 0.0
  %1484 = vmatmul.mubr.f32.gmra.mrb[0].mxu0 %v586
  %v1485 = vpop.f32.mrb[0].mxu0
  %v1486 = vadd.f32 %v219, %v1485
  %v1487 = vpop.f32.mrb[0].mxu0
  %1488 = vmatprep.mubr.f32.mxu0 0.0
  %1489 = vmatmul.mubr.f32.gmra.mrb[0].mxu0 %v589
  %v1490 = vpop.f32.mrb[0].mxu0
  %v1491 = vadd.f32 %v219, %v1490
  %v1492 = vpop.f32.mrb[0].mxu0
  %1493 = vmatprep.mubr.f32.mxu0 0.0
  %1494 = vmatmul.mubr.f32.gmra.mrb[0].mxu0 %v592
  %v1495 = vpop.f32.mrb[0].mxu0
  %v1496 = vadd.f32 %v219, %v1495
  %v1497 = vpop.f32.mrb[0].mxu0
  %1498 = vmatprep.mubr.f32.mxu0 0.0
  %1499 = vmatmul.mubr.f32.gmra.mrb[0].mxu0 %v595
  %v1500 = vpop.f32.mrb[0].mxu0
  %v1501 = vadd.f32 %v219, %v1500
  %v1502 = vpop.f32.mrb[0].mxu0
  %1503 = vmatprep.mubr.f32.mxu0 0.0
  %1504 = vmatmul.mubr.f32.gmra.mrb[0].mxu0 %v598
  %v1505 = vpop.f32.mrb[0].mxu0
  %v1506 = vadd.f32 %v219, %v1505
  %v1507 = vpop.f32.mrb[0].mxu0
  %1508 = vmatprep.mubr.f32.mxu0 0.0
  %1509 = vmatmul.mubr.f32.gmra.mrb[0].mxu0 %v601
  %v1510 = vpop.f32.mrb[0].mxu0
  %v1511 = vadd.f32 %v219, %v1510
  %v1512 = vpop.f32.mrb[0].mxu0
  %1513 = vmatprep.mubr.f32.mxu0 0.0
  %1514 = vmatmul.mubr.f32.gmra.mrb[0].mxu0 %v604
  %v1515 = vpop.f32.mrb[0].mxu0
  %v1516 = vadd.f32 %v219, %v1515
  %v1517 = vpop.f32.mrb[0].mxu0
  %1518 = vmatprep.mubr.f32.mxu0 0.0
  %1519 = vmatmul.mubr.f32.gmra.mrb[0].mxu0 %v607
  %v1520 = vpop.f32.mrb[0].mxu0
  %v1521 = vadd.f32 %v219, %v1520
  %v1522 = vpop.f32.mrb[0].mxu0
  %1523 = vmatprep.mubr.f32.mxu0 0.0
  %1524 = vmatmul.mubr.f32.gmra.mrb[0].mxu0 %v610
  %v1525 = vpop.f32.mrb[0].mxu0
  %v1526 = vadd.f32 %v219, %v1525
  %v1527 = vpop.f32.mrb[0].mxu0
  %1528 = vmatprep.mubr.f32.mxu0 0.0
  %1529 = vmatmul.mubr.f32.gmra.mrb[0].mxu0 %v613
  %v1530 = vpop.f32.mrb[0].mxu0
  %v1531 = vadd.f32 %v219, %v1530
  %v1532 = vpop.f32.mrb[0].mxu0
  %1533 = vmatprep.mubr.f32.mxu0 0.0
  %1534 = vmatmul.mubr.f32.gmra.mrb[0].mxu0 %v616
  %v1535 = vpop.f32.mrb[0].mxu0
  %v1536 = vadd.f32 %v219, %v1535
  %v1537 = vpop.f32.mrb[0].mxu0
  %1538 = vmatprep.mubr.f32.mxu0 0.0
  %1539 = vmatmul.mubr.f32.gmra.mrb[0].mxu0 %v619
  %v1540 = vpop.f32.mrb[0].mxu0
  %v1541 = vadd.f32 %v219, %v1540
  %v1542 = vpop.f32.mrb[0].mxu0
  %1543 = vmatprep.mubr.f32.mxu0 0.0
  %1544 = vmatmul.mubr.f32.gmra.mrb[0].mxu0 %v622
  %v1545 = vpop.f32.mrb[0].mxu0
  %v1546 = vadd.f32 %v219, %v1545
  %v1547 = vpop.f32.mrb[0].mxu0
  %1548 = vmatprep.mubr.f32.mxu0 0.0
  %1549 = vmatmul.mubr.f32.gmra.mrb[0].mxu0 %v625
  %v1550 = vpop.f32.mrb[0].mxu0
  %v1551 = vadd.f32 %v219, %v1550
  %v1552 = vpop.f32.mrb[0].mxu0
  %1553 = vmatprep.mubr.f32.mxu0 0.0
  %1554 = vmatmul.mubr.f32.gmra.mrb[0].mxu0 %v628
  %v1555 = vpop.f32.mrb[0].mxu0
  %v1556 = vadd.f32 %v219, %v1555
  %v1557 = vpop.f32.mrb[0].mxu0
  %1558 = vmatprep.mubr.f32.mxu0 0.0
  %1559 = vmatmul.mubr.f32.gmra.mrb[0].mxu0 %v631
  %v1560 = vpop.f32.mrb[0].mxu0
  %v1561 = vadd.f32 %v219, %v1560
  %v1562 = vpop.f32.mrb[0].mxu0
  %1563 = vmatprep.mubr.f32.mxu0 0.0
  %1564 = vmatmul.mubr.f32.gmra.mrb[0].mxu0 %v634
  %v1565 = vpop.f32.mrb[0].mxu0
  %v1566 = vadd.f32 %v219, %v1565
  %v1567 = vpop.f32.mrb[0].mxu0
  %1568 = vmatprep.mubr.f32.mxu0 0.0
  %1569 = vmatmul.mubr.f32.gmra.mrb[0].mxu0 %v637
  %v1570 = vpop.f32.mrb[0].mxu0
  %v1571 = vadd.f32 %v219, %v1570
  %v1572 = vpop.f32.mrb[0].mxu0
  %1573 = vmatprep.mubr.f32.mxu0 0.0
  %1574 = vmatmul.mubr.f32.gmra.mrb[0].mxu0 %v640
  %v1575 = vpop.f32.mrb[0].mxu0
  %v1576 = vadd.f32 %v219, %v1575
  %v1577 = vpop.f32.mrb[0].mxu0
  %1578 = vmatprep.mubr.f32.mxu0 0.0
  %1579 = vmatmul.mubr.f32.gmra.mrb[0].mxu0 %v643
  %v1580 = vpop.f32.mrb[0].mxu0
  %v1581 = vadd.f32 %v219, %v1580
  %v1582 = vpop.f32.mrb[0].mxu0
  %1583 = vmatprep.mubr.f32.mxu0 0.0
  %1584 = vmatmul.mubr.f32.gmra.mrb[0].mxu0 %v646
  %v1585 = vpop.f32.mrb[0].mxu0
  %v1586 = vadd.f32 %v219, %v1585
  %v1587 = vpop.f32.mrb[0].mxu0
  %1588 = vmatprep.mubr.f32.mxu0 0.0
  %1589 = vmatmul.mubr.f32.gmra.mrb[0].mxu0 %v649
  %v1590 = vpop.f32.mrb[0].mxu0
  %v1591 = vadd.f32 %v219, %v1590
  %v1592 = vpop.f32.mrb[0].mxu0
  %1593 = vmatprep.mubr.f32.mxu0 0.0
  %1594 = vmatmul.mubr.f32.gmra.mrb[0].mxu0 %v652
  %v1595 = vpop.f32.mrb[0].mxu0
  %v1596 = vadd.f32 %v219, %v1595
  %v1597 = vpop.f32.mrb[0].mxu0
  %1598 = vmatprep.mubr.f32.mxu0 0.0
  %1599 = vmatmul.mubr.f32.gmra.mrb[0].mxu0 %v655
  %v1600 = vpop.f32.mrb[0].mxu0
  %v1601 = vadd.f32 %v219, %v1600
  %v1602 = vpop.f32.mrb[0].mxu0
  %1603 = vmatprep.mubr.f32.mxu0 0.0
  %1604 = vmatmul.mubr.f32.gmra.mrb[0].mxu0 %v658
  %v1605 = vpop.f32.mrb[0].mxu0
  %v1606 = vadd.f32 %v219, %v1605
  %v1607 = vpop.f32.mrb[0].mxu0
  %1608 = vmatprep.mubr.f32.mxu0 0.0
  %1609 = vmatmul.mubr.f32.gmra.mrb[0].mxu0 %v661
  %v1610 = vpop.f32.mrb[0].mxu0
  %v1611 = vadd.f32 %v219, %v1610
  %v1612 = vpop.f32.mrb[0].mxu0
  %1613 = vmatprep.mubr.f32.mxu0 0.0
  %1614 = vmatmul.mubr.f32.gmra.mrb[0].mxu0 %v664
  %v1615 = vpop.f32.mrb[0].mxu0
  %v1616 = vadd.f32 %v219, %v1615
  %v1617 = vpop.f32.mrb[0].mxu0
  %1618 = vmatprep.mubr.f32.mxu0 0.0
  %1619 = vmatmul.mubr.f32.gmra.mrb[0].mxu0 %v667
  %v1620 = vpop.f32.mrb[0].mxu0
  %v1621 = vadd.f32 %v219, %v1620
  %v1622 = vpop.f32.mrb[0].mxu0
  %1623 = vmatprep.mubr.f32.mxu0 0.0
  %1624 = vmatmul.mubr.f32.gmra.mrb[0].mxu0 %v670
  %v1625 = vpop.f32.mrb[0].mxu0
  %v1626 = vadd.f32 %v219, %v1625
  %v1627 = vpop.f32.mrb[0].mxu0
  %1628 = vmatprep.mubr.f32.mxu0 0.0
  %1629 = vmatmul.mubr.f32.gmra.mrb[0].mxu0 %v673
  %v1630 = vpop.f32.mrb[0].mxu0
  %v1631 = vadd.f32 %v219, %v1630
  %v1632 = vpop.f32.mrb[0].mxu0
  %1633 = vmatprep.mubr.f32.mxu0 0.0
  %1634 = vmatmul.mubr.f32.gmra.mrb[0].mxu0 %v676
  %v1635 = vpop.f32.mrb[0].mxu0
  %v1636 = vadd.f32 %v219, %v1635
  %v1637 = vpop.f32.mrb[0].mxu0
  %1638 = vmatprep.mubr.f32.mxu0 0.0
  %1639 = vmatmul.mubr.f32.gmra.mrb[0].mxu0 %v679
  %v1640 = vpop.f32.mrb[0].mxu0
  %v1641 = vadd.f32 %v219, %v1640
  %v1642 = vpop.f32.mrb[0].mxu0
  %1643 = vmatprep.mubr.f32.mxu0 0.0
  %1644 = vmatmul.mubr.f32.gmra.mrb[0].mxu0 %v682
  %v1645 = vpop.f32.mrb[0].mxu0
  %v1646 = vadd.f32 %v219, %v1645
  %v1647 = vpop.f32.mrb[0].mxu0
  %1648 = vmatprep.mubr.f32.mxu0 0.0
  %1649 = vmatmul.mubr.f32.gmra.mrb[0].mxu0 %v685
  %v1650 = vpop.f32.mrb[0].mxu0
  %v1651 = vadd.f32 %v219, %v1650
  %v1652 = vpop.f32.mrb[0].mxu0
  %1653 = vmatprep.mubr.f32.mxu0 0.0
  %1654 = vmatmul.mubr.f32.gmra.mrb[0].mxu0 %v688
  %v1655 = vpop.f32.mrb[0].mxu0
  %v1656 = vadd.f32 %v219, %v1655
  %v1657 = vpop.f32.mrb[0].mxu0
  %1658 = vmatprep.mubr.f32.mxu0 0.0
  %1659 = vmatmul.mubr.f32.gmra.mrb[0].mxu0 %v691
  %v1660 = vpop.f32.mrb[0].mxu0
  %v1661 = vadd.f32 %v219, %v1660
  %v1662 = vpop.f32.mrb[0].mxu0
  %1663 = vmatprep.mubr.f32.mxu0 0.0
  %1664 = vmatmul.mubr.f32.gmra.mrb[0].mxu0 %v694
  %v1665 = vpop.f32.mrb[0].mxu0
  %v1666 = vadd.f32 %v219, %v1665
  %v1667 = vpop.f32.mrb[0].mxu0
  %1668 = vmatprep.mubr.f32.mxu0 0.0
  %1669 = vmatmul.mubr.f32.gmra.mrb[0].mxu0 %v697
  %v1670 = vpop.f32.mrb[0].mxu0
  %v1671 = vadd.f32 %v219, %v1670
  %v1672 = vpop.f32.mrb[0].mxu0
  %1673 = vmatprep.mubr.f32.mxu0 0.0
  %1674 = vmatmul.mubr.f32.gmra.mrb[0].mxu0 %v700
  %v1675 = vpop.f32.mrb[0].mxu0
  %v1676 = vadd.f32 %v219, %v1675
  %v1677 = vpop.f32.mrb[0].mxu0
  %1678 = vmatprep.mubr.f32.mxu0 0.0
  %1679 = vmatmul.mubr.f32.gmra.mrb[0].mxu0 %v703
  %v1680 = vpop.f32.mrb[0].mxu0
  %v1681 = vadd.f32 %v219, %v1680
  %v1682 = vpop.f32.mrb[0].mxu0
  %1683 = vmatprep.mubr.f32.mxu0 0.0
  %1684 = vmatmul.mubr.f32.gmra.mrb[0].mxu0 %v706
  %v1685 = vpop.f32.mrb[0].mxu0
  %v1686 = vadd.f32 %v219, %v1685
  %v1687 = vpop.f32.mrb[0].mxu0
  %1688 = vmatprep.mubr.f32.mxu0 0.0
  %1689 = vmatmul.mubr.f32.gmra.mrb[0].mxu0 %v709
  %v1690 = vpop.f32.mrb[0].mxu0
  %v1691 = vadd.f32 %v219, %v1690
  %v1692 = vpop.f32.mrb[0].mxu0
  %1693 = vmatprep.mubr.f32.mxu0 0.0
  %1694 = vmatmul.mubr.f32.gmra.mrb[0].mxu0 %v712
  %v1695 = vpop.f32.mrb[0].mxu0
  %v1696 = vadd.f32 %v219, %v1695
  %v1697 = vpop.f32.mrb[0].mxu0
  %1698 = vmatprep.mubr.f32.mxu0 0.0
  %1699 = vmatmul.mubr.f32.gmra.mrb[0].mxu0 %v715
  %v1700 = vpop.f32.mrb[0].mxu0
  %v1701 = vadd.f32 %v219, %v1700
  %v1702 = vpop.f32.mrb[0].mxu0
  %1703 = vmatprep.mubr.f32.mxu0 0.0
  %1704 = vmatmul.mubr.f32.gmra.mrb[0].mxu0 %v718
  %v1705 = vpop.f32.mrb[0].mxu0
  %v1706 = vadd.f32 %v219, %v1705
  %v1707 = vpop.f32.mrb[0].mxu0
  %1708 = vmatprep.mubr.f32.mxu0 0.0
  %1709 = vmatmul.mubr.f32.gmra.mrb[0].mxu0 %v721
  %v1710 = vpop.f32.mrb[0].mxu0
  %v1711 = vadd.f32 %v219, %v1710
  %v1712 = vpop.f32.mrb[0].mxu0
  %1713 = vmatprep.mubr.f32.mxu0 0.0
  %1714 = vmatmul.mubr.f32.gmra.mrb[0].mxu0 %v724
  %v1715 = vpop.f32.mrb[0].mxu0
  %v1716 = vadd.f32 %v219, %v1715
  %v1717 = vpop.f32.mrb[0].mxu0
  %1718 = vmatprep.mubr.f32.mxu0 0.0
  %1719 = vmatmul.mubr.f32.gmra.mrb[0].mxu0 %v727
  %v1720 = vpop.f32.mrb[0].mxu0
  %v1721 = vadd.f32 %v219, %v1720
  %v1722 = vpop.f32.mrb[0].mxu0
  %1723 = vmatprep.mubr.f32.mxu0 0.0
  %1724 = vmatmul.mubr.f32.gmra.mrb[0].mxu0 %v730
  %v1725 = vpop.f32.mrb[0].mxu0
  %v1726 = vadd.f32 %v219, %v1725
  %v1727 = vpop.f32.mrb[0].mxu0
  %1728 = vmatprep.mubr.f32.mxu0 0.0
  %1729 = vmatmul.mubr.f32.gmra.mrb[0].mxu0 %v733
  %v1730 = vpop.f32.mrb[0].mxu0
  %v1731 = vadd.f32 %v219, %v1730
  %v1732 = vpop.f32.mrb[0].mxu0
  %1733 = vmatprep.mubr.f32.mxu0 0.0
  %1734 = vmatmul.mubr.f32.gmra.mrb[0].mxu0 %v736
  %v1735 = vpop.f32.mrb[0].mxu0
  %v1736 = vadd.f32 %v219, %v1735
  %v1737 = vpop.f32.mrb[0].mxu0
  %1738 = vmatprep.mubr.f32.mxu0 0.0
  %1739 = vmatmul.mubr.f32.gmra.mrb[0].mxu0 %v739
  %v1740 = vpop.f32.mrb[0].mxu0
  %v1741 = vadd.f32 %v219, %v1740
  %v1742 = vpop.f32.mrb[0].mxu0
  %1743 = vmatprep.mubr.f32.mxu0 0.0
  %1744 = vmatmul.mubr.f32.gmra.mrb[0].mxu0 %v742
  %v1745 = vpop.f32.mrb[0].mxu0
  %v1746 = vadd.f32 %v219, %v1745
  %v1747 = vpop.f32.mrb[0].mxu0
  %1748 = vmatprep.mubr.f32.mxu0 0.0
  %1749 = vmatmul.mubr.f32.gmra.mrb[0].mxu0 %v745
  %v1750 = vpop.f32.mrb[0].mxu0
  %v1751 = vadd.f32 %v219, %v1750
  %v1752 = vpop.f32.mrb[0].mxu0
  %1753 = vmatprep.mubr.f32.mxu0 0.0
  %1754 = vmatmul.mubr.f32.gmra.mrb[0].mxu0 %v748
  %v1755 = vpop.f32.mrb[0].mxu0
  %v1756 = vadd.f32 %v219, %v1755
  %v1757 = vpop.f32.mrb[0].mxu0
  %1758 = vmatprep.mubr.f32.mxu0 0.0
  %1759 = vmatmul.mubr.f32.gmra.mrb[0].mxu0 %v751
  %v1760 = vpop.f32.mrb[0].mxu0
  %v1761 = vadd.f32 %v219, %v1760
  %v1762 = vpop.f32.mrb[0].mxu0
  %1763 = vmatprep.mubr.f32.mxu0 0.0
  %1764 = vmatmul.mubr.f32.gmra.mrb[0].mxu0 %v754
  %v1765 = vpop.f32.mrb[0].mxu0
  %v1766 = vadd.f32 %v219, %v1765
  %v1767 = vpop.f32.mrb[0].mxu0
  %1768 = vmatprep.mubr.f32.mxu0 0.0
  %1769 = vmatmul.mubr.f32.gmra.mrb[0].mxu0 %v757
  %v1770 = vpop.f32.mrb[0].mxu0
  %v1771 = vadd.f32 %v219, %v1770
  %v1772 = vpop.f32.mrb[0].mxu0
  %1773 = vmatprep.mubr.f32.mxu0 0.0
  %1774 = vmatmul.mubr.f32.gmra.mrb[0].mxu0 %v760
  %v1775 = vpop.f32.mrb[0].mxu0
  %v1776 = vadd.f32 %v219, %v1775
  %v1777 = vpop.f32.mrb[0].mxu0
  %1778 = vmatprep.mubr.f32.mxu0 0.0
  %1779 = vmatmul.mubr.f32.gmra.mrb[0].mxu0 %v763
  %v1780 = vpop.f32.mrb[0].mxu0
  %v1781 = vadd.f32 %v219, %v1780
  %v1782 = vpop.f32.mrb[0].mxu0
  %1783 = vmatprep.mubr.f32.mxu0 0.0
  %1784 = vmatmul.mubr.f32.gmra.mrb[0].mxu0 %v766
  %v1785 = vpop.f32.mrb[0].mxu0
  %v1786 = vadd.f32 %v219, %v1785
  %v1787 = vpop.f32.mrb[0].mxu0
  %1788 = vmatprep.mubr.f32.mxu0 0.0
  %1789 = vmatmul.mubr.f32.gmra.mrb[0].mxu0 %v769
  %v1790 = vpop.f32.mrb[0].mxu0
  %v1791 = vadd.f32 %v219, %v1790
  %v1792 = vpop.f32.mrb[0].mxu0
  %1793 = vmatprep.mubr.f32.mxu0 0.0
  %1794 = vmatmul.mubr.f32.gmra.mrb[0].mxu0 %v772
  %v1795 = vpop.f32.mrb[0].mxu0
  %v1796 = vadd.f32 %v219, %v1795
  %v1797 = vpop.f32.mrb[0].mxu0
  %1798 = vmatprep.mubr.f32.mxu0 0.0
  %1799 = vmatmul.mubr.f32.gmra.mrb[0].mxu0 %v775
  %v1800 = vpop.f32.mrb[0].mxu0
  %v1801 = vadd.f32 %v219, %v1800
  %v1802 = vpop.f32.mrb[0].mxu0
  %1803 = vmatprep.mubr.f32.mxu0 0.0
  %1804 = vmatmul.mubr.f32.gmra.mrb[0].mxu0 %v778
  %v1805 = vpop.f32.mrb[0].mxu0
  %v1806 = vadd.f32 %v219, %v1805
  %v1807 = vpop.f32.mrb[0].mxu0
  %1808 = vmatprep.mubr.f32.mxu0 0.0
  %1809 = vmatmul.mubr.f32.gmra.mrb[0].mxu0 %v781
  %v1810 = vpop.f32.mrb[0].mxu0
  %v1811 = vadd.f32 %v219, %v1810
  %v1812 = vpop.f32.mrb[0].mxu0
  %1813 = vmatprep.mubr.f32.mxu0 0.0
  %1814 = vmatmul.mubr.f32.gmra.mrb[0].mxu0 %v784
  %v1815 = vpop.f32.mrb[0].mxu0
  %v1816 = vadd.f32 %v219, %v1815
  %v1817 = vpop.f32.mrb[0].mxu0
  %1818 = vmatprep.mubr.f32.mxu0 0.0
  %1819 = vmatmul.mubr.f32.gmra.mrb[0].mxu0 %v787
  %v1820 = vpop.f32.mrb[0].mxu0
  %v1821 = vadd.f32 %v219, %v1820
  %v1822 = vpop.f32.mrb[0].mxu0
  %1823 = vmatprep.mubr.f32.mxu0 0.0
  %1824 = vmatmul.mubr.f32.gmra.mrb[0].mxu0 %v790
  %v1825 = vpop.f32.mrb[0].mxu0
  %v1826 = vadd.f32 %v219, %v1825
  %v1827 = vpop.f32.mrb[0].mxu0
  %1828 = vmatprep.mubr.f32.mxu0 0.0
  %1829 = vmatmul.mubr.f32.gmra.mrb[0].mxu0 %v793
  %v1830 = vpop.f32.mrb[0].mxu0
  %v1831 = vadd.f32 %v219, %v1830
  %v1832 = vpop.f32.mrb[0].mxu0
  %1833 = vmatprep.mubr.f32.mxu0 0.0
  %1834 = vmatmul.mubr.f32.gmra.mrb[0].mxu0 %v796
  %v1835 = vpop.f32.mrb[0].mxu0
  %v1836 = vadd.f32 %v219, %v1835
  %v1837 = vpop.f32.mrb[0].mxu0
  %1838 = vmatprep.mubr.f32.mxu0 0.0
  %1839 = vmatmul.mubr.f32.gmra.mrb[0].mxu0 %v799
  %v1840 = vpop.f32.mrb[0].mxu0
  %v1841 = vadd.f32 %v219, %v1840
  %v1842 = vpop.f32.mrb[0].mxu0
  %1843 = vmatprep.mubr.f32.mxu0 0.0
  %1844 = vmatmul.mubr.f32.gmra.mrb[0].mxu0 %v802
  %v1845 = vpop.f32.mrb[0].mxu0
  %v1846 = vadd.f32 %v219, %v1845
  %v1847 = vpop.f32.mrb[0].mxu0
  %1848 = vmatprep.mubr.f32.mxu0 0.0
  %1849 = vmatmul.mubr.f32.gmra.mrb[0].mxu0 %v805
  %v1850 = vpop.f32.mrb[0].mxu0
  %v1851 = vadd.f32 %v219, %v1850
  %v1852 = vpop.f32.mrb[0].mxu0
  %1853 = vmatprep.mubr.f32.mxu0 0.0
  %1854 = vmatmul.mubr.f32.gmra.mrb[0].mxu0 %v808
  %v1855 = vpop.f32.mrb[0].mxu0
  %v1856 = vadd.f32 %v219, %v1855
  %v1857 = vpop.f32.mrb[0].mxu0
  %1858 = vdwg.mxu0
  %v1859 = vsub.f32 0.0, %v881
  %v1860 = vsub.f32 0.0, %v886
  %v1861 = vsub.f32 0.0, %v891
  %v1862 = vsub.f32 0.0, %v896
  %v1863 = vsub.f32 0.0, %v901
  %v1864 = vsub.f32 0.0, %v906
  %v1865 = vsub.f32 0.0, %v911
  %v1866 = vsub.f32 0.0, %v916
  %v1867 = vsub.f32 0.0, %v921
  %v1868 = vsub.f32 0.0, %v926
  %v1869 = vsub.f32 0.0, %v931
  %v1870 = vsub.f32 0.0, %v936
  %v1871 = vsub.f32 0.0, %v941
  %v1872 = vsub.f32 0.0, %v946
  %v1873 = vsub.f32 0.0, %v951
  %v1874 = vsub.f32 0.0, %v956
  %v1875 = vsub.f32 0.0, %v961
  %v1876 = vsub.f32 0.0, %v966
  %v1877 = vsub.f32 0.0, %v971
  %v1878 = vsub.f32 0.0, %v976
  %v1879 = vsub.f32 0.0, %v981
  %v1880 = vsub.f32 0.0, %v986
  %v1881 = vsub.f32 0.0, %v991
  %v1882 = vsub.f32 0.0, %v996
  %v1883 = vsub.f32 0.0, %v1001
  %v1884 = vsub.f32 0.0, %v1006
  %v1885 = vsub.f32 0.0, %v1011
  %v1886 = vsub.f32 0.0, %v1016
  %v1887 = vsub.f32 0.0, %v1021
  %v1888 = vsub.f32 0.0, %v1026
  %v1889 = vsub.f32 0.0, %v1031
  %v1890 = vsub.f32 0.0, %v1036
  %v1891 = vsub.f32 0.0, %v1041
  %v1892 = vsub.f32 0.0, %v1046
  %v1893 = vsub.f32 0.0, %v1051
  %v1894 = vsub.f32 0.0, %v1056
  %v1895 = vsub.f32 0.0, %v1061
  %v1896 = vsub.f32 0.0, %v1066
  %v1897 = vsub.f32 0.0, %v1071
  %v1898 = vsub.f32 0.0, %v1076
  %v1899 = vsub.f32 0.0, %v1081
  %v1900 = vsub.f32 0.0, %v1086
  %v1901 = vsub.f32 0.0, %v1091
  %v1902 = vsub.f32 0.0, %v1096
  %v1903 = vsub.f32 0.0, %v1101
  %v1904 = vsub.f32 0.0, %v1106
  %v1905 = vsub.f32 0.0, %v1111
  %v1906 = vsub.f32 0.0, %v1116
  %v1907 = vsub.f32 0.0, %v1121
  %v1908 = vsub.f32 0.0, %v1126
  %v1909 = vsub.f32 0.0, %v1131
  %v1910 = vsub.f32 0.0, %v1136
  %v1911 = vsub.f32 0.0, %v1141
  %v1912 = vsub.f32 0.0, %v1146
  %v1913 = vsub.f32 0.0, %v1151
  %v1914 = vsub.f32 0.0, %v1156
  %v1915 = vsub.f32 0.0, %v1161
  %v1916 = vsub.f32 0.0, %v1166
  %v1917 = vsub.f32 0.0, %v1171
  %v1918 = vsub.f32 0.0, %v1176
  %v1919 = vsub.f32 0.0, %v1181
  %v1920 = vsub.f32 0.0, %v1186
  %v1921 = vsub.f32 0.0, %v1191
  %v1922 = vsub.f32 0.0, %v1196
  %v1923 = vsub.f32 0.0, %v1201
  %v1924 = vsub.f32 0.0, %v1206
  %v1925 = vsub.f32 0.0, %v1211
  %v1926 = vsub.f32 0.0, %v1216
  %v1927 = vsub.f32 0.0, %v1221
  %v1928 = vsub.f32 0.0, %v1226
  %v1929 = vsub.f32 0.0, %v1231
  %v1930 = vsub.f32 0.0, %v1236
  %v1931 = vsub.f32 0.0, %v1241
  %v1932 = vsub.f32 0.0, %v1246
  %v1933 = vsub.f32 0.0, %v1251
  %v1934 = vsub.f32 0.0, %v1256
  %v1935 = vsub.f32 0.0, %v1261
  %v1936 = vsub.f32 0.0, %v1266
  %v1937 = vsub.f32 0.0, %v1271
  %v1938 = vsub.f32 0.0, %v1276
  %v1939 = vsub.f32 0.0, %v1281
  %v1940 = vsub.f32 0.0, %v1286
  %v1941 = vsub.f32 0.0, %v1291
  %v1942 = vsub.f32 0.0, %v1296
  %v1943 = vsub.f32 0.0, %v1301
  %v1944 = vsub.f32 0.0, %v1306
  %v1945 = vsub.f32 0.0, %v1311
  %v1946 = vsub.f32 0.0, %v1316
  %v1947 = vsub.f32 0.0, %v1321
  %v1948 = vsub.f32 0.0, %v1326
  %v1949 = vsub.f32 0.0, %v1331
  %v1950 = vsub.f32 0.0, %v1336
  %v1951 = vsub.f32 0.0, %v1341
  %v1952 = vsub.f32 0.0, %v1346
  %v1953 = vsub.f32 0.0, %v1351
  %v1954 = vsub.f32 0.0, %v1356
  %v1955 = vsub.f32 0.0, %v1361
  %v1956 = vsub.f32 0.0, %v1366
  %v1957 = vsub.f32 0.0, %v1371
  %v1958 = vsub.f32 0.0, %v1376
  %v1959 = vsub.f32 0.0, %v1381
  %v1960 = vsub.f32 0.0, %v1386
  %v1961 = vsub.f32 0.0, %v1391
  %v1962 = vsub.f32 0.0, %v1396
  %v1963 = vsub.f32 0.0, %v1401
  %v1964 = vsub.f32 0.0, %v1406
  %v1965 = vsub.f32 0.0, %v1411
  %v1966 = vsub.f32 0.0, %v1416
  %v1967 = vsub.f32 0.0, %v1421
  %v1968 = vsub.f32 0.0, %v1426
  %v1969 = vsub.f32 0.0, %v1431
  %v1970 = vsub.f32 0.0, %v1436
  %v1971 = vsub.f32 0.0, %v1441
  %v1972 = vsub.f32 0.0, %v1446
  %v1973 = vsub.f32 0.0, %v1451
  %v1974 = vsub.f32 0.0, %v1456
  %v1975 = vsub.f32 0.0, %v1461
  %v1976 = vsub.f32 0.0, %v1466
  %v1977 = vsub.f32 0.0, %v1471
  %v1978 = vsub.f32 0.0, %v1476
  %v1979 = vsub.f32 0.0, %v1481
  %v1980 = vsub.f32 0.0, %v1486
  %v1981 = vsub.f32 0.0, %v1491
  %v1982 = vsub.f32 0.0, %v1496
  %v1983 = vsub.f32 0.0, %v1501
  %v1984 = vsub.f32 0.0, %v1506
  %v1985 = vsub.f32 0.0, %v1511
  %v1986 = vsub.f32 0.0, %v1516
  %v1987 = vsub.f32 0.0, %v1521
  %v1988 = vsub.f32 0.0, %v1526
  %v1989 = vsub.f32 0.0, %v1531
  %v1990 = vsub.f32 0.0, %v1536
  %v1991 = vsub.f32 0.0, %v1541
  %v1992 = vsub.f32 0.0, %v1546
  %v1993 = vsub.f32 0.0, %v1551
  %v1994 = vsub.f32 0.0, %v1556
  %v1995 = vsub.f32 0.0, %v1561
  %v1996 = vsub.f32 0.0, %v1566
  %v1997 = vsub.f32 0.0, %v1571
  %v1998 = vsub.f32 0.0, %v1576
  %v1999 = vsub.f32 0.0, %v1581
  %v2000 = vsub.f32 0.0, %v1586
  %v2001 = vsub.f32 0.0, %v1591
  %v2002 = vsub.f32 0.0, %v1596
  %v2003 = vsub.f32 0.0, %v1601
  %v2004 = vsub.f32 0.0, %v1606
  %v2005 = vsub.f32 0.0, %v1611
  %v2006 = vsub.f32 0.0, %v1616
  %v2007 = vsub.f32 0.0, %v1621
  %v2008 = vsub.f32 0.0, %v1626
  %v2009 = vsub.f32 0.0, %v1631
  %v2010 = vsub.f32 0.0, %v1636
  %v2011 = vsub.f32 0.0, %v1641
  %v2012 = vsub.f32 0.0, %v1646
  %v2013 = vsub.f32 0.0, %v1651
  %v2014 = vsub.f32 0.0, %v1656
  %v2015 = vsub.f32 0.0, %v1661
  %v2016 = vsub.f32 0.0, %v1666
  %v2017 = vsub.f32 0.0, %v1671
  %v2018 = vsub.f32 0.0, %v1676
  %v2019 = vsub.f32 0.0, %v1681
  %v2020 = vsub.f32 0.0, %v1686
  %v2021 = vsub.f32 0.0, %v1691
  %v2022 = vsub.f32 0.0, %v1696
  %v2023 = vsub.f32 0.0, %v1701
  %v2024 = vsub.f32 0.0, %v1706
  %v2025 = vsub.f32 0.0, %v1711
  %v2026 = vsub.f32 0.0, %v1716
  %v2027 = vsub.f32 0.0, %v1721
  %v2028 = vsub.f32 0.0, %v1726
  %v2029 = vsub.f32 0.0, %v1731
  %v2030 = vsub.f32 0.0, %v1736
  %v2031 = vsub.f32 0.0, %v1741
  %v2032 = vsub.f32 0.0, %v1746
  %v2033 = vsub.f32 0.0, %v1751
  %v2034 = vsub.f32 0.0, %v1756
  %v2035 = vsub.f32 0.0, %v1761
  %v2036 = vsub.f32 0.0, %v1766
  %v2037 = vsub.f32 0.0, %v1771
  %v2038 = vsub.f32 0.0, %v1776
  %v2039 = vsub.f32 0.0, %v1781
  %v2040 = vsub.f32 0.0, %v1786
  %v2041 = vsub.f32 0.0, %v1791
  %v2042 = vsub.f32 0.0, %v1796
  %v2043 = vsub.f32 0.0, %v1801
  %v2044 = vsub.f32 0.0, %v1806
  %v2045 = vsub.f32 0.0, %v1811
  %v2046 = vsub.f32 0.0, %v1816
  %v2047 = vsub.f32 0.0, %v1821
  %v2048 = vsub.f32 0.0, %v1826
  %v2049 = vsub.f32 0.0, %v1831
  %v2050 = vsub.f32 0.0, %v1836
  %v2051 = vsub.f32 0.0, %v1841
  %v2052 = vsub.f32 0.0, %v1846
  %v2053 = vsub.f32 0.0, %v1851
  %v2054 = vsub.f32 0.0, %v1856
  %v2055 = vmul.f32 %v1859, 1.442695
  %v2056 = vpow.pop %v2055
  %v2057 = vmul.f32 %v1860, 1.442695
  %v2058 = vpow.pop %v2057
  %v2059 = vmul.f32 %v1861, 1.442695
  %v2060 = vpow.pop %v2059
  %v2061 = vmul.f32 %v1862, 1.442695
  %v2062 = vpow.pop %v2061
  %v2063 = vmul.f32 %v1863, 1.442695
  %v2064 = vpow.pop %v2063
  %v2065 = vmul.f32 %v1864, 1.442695
  %v2066 = vpow.pop %v2065
  %v2067 = vmul.f32 %v1865, 1.442695
  %v2068 = vpow.pop %v2067
  %v2069 = vmul.f32 %v1866, 1.442695
  %v2070 = vpow.pop %v2069
  %v2071 = vmul.f32 %v1867, 1.442695
  %v2072 = vpow.pop %v2071
  %v2073 = vmul.f32 %v1868, 1.442695
  %v2074 = vpow.pop %v2073
  %v2075 = vmul.f32 %v1869, 1.442695
  %v2076 = vpow.pop %v2075
  %v2077 = vmul.f32 %v1870, 1.442695
  %v2078 = vpow.pop %v2077
  %v2079 = vmul.f32 %v1871, 1.442695
  %v2080 = vpow.pop %v2079
  %v2081 = vmul.f32 %v1872, 1.442695
  %v2082 = vpow.pop %v2081
  %v2083 = vmul.f32 %v1873, 1.442695
  %v2084 = vpow.pop %v2083
  %v2085 = vmul.f32 %v1874, 1.442695
  %v2086 = vpow.pop %v2085
  %v2087 = vmul.f32 %v1875, 1.442695
  %v2088 = vpow.pop %v2087
  %v2089 = vmul.f32 %v1876, 1.442695
  %v2090 = vpow.pop %v2089
  %v2091 = vmul.f32 %v1877, 1.442695
  %v2092 = vpow.pop %v2091
  %v2093 = vmul.f32 %v1878, 1.442695
  %v2094 = vpow.pop %v2093
  %v2095 = vmul.f32 %v1879, 1.442695
  %v2096 = vpow.pop %v2095
  %v2097 = vmul.f32 %v1880, 1.442695
  %v2098 = vpow.pop %v2097
  %v2099 = vmul.f32 %v1881, 1.442695
  %v2100 = vpow.pop %v2099
  %v2101 = vmul.f32 %v1882, 1.442695
  %v2102 = vpow.pop %v2101
  %v2103 = vmul.f32 %v1883, 1.442695
  %v2104 = vpow.pop %v2103
  %v2105 = vmul.f32 %v1884, 1.442695
  %v2106 = vpow.pop %v2105
  %v2107 = vmul.f32 %v1885, 1.442695
  %v2108 = vpow.pop %v2107
  %v2109 = vmul.f32 %v1886, 1.442695
  %v2110 = vpow.pop %v2109
  %v2111 = vmul.f32 %v1887, 1.442695
  %v2112 = vpow.pop %v2111
  %v2113 = vmul.f32 %v1888, 1.442695
  %v2114 = vpow.pop %v2113
  %v2115 = vmul.f32 %v1889, 1.442695
  %v2116 = vpow.pop %v2115
  %v2117 = vmul.f32 %v1890, 1.442695
  %v2118 = vpow.pop %v2117
  %v2119 = vmul.f32 %v1891, 1.442695
  %v2120 = vpow.pop %v2119
  %v2121 = vmul.f32 %v1892, 1.442695
  %v2122 = vpow.pop %v2121
  %v2123 = vmul.f32 %v1893, 1.442695
  %v2124 = vpow.pop %v2123
  %v2125 = vmul.f32 %v1894, 1.442695
  %v2126 = vpow.pop %v2125
  %v2127 = vmul.f32 %v1895, 1.442695
  %v2128 = vpow.pop %v2127
  %v2129 = vmul.f32 %v1896, 1.442695
  %v2130 = vpow.pop %v2129
  %v2131 = vmul.f32 %v1897, 1.442695
  %v2132 = vpow.pop %v2131
  %v2133 = vmul.f32 %v1898, 1.442695
  %v2134 = vpow.pop %v2133
  %v2135 = vmul.f32 %v1899, 1.442695
  %v2136 = vpow.pop %v2135
  %v2137 = vmul.f32 %v1900, 1.442695
  %v2138 = vpow.pop %v2137
  %v2139 = vmul.f32 %v1901, 1.442695
  %v2140 = vpow.pop %v2139
  %v2141 = vmul.f32 %v1902, 1.442695
  %v2142 = vpow.pop %v2141
  %v2143 = vmul.f32 %v1903, 1.442695
  %v2144 = vpow.pop %v2143
  %v2145 = vmul.f32 %v1904, 1.442695
  %v2146 = vpow.pop %v2145
  %v2147 = vmul.f32 %v1905, 1.442695
  %v2148 = vpow.pop %v2147
  %v2149 = vmul.f32 %v1906, 1.442695
  %v2150 = vpow.pop %v2149
  %v2151 = vmul.f32 %v1907, 1.442695
  %v2152 = vpow.pop %v2151
  %v2153 = vmul.f32 %v1908, 1.442695
  %v2154 = vpow.pop %v2153
  %v2155 = vmul.f32 %v1909, 1.442695
  %v2156 = vpow.pop %v2155
  %v2157 = vmul.f32 %v1910, 1.442695
  %v2158 = vpow.pop %v2157
  %v2159 = vmul.f32 %v1911, 1.442695
  %v2160 = vpow.pop %v2159
  %v2161 = vmul.f32 %v1912, 1.442695
  %v2162 = vpow.pop %v2161
  %v2163 = vmul.f32 %v1913, 1.442695
  %v2164 = vpow.pop %v2163
  %v2165 = vmul.f32 %v1914, 1.442695
  %v2166 = vpow.pop %v2165
  %v2167 = vmul.f32 %v1915, 1.442695
  %v2168 = vpow.pop %v2167
  %v2169 = vmul.f32 %v1916, 1.442695
  %v2170 = vpow.pop %v2169
  %v2171 = vmul.f32 %v1917, 1.442695
  %v2172 = vpow.pop %v2171
  %v2173 = vmul.f32 %v1918, 1.442695
  %v2174 = vpow.pop %v2173
  %v2175 = vmul.f32 %v1919, 1.442695
  %v2176 = vpow.pop %v2175
  %v2177 = vmul.f32 %v1920, 1.442695
  %v2178 = vpow.pop %v2177
  %v2179 = vmul.f32 %v1921, 1.442695
  %v2180 = vpow.pop %v2179
  %v2181 = vmul.f32 %v1922, 1.442695
  %v2182 = vpow.pop %v2181
  %v2183 = vmul.f32 %v1923, 1.442695
  %v2184 = vpow.pop %v2183
  %v2185 = vmul.f32 %v1924, 1.442695
  %v2186 = vpow.pop %v2185
  %v2187 = vmul.f32 %v1925, 1.442695
  %v2188 = vpow.pop %v2187
  %v2189 = vmul.f32 %v1926, 1.442695
  %v2190 = vpow.pop %v2189
  %v2191 = vmul.f32 %v1927, 1.442695
  %v2192 = vpow.pop %v2191
  %v2193 = vmul.f32 %v1928, 1.442695
  %v2194 = vpow.pop %v2193
  %v2195 = vmul.f32 %v1929, 1.442695
  %v2196 = vpow.pop %v2195
  %v2197 = vmul.f32 %v1930, 1.442695
  %v2198 = vpow.pop %v2197
  %v2199 = vmul.f32 %v1931, 1.442695
  %v2200 = vpow.pop %v2199
  %v2201 = vmul.f32 %v1932, 1.442695
  %v2202 = vpow.pop %v2201
  %v2203 = vmul.f32 %v1933, 1.442695
  %v2204 = vpow.pop %v2203
  %v2205 = vmul.f32 %v1934, 1.442695
  %v2206 = vpow.pop %v2205
  %v2207 = vmul.f32 %v1935, 1.442695
  %v2208 = vpow.pop %v2207
  %v2209 = vmul.f32 %v1936, 1.442695
  %v2210 = vpow.pop %v2209
  %v2211 = vmul.f32 %v1937, 1.442695
  %v2212 = vpow.pop %v2211
  %v2213 = vmul.f32 %v1938, 1.442695
  %v2214 = vpow.pop %v2213
  %v2215 = vmul.f32 %v1939, 1.442695
  %v2216 = vpow.pop %v2215
  %v2217 = vmul.f32 %v1940, 1.442695
  %v2218 = vpow.pop %v2217
  %v2219 = vmul.f32 %v1941, 1.442695
  %v2220 = vpow.pop %v2219
  %v2221 = vmul.f32 %v1942, 1.442695
  %v2222 = vpow.pop %v2221
  %v2223 = vmul.f32 %v1943, 1.442695
  %v2224 = vpow.pop %v2223
  %v2225 = vmul.f32 %v1944, 1.442695
  %v2226 = vpow.pop %v2225
  %v2227 = vmul.f32 %v1945, 1.442695
  %v2228 = vpow.pop %v2227
  %v2229 = vmul.f32 %v1946, 1.442695
  %v2230 = vpow.pop %v2229
  %v2231 = vmul.f32 %v1947, 1.442695
  %v2232 = vpow.pop %v2231
  %v2233 = vmul.f32 %v1948, 1.442695
  %v2234 = vpow.pop %v2233
  %v2235 = vmul.f32 %v1949, 1.442695
  %v2236 = vpow.pop %v2235
  %v2237 = vmul.f32 %v1950, 1.442695
  %v2238 = vpow.pop %v2237
  %v2239 = vmul.f32 %v1951, 1.442695
  %v2240 = vpow.pop %v2239
  %v2241 = vmul.f32 %v1952, 1.442695
  %v2242 = vpow.pop %v2241
  %v2243 = vmul.f32 %v1953, 1.442695
  %v2244 = vpow.pop %v2243
  %v2245 = vmul.f32 %v1954, 1.442695
  %v2246 = vpow.pop %v2245
  %v2247 = vmul.f32 %v1955, 1.442695
  %v2248 = vpow.pop %v2247
  %v2249 = vmul.f32 %v1956, 1.442695
  %v2250 = vpow.pop %v2249
  %v2251 = vmul.f32 %v1957, 1.442695
  %v2252 = vpow.pop %v2251
  %v2253 = vmul.f32 %v1958, 1.442695
  %v2254 = vpow.pop %v2253
  %v2255 = vmul.f32 %v1959, 1.442695
  %v2256 = vpow.pop %v2255
  %v2257 = vmul.f32 %v1960, 1.442695
  %v2258 = vpow.pop %v2257
  %v2259 = vmul.f32 %v1961, 1.442695
  %v2260 = vpow.pop %v2259
  %v2261 = vmul.f32 %v1962, 1.442695
  %v2262 = vpow.pop %v2261
  %v2263 = vmul.f32 %v1963, 1.442695
  %v2264 = vpow.pop %v2263
  %v2265 = vmul.f32 %v1964, 1.442695
  %v2266 = vpow.pop %v2265
  %v2267 = vmul.f32 %v1965, 1.442695
  %v2268 = vpow.pop %v2267
  %v2269 = vmul.f32 %v1966, 1.442695
  %v2270 = vpow.pop %v2269
  %v2271 = vmul.f32 %v1967, 1.442695
  %v2272 = vpow.pop %v2271
  %v2273 = vmul.f32 %v1968, 1.442695
  %v2274 = vpow.pop %v2273
  %v2275 = vmul.f32 %v1969, 1.442695
  %v2276 = vpow.pop %v2275
  %v2277 = vmul.f32 %v1970, 1.442695
  %v2278 = vpow.pop %v2277
  %v2279 = vmul.f32 %v1971, 1.442695
  %v2280 = vpow.pop %v2279
  %v2281 = vmul.f32 %v1972, 1.442695
  %v2282 = vpow.pop %v2281
  %v2283 = vmul.f32 %v1973, 1.442695
  %v2284 = vpow.pop %v2283
  %v2285 = vmul.f32 %v1974, 1.442695
  %v2286 = vpow.pop %v2285
  %v2287 = vmul.f32 %v1975, 1.442695
  %v2288 = vpow.pop %v2287
  %v2289 = vmul.f32 %v1976, 1.442695
  %v2290 = vpow.pop %v2289
  %v2291 = vmul.f32 %v1977, 1.442695
  %v2292 = vpow.pop %v2291
  %v2293 = vmul.f32 %v1978, 1.442695
  %v2294 = vpow.pop %v2293
  %v2295 = vmul.f32 %v1979, 1.442695
  %v2296 = vpow.pop %v2295
  %v2297 = vmul.f32 %v1980, 1.442695
  %v2298 = vpow.pop %v2297
  %v2299 = vmul.f32 %v1981, 1.442695
  %v2300 = vpow.pop %v2299
  %v2301 = vmul.f32 %v1982, 1.442695
  %v2302 = vpow.pop %v2301
  %v2303 = vmul.f32 %v1983, 1.442695
  %v2304 = vpow.pop %v2303
  %v2305 = vmul.f32 %v1984, 1.442695
  %v2306 = vpow.pop %v2305
  %v2307 = vmul.f32 %v1985, 1.442695
  %v2308 = vpow.pop %v2307
  %v2309 = vmul.f32 %v1986, 1.442695
  %v2310 = vpow.pop %v2309
  %v2311 = vmul.f32 %v1987, 1.442695
  %v2312 = vpow.pop %v2311
  %v2313 = vmul.f32 %v1988, 1.442695
  %v2314 = vpow.pop %v2313
  %v2315 = vmul.f32 %v1989, 1.442695
  %v2316 = vpow.pop %v2315
  %v2317 = vmul.f32 %v1990, 1.442695
  %v2318 = vpow.pop %v2317
  %v2319 = vmul.f32 %v1991, 1.442695
  %v2320 = vpow.pop %v2319
  %v2321 = vmul.f32 %v1992, 1.442695
  %v2322 = vpow.pop %v2321
  %v2323 = vmul.f32 %v1993, 1.442695
  %v2324 = vpow.pop %v2323
  %v2325 = vmul.f32 %v1994, 1.442695
  %v2326 = vpow.pop %v2325
  %v2327 = vmul.f32 %v1995, 1.442695
  %v2328 = vpow.pop %v2327
  %v2329 = vmul.f32 %v1996, 1.442695
  %v2330 = vpow.pop %v2329
  %v2331 = vmul.f32 %v1997, 1.442695
  %v2332 = vpow.pop %v2331
  %v2333 = vmul.f32 %v1998, 1.442695
  %v2334 = vpow.pop %v2333
  %v2335 = vmul.f32 %v1999, 1.442695
  %v2336 = vpow.pop %v2335
  %v2337 = vmul.f32 %v2000, 1.442695
  %v2338 = vpow.pop %v2337
  %v2339 = vmul.f32 %v2001, 1.442695
  %v2340 = vpow.pop %v2339
  %v2341 = vmul.f32 %v2002, 1.442695
  %v2342 = vpow.pop %v2341
  %v2343 = vmul.f32 %v2003, 1.442695
  %v2344 = vpow.pop %v2343
  %v2345 = vmul.f32 %v2004, 1.442695
  %v2346 = vpow.pop %v2345
  %v2347 = vmul.f32 %v2005, 1.442695
  %v2348 = vpow.pop %v2347
  %v2349 = vmul.f32 %v2006, 1.442695
  %v2350 = vpow.pop %v2349
  %v2351 = vmul.f32 %v2007, 1.442695
  %v2352 = vpow.pop %v2351
  %v2353 = vmul.f32 %v2008, 1.442695
  %v2354 = vpow.pop %v2353
  %v2355 = vmul.f32 %v2009, 1.442695
  %v2356 = vpow.pop %v2355
  %v2357 = vmul.f32 %v2010, 1.442695
  %v2358 = vpow.pop %v2357
  %v2359 = vmul.f32 %v2011, 1.442695
  %v2360 = vpow.pop %v2359
  %v2361 = vmul.f32 %v2012, 1.442695
  %v2362 = vpow.pop %v2361
  %v2363 = vmul.f32 %v2013, 1.442695
  %v2364 = vpow.pop %v2363
  %v2365 = vmul.f32 %v2014, 1.442695
  %v2366 = vpow.pop %v2365
  %v2367 = vmul.f32 %v2015, 1.442695
  %v2368 = vpow.pop %v2367
  %v2369 = vmul.f32 %v2016, 1.442695
  %v2370 = vpow.pop %v2369
  %v2371 = vmul.f32 %v2017, 1.442695
  %v2372 = vpow.pop %v2371
  %v2373 = vmul.f32 %v2018, 1.442695
  %v2374 = vpow.pop %v2373
  %v2375 = vmul.f32 %v2019, 1.442695
  %v2376 = vpow.pop %v2375
  %v2377 = vmul.f32 %v2020, 1.442695
  %v2378 = vpow.pop %v2377
  %v2379 = vmul.f32 %v2021, 1.442695
  %v2380 = vpow.pop %v2379
  %v2381 = vmul.f32 %v2022, 1.442695
  %v2382 = vpow.pop %v2381
  %v2383 = vmul.f32 %v2023, 1.442695
  %v2384 = vpow.pop %v2383
  %v2385 = vmul.f32 %v2024, 1.442695
  %v2386 = vpow.pop %v2385
  %v2387 = vmul.f32 %v2025, 1.442695
  %v2388 = vpow.pop %v2387
  %v2389 = vmul.f32 %v2026, 1.442695
  %v2390 = vpow.pop %v2389
  %v2391 = vmul.f32 %v2027, 1.442695
  %v2392 = vpow.pop %v2391
  %v2393 = vmul.f32 %v2028, 1.442695
  %v2394 = vpow.pop %v2393
  %v2395 = vmul.f32 %v2029, 1.442695
  %v2396 = vpow.pop %v2395
  %v2397 = vmul.f32 %v2030, 1.442695
  %v2398 = vpow.pop %v2397
  %v2399 = vmul.f32 %v2031, 1.442695
  %v2400 = vpow.pop %v2399
  %v2401 = vmul.f32 %v2032, 1.442695
  %v2402 = vpow.pop %v2401
  %v2403 = vmul.f32 %v2033, 1.442695
  %v2404 = vpow.pop %v2403
  %v2405 = vmul.f32 %v2034, 1.442695
  %v2406 = vpow.pop %v2405
  %v2407 = vmul.f32 %v2035, 1.442695
  %v2408 = vpow.pop %v2407
  %v2409 = vmul.f32 %v2036, 1.442695
  %v2410 = vpow.pop %v2409
  %v2411 = vmul.f32 %v2037, 1.442695
  %v2412 = vpow.pop %v2411
  %v2413 = vmul.f32 %v2038, 1.442695
  %v2414 = vpow.pop %v2413
  %v2415 = vmul.f32 %v2039, 1.442695
  %v2416 = vpow.pop %v2415
  %v2417 = vmul.f32 %v2040, 1.442695
  %v2418 = vpow.pop %v2417
  %v2419 = vmul.f32 %v2041, 1.442695
  %v2420 = vpow.pop %v2419
  %v2421 = vmul.f32 %v2042, 1.442695
  %v2422 = vpow.pop %v2421
  %v2423 = vmul.f32 %v2043, 1.442695
  %v2424 = vpow.pop %v2423
  %v2425 = vmul.f32 %v2044, 1.442695
  %v2426 = vpow.pop %v2425
  %v2427 = vmul.f32 %v2045, 1.442695
  %v2428 = vpow.pop %v2427
  %v2429 = vmul.f32 %v2046, 1.442695
  %v2430 = vpow.pop %v2429
  %v2431 = vmul.f32 %v2047, 1.442695
  %v2432 = vpow.pop %v2431
  %v2433 = vmul.f32 %v2048, 1.442695
  %v2434 = vpow.pop %v2433
  %v2435 = vmul.f32 %v2049, 1.442695
  %v2436 = vpow.pop %v2435
  %v2437 = vmul.f32 %v2050, 1.442695
  %v2438 = vpow.pop %v2437
  %v2439 = vmul.f32 %v2051, 1.442695
  %v2440 = vpow.pop %v2439
  %v2441 = vmul.f32 %v2052, 1.442695
  %v2442 = vpow.pop %v2441
  %v2443 = vmul.f32 %v2053, 1.442695
  %v2444 = vpow.pop %v2443
  %v2445 = vmul.f32 %v2054, 1.442695
  %v2446 = vpow.pop %v2445
  %v2447 = vadd.f32 %v2056, 1.0
  %v2448 = vadd.f32 %v2058, 1.0
  %v2449 = vadd.f32 %v2060, 1.0
  %v2450 = vadd.f32 %v2062, 1.0
  %v2451 = vadd.f32 %v2064, 1.0
  %v2452 = vadd.f32 %v2066, 1.0
  %v2453 = vadd.f32 %v2068, 1.0
  %v2454 = vadd.f32 %v2070, 1.0
  %v2455 = vadd.f32 %v2072, 1.0
  %v2456 = vadd.f32 %v2074, 1.0
  %v2457 = vadd.f32 %v2076, 1.0
  %v2458 = vadd.f32 %v2078, 1.0
  %v2459 = vadd.f32 %v2080, 1.0
  %v2460 = vadd.f32 %v2082, 1.0
  %v2461 = vadd.f32 %v2084, 1.0
  %v2462 = vadd.f32 %v2086, 1.0
  %v2463 = vadd.f32 %v2088, 1.0
  %v2464 = vadd.f32 %v2090, 1.0
  %v2465 = vadd.f32 %v2092, 1.0
  %v2466 = vadd.f32 %v2094, 1.0
  %v2467 = vadd.f32 %v2096, 1.0
  %v2468 = vadd.f32 %v2098, 1.0
  %v2469 = vadd.f32 %v2100, 1.0
  %v2470 = vadd.f32 %v2102, 1.0
  %v2471 = vadd.f32 %v2104, 1.0
  %v2472 = vadd.f32 %v2106, 1.0
  %v2473 = vadd.f32 %v2108, 1.0
  %v2474 = vadd.f32 %v2110, 1.0
  %v2475 = vadd.f32 %v2112, 1.0
  %v2476 = vadd.f32 %v2114, 1.0
  %v2477 = vadd.f32 %v2116, 1.0
  %v2478 = vadd.f32 %v2118, 1.0
  %v2479 = vadd.f32 %v2120, 1.0
  %v2480 = vadd.f32 %v2122, 1.0
  %v2481 = vadd.f32 %v2124, 1.0
  %v2482 = vadd.f32 %v2126, 1.0
  %v2483 = vadd.f32 %v2128, 1.0
  %v2484 = vadd.f32 %v2130, 1.0
  %v2485 = vadd.f32 %v2132, 1.0
  %v2486 = vadd.f32 %v2134, 1.0
  %v2487 = vadd.f32 %v2136, 1.0
  %v2488 = vadd.f32 %v2138, 1.0
  %v2489 = vadd.f32 %v2140, 1.0
  %v2490 = vadd.f32 %v2142, 1.0
  %v2491 = vadd.f32 %v2144, 1.0
  %v2492 = vadd.f32 %v2146, 1.0
  %v2493 = vadd.f32 %v2148, 1.0
  %v2494 = vadd.f32 %v2150, 1.0
  %v2495 = vadd.f32 %v2152, 1.0
  %v2496 = vadd.f32 %v2154, 1.0
  %v2497 = vadd.f32 %v2156, 1.0
  %v2498 = vadd.f32 %v2158, 1.0
  %v2499 = vadd.f32 %v2160, 1.0
  %v2500 = vadd.f32 %v2162, 1.0
  %v2501 = vadd.f32 %v2164, 1.0
  %v2502 = vadd.f32 %v2166, 1.0
  %v2503 = vadd.f32 %v2168, 1.0
  %v2504 = vadd.f32 %v2170, 1.0
  %v2505 = vadd.f32 %v2172, 1.0
  %v2506 = vadd.f32 %v2174, 1.0
  %v2507 = vadd.f32 %v2176, 1.0
  %v2508 = vadd.f32 %v2178, 1.0
  %v2509 = vadd.f32 %v2180, 1.0
  %v2510 = vadd.f32 %v2182, 1.0
  %v2511 = vadd.f32 %v2184, 1.0
  %v2512 = vadd.f32 %v2186, 1.0
  %v2513 = vadd.f32 %v2188, 1.0
  %v2514 = vadd.f32 %v2190, 1.0
  %v2515 = vadd.f32 %v2192, 1.0
  %v2516 = vadd.f32 %v2194, 1.0
  %v2517 = vadd.f32 %v2196, 1.0
  %v2518 = vadd.f32 %v2198, 1.0
  %v2519 = vadd.f32 %v2200, 1.0
  %v2520 = vadd.f32 %v2202, 1.0
  %v2521 = vadd.f32 %v2204, 1.0
  %v2522 = vadd.f32 %v2206, 1.0
  %v2523 = vadd.f32 %v2208, 1.0
  %v2524 = vadd.f32 %v2210, 1.0
  %v2525 = vadd.f32 %v2212, 1.0
  %v2526 = vadd.f32 %v2214, 1.0
  %v2527 = vadd.f32 %v2216, 1.0
  %v2528 = vadd.f32 %v2218, 1.0
  %v2529 = vadd.f32 %v2220, 1.0
  %v2530 = vadd.f32 %v2222, 1.0
  %v2531 = vadd.f32 %v2224, 1.0
  %v2532 = vadd.f32 %v2226, 1.0
  %v2533 = vadd.f32 %v2228, 1.0
  %v2534 = vadd.f32 %v2230, 1.0
  %v2535 = vadd.f32 %v2232, 1.0
  %v2536 = vadd.f32 %v2234, 1.0
  %v2537 = vadd.f32 %v2236, 1.0
  %v2538 = vadd.f32 %v2238, 1.0
  %v2539 = vadd.f32 %v2240, 1.0
  %v2540 = vadd.f32 %v2242, 1.0
  %v2541 = vadd.f32 %v2244, 1.0
  %v2542 = vadd.f32 %v2246, 1.0
  %v2543 = vadd.f32 %v2248, 1.0
  %v2544 = vadd.f32 %v2250, 1.0
  %v2545 = vadd.f32 %v2252, 1.0
  %v2546 = vadd.f32 %v2254, 1.0
  %v2547 = vadd.f32 %v2256, 1.0
  %v2548 = vadd.f32 %v2258, 1.0
  %v2549 = vadd.f32 %v2260, 1.0
  %v2550 = vadd.f32 %v2262, 1.0
  %v2551 = vadd.f32 %v2264, 1.0
  %v2552 = vadd.f32 %v2266, 1.0
  %v2553 = vadd.f32 %v2268, 1.0
  %v2554 = vadd.f32 %v2270, 1.0
  %v2555 = vadd.f32 %v2272, 1.0
  %v2556 = vadd.f32 %v2274, 1.0
  %v2557 = vadd.f32 %v2276, 1.0
  %v2558 = vadd.f32 %v2278, 1.0
  %v2559 = vadd.f32 %v2280, 1.0
  %v2560 = vadd.f32 %v2282, 1.0
  %v2561 = vadd.f32 %v2284, 1.0
  %v2562 = vadd.f32 %v2286, 1.0
  %v2563 = vadd.f32 %v2288, 1.0
  %v2564 = vadd.f32 %v2290, 1.0
  %v2565 = vadd.f32 %v2292, 1.0
  %v2566 = vadd.f32 %v2294, 1.0
  %v2567 = vadd.f32 %v2296, 1.0
  %v2568 = vadd.f32 %v2298, 1.0
  %v2569 = vadd.f32 %v2300, 1.0
  %v2570 = vadd.f32 %v2302, 1.0
  %v2571 = vadd.f32 %v2304, 1.0
  %v2572 = vadd.f32 %v2306, 1.0
  %v2573 = vadd.f32 %v2308, 1.0
  %v2574 = vadd.f32 %v2310, 1.0
  %v2575 = vadd.f32 %v2312, 1.0
  %v2576 = vadd.f32 %v2314, 1.0
  %v2577 = vadd.f32 %v2316, 1.0
  %v2578 = vadd.f32 %v2318, 1.0
  %v2579 = vadd.f32 %v2320, 1.0
  %v2580 = vadd.f32 %v2322, 1.0
  %v2581 = vadd.f32 %v2324, 1.0
  %v2582 = vadd.f32 %v2326, 1.0
  %v2583 = vadd.f32 %v2328, 1.0
  %v2584 = vadd.f32 %v2330, 1.0
  %v2585 = vadd.f32 %v2332, 1.0
  %v2586 = vadd.f32 %v2334, 1.0
  %v2587 = vadd.f32 %v2336, 1.0
  %v2588 = vadd.f32 %v2338, 1.0
  %v2589 = vadd.f32 %v2340, 1.0
  %v2590 = vadd.f32 %v2342, 1.0
  %v2591 = vadd.f32 %v2344, 1.0
  %v2592 = vadd.f32 %v2346, 1.0
  %v2593 = vadd.f32 %v2348, 1.0
  %v2594 = vadd.f32 %v2350, 1.0
  %v2595 = vadd.f32 %v2352, 1.0
  %v2596 = vadd.f32 %v2354, 1.0
  %v2597 = vadd.f32 %v2356, 1.0
  %v2598 = vadd.f32 %v2358, 1.0
  %v2599 = vadd.f32 %v2360, 1.0
  %v2600 = vadd.f32 %v2362, 1.0
  %v2601 = vadd.f32 %v2364, 1.0
  %v2602 = vadd.f32 %v2366, 1.0
  %v2603 = vadd.f32 %v2368, 1.0
  %v2604 = vadd.f32 %v2370, 1.0
  %v2605 = vadd.f32 %v2372, 1.0
  %v2606 = vadd.f32 %v2374, 1.0
  %v2607 = vadd.f32 %v2376, 1.0
  %v2608 = vadd.f32 %v2378, 1.0
  %v2609 = vadd.f32 %v2380, 1.0
  %v2610 = vadd.f32 %v2382, 1.0
  %v2611 = vadd.f32 %v2384, 1.0
  %v2612 = vadd.f32 %v2386, 1.0
  %v2613 = vadd.f32 %v2388, 1.0
  %v2614 = vadd.f32 %v2390, 1.0
  %v2615 = vadd.f32 %v2392, 1.0
  %v2616 = vadd.f32 %v2394, 1.0
  %v2617 = vadd.f32 %v2396, 1.0
  %v2618 = vadd.f32 %v2398, 1.0
  %v2619 = vadd.f32 %v2400, 1.0
  %v2620 = vadd.f32 %v2402, 1.0
  %v2621 = vadd.f32 %v2404, 1.0
  %v2622 = vadd.f32 %v2406, 1.0
  %v2623 = vadd.f32 %v2408, 1.0
  %v2624 = vadd.f32 %v2410, 1.0
  %v2625 = vadd.f32 %v2412, 1.0
  %v2626 = vadd.f32 %v2414, 1.0
  %v2627 = vadd.f32 %v2416, 1.0
  %v2628 = vadd.f32 %v2418, 1.0
  %v2629 = vadd.f32 %v2420, 1.0
  %v2630 = vadd.f32 %v2422, 1.0
  %v2631 = vadd.f32 %v2424, 1.0
  %v2632 = vadd.f32 %v2426, 1.0
  %v2633 = vadd.f32 %v2428, 1.0
  %v2634 = vadd.f32 %v2430, 1.0
  %v2635 = vadd.f32 %v2432, 1.0
  %v2636 = vadd.f32 %v2434, 1.0
  %v2637 = vadd.f32 %v2436, 1.0
  %v2638 = vadd.f32 %v2438, 1.0
  %v2639 = vadd.f32 %v2440, 1.0
  %v2640 = vadd.f32 %v2442, 1.0
  %v2641 = vadd.f32 %v2444, 1.0
  %v2642 = vadd.f32 %v2446, 1.0
  %v2643 = vrcp.pop %v2447
  %v2644 = vmul.f32 1.0, %v2643
  %v2645 = vrcp.pop %v2448
  %v2646 = vmul.f32 1.0, %v2645
  %v2647 = vrcp.pop %v2449
  %v2648 = vmul.f32 1.0, %v2647
  %v2649 = vrcp.pop %v2450
  %v2650 = vmul.f32 1.0, %v2649
  %v2651 = vrcp.pop %v2451
  %v2652 = vmul.f32 1.0, %v2651
  %v2653 = vrcp.pop %v2452
  %v2654 = vmul.f32 1.0, %v2653
  %v2655 = vrcp.pop %v2453
  %v2656 = vmul.f32 1.0, %v2655
  %v2657 = vrcp.pop %v2454
  %v2658 = vmul.f32 1.0, %v2657
  %v2659 = vrcp.pop %v2455
  %v2660 = vmul.f32 1.0, %v2659
  %v2661 = vrcp.pop %v2456
  %v2662 = vmul.f32 1.0, %v2661
  %v2663 = vrcp.pop %v2457
  %v2664 = vmul.f32 1.0, %v2663
  %v2665 = vrcp.pop %v2458
  %v2666 = vmul.f32 1.0, %v2665
  %v2667 = vrcp.pop %v2459
  %v2668 = vmul.f32 1.0, %v2667
  %v2669 = vrcp.pop %v2460
  %v2670 = vmul.f32 1.0, %v2669
  %v2671 = vrcp.pop %v2461
  %v2672 = vmul.f32 1.0, %v2671
  %v2673 = vrcp.pop %v2462
  %v2674 = vmul.f32 1.0, %v2673
  %v2675 = vrcp.pop %v2463
  %v2676 = vmul.f32 1.0, %v2675
  %v2677 = vrcp.pop %v2464
  %v2678 = vmul.f32 1.0, %v2677
  %v2679 = vrcp.pop %v2465
  %v2680 = vmul.f32 1.0, %v2679
  %v2681 = vrcp.pop %v2466
  %v2682 = vmul.f32 1.0, %v2681
  %v2683 = vrcp.pop %v2467
  %v2684 = vmul.f32 1.0, %v2683
  %v2685 = vrcp.pop %v2468
  %v2686 = vmul.f32 1.0, %v2685
  %v2687 = vrcp.pop %v2469
  %v2688 = vmul.f32 1.0, %v2687
  %v2689 = vrcp.pop %v2470
  %v2690 = vmul.f32 1.0, %v2689
  %v2691 = vrcp.pop %v2471
  %v2692 = vmul.f32 1.0, %v2691
  %v2693 = vrcp.pop %v2472
  %v2694 = vmul.f32 1.0, %v2693
  %v2695 = vrcp.pop %v2473
  %v2696 = vmul.f32 1.0, %v2695
  %v2697 = vrcp.pop %v2474
  %v2698 = vmul.f32 1.0, %v2697
  %v2699 = vrcp.pop %v2475
  %v2700 = vmul.f32 1.0, %v2699
  %v2701 = vrcp.pop %v2476
  %v2702 = vmul.f32 1.0, %v2701
  %v2703 = vrcp.pop %v2477
  %v2704 = vmul.f32 1.0, %v2703
  %v2705 = vrcp.pop %v2478
  %v2706 = vmul.f32 1.0, %v2705
  %v2707 = vrcp.pop %v2479
  %v2708 = vmul.f32 1.0, %v2707
  %v2709 = vrcp.pop %v2480
  %v2710 = vmul.f32 1.0, %v2709
  %v2711 = vrcp.pop %v2481
  %v2712 = vmul.f32 1.0, %v2711
  %v2713 = vrcp.pop %v2482
  %v2714 = vmul.f32 1.0, %v2713
  %v2715 = vrcp.pop %v2483
  %v2716 = vmul.f32 1.0, %v2715
  %v2717 = vrcp.pop %v2484
  %v2718 = vmul.f32 1.0, %v2717
  %v2719 = vrcp.pop %v2485
  %v2720 = vmul.f32 1.0, %v2719
  %v2721 = vrcp.pop %v2486
  %v2722 = vmul.f32 1.0, %v2721
  %v2723 = vrcp.pop %v2487
  %v2724 = vmul.f32 1.0, %v2723
  %v2725 = vrcp.pop %v2488
  %v2726 = vmul.f32 1.0, %v2725
  %v2727 = vrcp.pop %v2489
  %v2728 = vmul.f32 1.0, %v2727
  %v2729 = vrcp.pop %v2490
  %v2730 = vmul.f32 1.0, %v2729
  %v2731 = vrcp.pop %v2491
  %v2732 = vmul.f32 1.0, %v2731
  %v2733 = vrcp.pop %v2492
  %v2734 = vmul.f32 1.0, %v2733
  %v2735 = vrcp.pop %v2493
  %v2736 = vmul.f32 1.0, %v2735
  %v2737 = vrcp.pop %v2494
  %v2738 = vmul.f32 1.0, %v2737
  %v2739 = vrcp.pop %v2495
  %v2740 = vmul.f32 1.0, %v2739
  %v2741 = vrcp.pop %v2496
  %v2742 = vmul.f32 1.0, %v2741
  %v2743 = vrcp.pop %v2497
  %v2744 = vmul.f32 1.0, %v2743
  %v2745 = vrcp.pop %v2498
  %v2746 = vmul.f32 1.0, %v2745
  %v2747 = vrcp.pop %v2499
  %v2748 = vmul.f32 1.0, %v2747
  %v2749 = vrcp.pop %v2500
  %v2750 = vmul.f32 1.0, %v2749
  %v2751 = vrcp.pop %v2501
  %v2752 = vmul.f32 1.0, %v2751
  %v2753 = vrcp.pop %v2502
  %v2754 = vmul.f32 1.0, %v2753
  %v2755 = vrcp.pop %v2503
  %v2756 = vmul.f32 1.0, %v2755
  %v2757 = vrcp.pop %v2504
  %v2758 = vmul.f32 1.0, %v2757
  %v2759 = vrcp.pop %v2505
  %v2760 = vmul.f32 1.0, %v2759
  %v2761 = vrcp.pop %v2506
  %v2762 = vmul.f32 1.0, %v2761
  %v2763 = vrcp.pop %v2507
  %v2764 = vmul.f32 1.0, %v2763
  %v2765 = vrcp.pop %v2508
  %v2766 = vmul.f32 1.0, %v2765
  %v2767 = vrcp.pop %v2509
  %v2768 = vmul.f32 1.0, %v2767
  %v2769 = vrcp.pop %v2510
  %v2770 = vmul.f32 1.0, %v2769
  %v2771 = vrcp.pop %v2511
  %v2772 = vmul.f32 1.0, %v2771
  %v2773 = vrcp.pop %v2512
  %v2774 = vmul.f32 1.0, %v2773
  %v2775 = vrcp.pop %v2513
  %v2776 = vmul.f32 1.0, %v2775
  %v2777 = vrcp.pop %v2514
  %v2778 = vmul.f32 1.0, %v2777
  %v2779 = vrcp.pop %v2515
  %v2780 = vmul.f32 1.0, %v2779
  %v2781 = vrcp.pop %v2516
  %v2782 = vmul.f32 1.0, %v2781
  %v2783 = vrcp.pop %v2517
  %v2784 = vmul.f32 1.0, %v2783
  %v2785 = vrcp.pop %v2518
  %v2786 = vmul.f32 1.0, %v2785
  %v2787 = vrcp.pop %v2519
  %v2788 = vmul.f32 1.0, %v2787
  %v2789 = vrcp.pop %v2520
  %v2790 = vmul.f32 1.0, %v2789
  %v2791 = vrcp.pop %v2521
  %v2792 = vmul.f32 1.0, %v2791
  %v2793 = vrcp.pop %v2522
  %v2794 = vmul.f32 1.0, %v2793
  %v2795 = vrcp.pop %v2523
  %v2796 = vmul.f32 1.0, %v2795
  %v2797 = vrcp.pop %v2524
  %v2798 = vmul.f32 1.0, %v2797
  %v2799 = vrcp.pop %v2525
  %v2800 = vmul.f32 1.0, %v2799
  %v2801 = vrcp.pop %v2526
  %v2802 = vmul.f32 1.0, %v2801
  %v2803 = vrcp.pop %v2527
  %v2804 = vmul.f32 1.0, %v2803
  %v2805 = vrcp.pop %v2528
  %v2806 = vmul.f32 1.0, %v2805
  %v2807 = vrcp.pop %v2529
  %v2808 = vmul.f32 1.0, %v2807
  %v2809 = vrcp.pop %v2530
  %v2810 = vmul.f32 1.0, %v2809
  %v2811 = vrcp.pop %v2531
  %v2812 = vmul.f32 1.0, %v2811
  %v2813 = vrcp.pop %v2532
  %v2814 = vmul.f32 1.0, %v2813
  %v2815 = vrcp.pop %v2533
  %v2816 = vmul.f32 1.0, %v2815
  %v2817 = vrcp.pop %v2534
  %v2818 = vmul.f32 1.0, %v2817
  %v2819 = vrcp.pop %v2535
  %v2820 = vmul.f32 1.0, %v2819
  %v2821 = vrcp.pop %v2536
  %v2822 = vmul.f32 1.0, %v2821
  %v2823 = vrcp.pop %v2537
  %v2824 = vmul.f32 1.0, %v2823
  %v2825 = vrcp.pop %v2538
  %v2826 = vmul.f32 1.0, %v2825
  %v2827 = vrcp.pop %v2539
  %v2828 = vmul.f32 1.0, %v2827
  %v2829 = vrcp.pop %v2540
  %v2830 = vmul.f32 1.0, %v2829
  %v2831 = vrcp.pop %v2541
  %v2832 = vmul.f32 1.0, %v2831
  %v2833 = vrcp.pop %v2542
  %v2834 = vmul.f32 1.0, %v2833
  %v2835 = vrcp.pop %v2543
  %v2836 = vmul.f32 1.0, %v2835
  %v2837 = vrcp.pop %v2544
  %v2838 = vmul.f32 1.0, %v2837
  %v2839 = vrcp.pop %v2545
  %v2840 = vmul.f32 1.0, %v2839
  %v2841 = vrcp.pop %v2546
  %v2842 = vmul.f32 1.0, %v2841
  %v2843 = vrcp.pop %v2547
  %v2844 = vmul.f32 1.0, %v2843
  %v2845 = vrcp.pop %v2548
  %v2846 = vmul.f32 1.0, %v2845
  %v2847 = vrcp.pop %v2549
  %v2848 = vmul.f32 1.0, %v2847
  %v2849 = vrcp.pop %v2550
  %v2850 = vmul.f32 1.0, %v2849
  %v2851 = vrcp.pop %v2551
  %v2852 = vmul.f32 1.0, %v2851
  %v2853 = vrcp.pop %v2552
  %v2854 = vmul.f32 1.0, %v2853
  %v2855 = vrcp.pop %v2553
  %v2856 = vmul.f32 1.0, %v2855
  %v2857 = vrcp.pop %v2554
  %v2858 = vmul.f32 1.0, %v2857
  %v2859 = vrcp.pop %v2555
  %v2860 = vmul.f32 1.0, %v2859
  %v2861 = vrcp.pop %v2556
  %v2862 = vmul.f32 1.0, %v2861
  %v2863 = vrcp.pop %v2557
  %v2864 = vmul.f32 1.0, %v2863
  %v2865 = vrcp.pop %v2558
  %v2866 = vmul.f32 1.0, %v2865
  %v2867 = vrcp.pop %v2559
  %v2868 = vmul.f32 1.0, %v2867
  %v2869 = vrcp.pop %v2560
  %v2870 = vmul.f32 1.0, %v2869
  %v2871 = vrcp.pop %v2561
  %v2872 = vmul.f32 1.0, %v2871
  %v2873 = vrcp.pop %v2562
  %v2874 = vmul.f32 1.0, %v2873
  %v2875 = vrcp.pop %v2563
  %v2876 = vmul.f32 1.0, %v2875
  %v2877 = vrcp.pop %v2564
  %v2878 = vmul.f32 1.0, %v2877
  %v2879 = vrcp.pop %v2565
  %v2880 = vmul.f32 1.0, %v2879
  %v2881 = vrcp.pop %v2566
  %v2882 = vmul.f32 1.0, %v2881
  %v2883 = vrcp.pop %v2567
  %v2884 = vmul.f32 1.0, %v2883
  %v2885 = vrcp.pop %v2568
  %v2886 = vmul.f32 1.0, %v2885
  %v2887 = vrcp.pop %v2569
  %v2888 = vmul.f32 1.0, %v2887
  %v2889 = vrcp.pop %v2570
  %v2890 = vmul.f32 1.0, %v2889
  %v2891 = vrcp.pop %v2571
  %v2892 = vmul.f32 1.0, %v2891
  %v2893 = vrcp.pop %v2572
  %v2894 = vmul.f32 1.0, %v2893
  %v2895 = vrcp.pop %v2573
  %v2896 = vmul.f32 1.0, %v2895
  %v2897 = vrcp.pop %v2574
  %v2898 = vmul.f32 1.0, %v2897
  %v2899 = vrcp.pop %v2575
  %v2900 = vmul.f32 1.0, %v2899
  %v2901 = vrcp.pop %v2576
  %v2902 = vmul.f32 1.0, %v2901
  %v2903 = vrcp.pop %v2577
  %v2904 = vmul.f32 1.0, %v2903
  %v2905 = vrcp.pop %v2578
  %v2906 = vmul.f32 1.0, %v2905
  %v2907 = vrcp.pop %v2579
  %v2908 = vmul.f32 1.0, %v2907
  %v2909 = vrcp.pop %v2580
  %v2910 = vmul.f32 1.0, %v2909
  %v2911 = vrcp.pop %v2581
  %v2912 = vmul.f32 1.0, %v2911
  %v2913 = vrcp.pop %v2582
  %v2914 = vmul.f32 1.0, %v2913
  %v2915 = vrcp.pop %v2583
  %v2916 = vmul.f32 1.0, %v2915
  %v2917 = vrcp.pop %v2584
  %v2918 = vmul.f32 1.0, %v2917
  %v2919 = vrcp.pop %v2585
  %v2920 = vmul.f32 1.0, %v2919
  %v2921 = vrcp.pop %v2586
  %v2922 = vmul.f32 1.0, %v2921
  %v2923 = vrcp.pop %v2587
  %v2924 = vmul.f32 1.0, %v2923
  %v2925 = vrcp.pop %v2588
  %v2926 = vmul.f32 1.0, %v2925
  %v2927 = vrcp.pop %v2589
  %v2928 = vmul.f32 1.0, %v2927
  %v2929 = vrcp.pop %v2590
  %v2930 = vmul.f32 1.0, %v2929
  %v2931 = vrcp.pop %v2591
  %v2932 = vmul.f32 1.0, %v2931
  %v2933 = vrcp.pop %v2592
  %v2934 = vmul.f32 1.0, %v2933
  %v2935 = vrcp.pop %v2593
  %v2936 = vmul.f32 1.0, %v2935
  %v2937 = vrcp.pop %v2594
  %v2938 = vmul.f32 1.0, %v2937
  %v2939 = vrcp.pop %v2595
  %v2940 = vmul.f32 1.0, %v2939
  %v2941 = vrcp.pop %v2596
  %v2942 = vmul.f32 1.0, %v2941
  %v2943 = vrcp.pop %v2597
  %v2944 = vmul.f32 1.0, %v2943
  %v2945 = vrcp.pop %v2598
  %v2946 = vmul.f32 1.0, %v2945
  %v2947 = vrcp.pop %v2599
  %v2948 = vmul.f32 1.0, %v2947
  %v2949 = vrcp.pop %v2600
  %v2950 = vmul.f32 1.0, %v2949
  %v2951 = vrcp.pop %v2601
  %v2952 = vmul.f32 1.0, %v2951
  %v2953 = vrcp.pop %v2602
  %v2954 = vmul.f32 1.0, %v2953
  %v2955 = vrcp.pop %v2603
  %v2956 = vmul.f32 1.0, %v2955
  %v2957 = vrcp.pop %v2604
  %v2958 = vmul.f32 1.0, %v2957
  %v2959 = vrcp.pop %v2605
  %v2960 = vmul.f32 1.0, %v2959
  %v2961 = vrcp.pop %v2606
  %v2962 = vmul.f32 1.0, %v2961
  %v2963 = vrcp.pop %v2607
  %v2964 = vmul.f32 1.0, %v2963
  %v2965 = vrcp.pop %v2608
  %v2966 = vmul.f32 1.0, %v2965
  %v2967 = vrcp.pop %v2609
  %v2968 = vmul.f32 1.0, %v2967
  %v2969 = vrcp.pop %v2610
  %v2970 = vmul.f32 1.0, %v2969
  %v2971 = vrcp.pop %v2611
  %v2972 = vmul.f32 1.0, %v2971
  %v2973 = vrcp.pop %v2612
  %v2974 = vmul.f32 1.0, %v2973
  %v2975 = vrcp.pop %v2613
  %v2976 = vmul.f32 1.0, %v2975
  %v2977 = vrcp.pop %v2614
  %v2978 = vmul.f32 1.0, %v2977
  %v2979 = vrcp.pop %v2615
  %v2980 = vmul.f32 1.0, %v2979
  %v2981 = vrcp.pop %v2616
  %v2982 = vmul.f32 1.0, %v2981
  %v2983 = vrcp.pop %v2617
  %v2984 = vmul.f32 1.0, %v2983
  %v2985 = vrcp.pop %v2618
  %v2986 = vmul.f32 1.0, %v2985
  %v2987 = vrcp.pop %v2619
  %v2988 = vmul.f32 1.0, %v2987
  %v2989 = vrcp.pop %v2620
  %v2990 = vmul.f32 1.0, %v2989
  %v2991 = vrcp.pop %v2621
  %v2992 = vmul.f32 1.0, %v2991
  %v2993 = vrcp.pop %v2622
  %v2994 = vmul.f32 1.0, %v2993
  %v2995 = vrcp.pop %v2623
  %v2996 = vmul.f32 1.0, %v2995
  %v2997 = vrcp.pop %v2624
  %v2998 = vmul.f32 1.0, %v2997
  %v2999 = vrcp.pop %v2625
  %v3000 = vmul.f32 1.0, %v2999
  %v3001 = vrcp.pop %v2626
  %v3002 = vmul.f32 1.0, %v3001
  %v3003 = vrcp.pop %v2627
  %v3004 = vmul.f32 1.0, %v3003
  %v3005 = vrcp.pop %v2628
  %v3006 = vmul.f32 1.0, %v3005
  %v3007 = vrcp.pop %v2629
  %v3008 = vmul.f32 1.0, %v3007
  %v3009 = vrcp.pop %v2630
  %v3010 = vmul.f32 1.0, %v3009
  %v3011 = vrcp.pop %v2631
  %v3012 = vmul.f32 1.0, %v3011
  %v3013 = vrcp.pop %v2632
  %v3014 = vmul.f32 1.0, %v3013
  %v3015 = vrcp.pop %v2633
  %v3016 = vmul.f32 1.0, %v3015
  %v3017 = vrcp.pop %v2634
  %v3018 = vmul.f32 1.0, %v3017
  %v3019 = vrcp.pop %v2635
  %v3020 = vmul.f32 1.0, %v3019
  %v3021 = vrcp.pop %v2636
  %v3022 = vmul.f32 1.0, %v3021
  %v3023 = vrcp.pop %v2637
  %v3024 = vmul.f32 1.0, %v3023
  %v3025 = vrcp.pop %v2638
  %v3026 = vmul.f32 1.0, %v3025
  %v3027 = vrcp.pop %v2639
  %v3028 = vmul.f32 1.0, %v3027
  %v3029 = vrcp.pop %v2640
  %v3030 = vmul.f32 1.0, %v3029
  %v3031 = vrcp.pop %v2641
  %v3032 = vmul.f32 1.0, %v3031
  %v3033 = vrcp.pop %v2642
  %v3034 = vmul.f32 1.0, %v3033
  %vm3035 = vcmask 48128
  %3036 = vst.msk [vmem:[%s3] sm:$0xff] %vm3035, %v2644
  %3037 = vst.msk [vmem:[%s3 + $0x8] sm:$0xff] %vm3035, %v2646
  %3038 = vst.msk [vmem:[%s3 + $0x10] sm:$0xff] %vm3035, %v2648
  %3039 = vst.msk [vmem:[%s3 + $0x18] sm:$0xff] %vm3035, %v2650
  %3040 = vst.msk [vmem:[%s3 + $0x20] sm:$0xff] %vm3035, %v2652
  %3041 = vst.msk [vmem:[%s3 + $0x28] sm:$0xff] %vm3035, %v2654
  %3042 = vst.msk [vmem:[%s3 + $0x30] sm:$0xff] %vm3035, %v2656
  %3043 = vst.msk [vmem:[%s3 + $0x38] sm:$0xff] %vm3035, %v2658
  %3044 = vst.msk [vmem:[%s3 + $0x40] sm:$0xff] %vm3035, %v2660
  %3045 = vst.msk [vmem:[%s3 + $0x48] sm:$0xff] %vm3035, %v2662
  %3046 = vst.msk [vmem:[%s3 + $0x50] sm:$0xff] %vm3035, %v2664
  %3047 = vst.msk [vmem:[%s3 + $0x58] sm:$0xff] %vm3035, %v2666
  %3048 = vst.msk [vmem:[%s3 + $0x60] sm:$0xff] %vm3035, %v2668
  %3049 = vst.msk [vmem:[%s3 + $0x68] sm:$0xff] %vm3035, %v2670
  %3050 = vst.msk [vmem:[%s3 + $0x70] sm:$0xff] %vm3035, %v2672
  %3051 = vst.msk [vmem:[%s3 + $0x78] sm:$0xff] %vm3035, %v2674
  %3052 = vst.msk [vmem:[%s3 + $0x80] sm:$0xff] %vm3035, %v2676
  %3053 = vst.msk [vmem:[%s3 + $0x88] sm:$0xff] %vm3035, %v2678
  %3054 = vst.msk [vmem:[%s3 + $0x90] sm:$0xff] %vm3035, %v2680
  %3055 = vst.msk [vmem:[%s3 + $0x98] sm:$0xff] %vm3035, %v2682
  %3056 = vst.msk [vmem:[%s3 + $0xa0] sm:$0xff] %vm3035, %v2684
  %3057 = vst.msk [vmem:[%s3 + $0xa8] sm:$0xff] %vm3035, %v2686
  %3058 = vst.msk [vmem:[%s3 + $0xb0] sm:$0xff] %vm3035, %v2688
  %3059 = vst.msk [vmem:[%s3 + $0xb8] sm:$0xff] %vm3035, %v2690
  %3060 = vst.msk [vmem:[%s3 + $0xc0] sm:$0xff] %vm3035, %v2692
  %3061 = vst.msk [vmem:[%s3 + $0xc8] sm:$0xff] %vm3035, %v2694
  %3062 = vst.msk [vmem:[%s3 + $0xd0] sm:$0xff] %vm3035, %v2696
  %3063 = vst.msk [vmem:[%s3 + $0xd8] sm:$0xff] %vm3035, %v2698
  %3064 = vst.msk [vmem:[%s3 + $0xe0] sm:$0xff] %vm3035, %v2700
  %3065 = vst.msk [vmem:[%s3 + $0xe8] sm:$0xff] %vm3035, %v2702
  %3066 = vst.msk [vmem:[%s3 + $0xf0] sm:$0xff] %vm3035, %v2704
  %3067 = vst.msk [vmem:[%s3 + $0xf8] sm:$0xff] %vm3035, %v2706
  %3068 = vst.msk [vmem:[%s3 + $0x100] sm:$0xff] %vm3035, %v2708
  %3069 = vst.msk [vmem:[%s3 + $0x108] sm:$0xff] %vm3035, %v2710
  %3070 = vst.msk [vmem:[%s3 + $0x110] sm:$0xff] %vm3035, %v2712
  %3071 = vst.msk [vmem:[%s3 + $0x118] sm:$0xff] %vm3035, %v2714
  %3072 = vst.msk [vmem:[%s3 + $0x120] sm:$0xff] %vm3035, %v2716
  %3073 = vst.msk [vmem:[%s3 + $0x128] sm:$0xff] %vm3035, %v2718
  %3074 = vst.msk [vmem:[%s3 + $0x130] sm:$0xff] %vm3035, %v2720
  %3075 = vst.msk [vmem:[%s3 + $0x138] sm:$0xff] %vm3035, %v2722
  %3076 = vst.msk [vmem:[%s3 + $0x140] sm:$0xff] %vm3035, %v2724
  %3077 = vst.msk [vmem:[%s3 + $0x148] sm:$0xff] %vm3035, %v2726
  %3078 = vst.msk [vmem:[%s3 + $0x150] sm:$0xff] %vm3035, %v2728
  %3079 = vst.msk [vmem:[%s3 + $0x158] sm:$0xff] %vm3035, %v2730
  %3080 = vst.msk [vmem:[%s3 + $0x160] sm:$0xff] %vm3035, %v2732
  %3081 = vst.msk [vmem:[%s3 + $0x168] sm:$0xff] %vm3035, %v2734
  %3082 = vst.msk [vmem:[%s3 + $0x170] sm:$0xff] %vm3035, %v2736
  %3083 = vst.msk [vmem:[%s3 + $0x178] sm:$0xff] %vm3035, %v2738
  %3084 = vst.msk [vmem:[%s3 + $0x180] sm:$0xff] %vm3035, %v2740
  %3085 = vst.msk [vmem:[%s3 + $0x188] sm:$0xff] %vm3035, %v2742
  %3086 = vst.msk [vmem:[%s3 + $0x190] sm:$0xff] %vm3035, %v2744
  %3087 = vst.msk [vmem:[%s3 + $0x198] sm:$0xff] %vm3035, %v2746
  %3088 = vst.msk [vmem:[%s3 + $0x1a0] sm:$0xff] %vm3035, %v2748
  %3089 = vst.msk [vmem:[%s3 + $0x1a8] sm:$0xff] %vm3035, %v2750
  %3090 = vst.msk [vmem:[%s3 + $0x1b0] sm:$0xff] %vm3035, %v2752
  %3091 = vst.msk [vmem:[%s3 + $0x1b8] sm:$0xff] %vm3035, %v2754
  %3092 = vst.msk [vmem:[%s3 + $0x1c0] sm:$0xff] %vm3035, %v2756
  %3093 = vst.msk [vmem:[%s3 + $0x1c8] sm:$0xff] %vm3035, %v2758
  %3094 = vst.msk [vmem:[%s3 + $0x1d0] sm:$0xff] %vm3035, %v2760
  %3095 = vst.msk [vmem:[%s3 + $0x1d8] sm:$0xff] %vm3035, %v2762
  %3096 = vst.msk [vmem:[%s3 + $0x1e0] sm:$0xff] %vm3035, %v2764
  %3097 = vst.msk [vmem:[%s3 + $0x1e8] sm:$0xff] %vm3035, %v2766
  %3098 = vst.msk [vmem:[%s3 + $0x1f0] sm:$0xff] %vm3035, %v2768
  %3099 = vst.msk [vmem:[%s3 + $0x1f8] sm:$0xff] %vm3035, %v2770
  %3100 = vst.msk [vmem:[%s3 + $0x200] sm:$0xff] %vm3035, %v2772
  %3101 = vst.msk [vmem:[%s3 + $0x208] sm:$0xff] %vm3035, %v2774
  %3102 = vst.msk [vmem:[%s3 + $0x210] sm:$0xff] %vm3035, %v2776
  %3103 = vst.msk [vmem:[%s3 + $0x218] sm:$0xff] %vm3035, %v2778
  %3104 = vst.msk [vmem:[%s3 + $0x220] sm:$0xff] %vm3035, %v2780
  %3105 = vst.msk [vmem:[%s3 + $0x228] sm:$0xff] %vm3035, %v2782
  %3106 = vst.msk [vmem:[%s3 + $0x230] sm:$0xff] %vm3035, %v2784
  %3107 = vst.msk [vmem:[%s3 + $0x238] sm:$0xff] %vm3035, %v2786
  %3108 = vst.msk [vmem:[%s3 + $0x240] sm:$0xff] %vm3035, %v2788
  %3109 = vst.msk [vmem:[%s3 + $0x248] sm:$0xff] %vm3035, %v2790
  %3110 = vst.msk [vmem:[%s3 + $0x250] sm:$0xff] %vm3035, %v2792
  %3111 = vst.msk [vmem:[%s3 + $0x258] sm:$0xff] %vm3035, %v2794
  %3112 = vst.msk [vmem:[%s3 + $0x260] sm:$0xff] %vm3035, %v2796
  %3113 = vst.msk [vmem:[%s3 + $0x268] sm:$0xff] %vm3035, %v2798
  %3114 = vst.msk [vmem:[%s3 + $0x270] sm:$0xff] %vm3035, %v2800
  %3115 = vst.msk [vmem:[%s3 + $0x278] sm:$0xff] %vm3035, %v2802
  %3116 = vst.msk [vmem:[%s3 + $0x280] sm:$0xff] %vm3035, %v2804
  %3117 = vst.msk [vmem:[%s3 + $0x288] sm:$0xff] %vm3035, %v2806
  %3118 = vst.msk [vmem:[%s3 + $0x290] sm:$0xff] %vm3035, %v2808
  %3119 = vst.msk [vmem:[%s3 + $0x298] sm:$0xff] %vm3035, %v2810
  %3120 = vst.msk [vmem:[%s3 + $0x2a0] sm:$0xff] %vm3035, %v2812
  %3121 = vst.msk [vmem:[%s3 + $0x2a8] sm:$0xff] %vm3035, %v2814
  %3122 = vst.msk [vmem:[%s3 + $0x2b0] sm:$0xff] %vm3035, %v2816
  %3123 = vst.msk [vmem:[%s3 + $0x2b8] sm:$0xff] %vm3035, %v2818
  %3124 = vst.msk [vmem:[%s3 + $0x2c0] sm:$0xff] %vm3035, %v2820
  %3125 = vst.msk [vmem:[%s3 + $0x2c8] sm:$0xff] %vm3035, %v2822
  %3126 = vst.msk [vmem:[%s3 + $0x2d0] sm:$0xff] %vm3035, %v2824
  %3127 = vst.msk [vmem:[%s3 + $0x2d8] sm:$0xff] %vm3035, %v2826
  %3128 = vst.msk [vmem:[%s3 + $0x2e0] sm:$0xff] %vm3035, %v2828
  %3129 = vst.msk [vmem:[%s3 + $0x2e8] sm:$0xff] %vm3035, %v2830
  %3130 = vst.msk [vmem:[%s3 + $0x2f0] sm:$0xff] %vm3035, %v2832
  %3131 = vst.msk [vmem:[%s3 + $0x2f8] sm:$0xff] %vm3035, %v2834
  %3132 = vst.msk [vmem:[%s3 + $0x300] sm:$0xff] %vm3035, %v2836
  %3133 = vst.msk [vmem:[%s3 + $0x308] sm:$0xff] %vm3035, %v2838
  %3134 = vst.msk [vmem:[%s3 + $0x310] sm:$0xff] %vm3035, %v2840
  %3135 = vst.msk [vmem:[%s3 + $0x318] sm:$0xff] %vm3035, %v2842
  %3136 = vst.msk [vmem:[%s3 + $0x320] sm:$0xff] %vm3035, %v2844
  %3137 = vst.msk [vmem:[%s3 + $0x328] sm:$0xff] %vm3035, %v2846
  %3138 = vst.msk [vmem:[%s3 + $0x330] sm:$0xff] %vm3035, %v2848
  %3139 = vst.msk [vmem:[%s3 + $0x338] sm:$0xff] %vm3035, %v2850
  %3140 = vst.msk [vmem:[%s3 + $0x340] sm:$0xff] %vm3035, %v2852
  %3141 = vst.msk [vmem:[%s3 + $0x348] sm:$0xff] %vm3035, %v2854
  %3142 = vst.msk [vmem:[%s3 + $0x350] sm:$0xff] %vm3035, %v2856
  %3143 = vst.msk [vmem:[%s3 + $0x358] sm:$0xff] %vm3035, %v2858
  %3144 = vst.msk [vmem:[%s3 + $0x360] sm:$0xff] %vm3035, %v2860
  %3145 = vst.msk [vmem:[%s3 + $0x368] sm:$0xff] %vm3035, %v2862
  %3146 = vst.msk [vmem:[%s3 + $0x370] sm:$0xff] %vm3035, %v2864
  %3147 = vst.msk [vmem:[%s3 + $0x378] sm:$0xff] %vm3035, %v2866
  %3148 = vst.msk [vmem:[%s3 + $0x380] sm:$0xff] %vm3035, %v2868
  %3149 = vst.msk [vmem:[%s3 + $0x388] sm:$0xff] %vm3035, %v2870
  %3150 = vst.msk [vmem:[%s3 + $0x390] sm:$0xff] %vm3035, %v2872
  %3151 = vst.msk [vmem:[%s3 + $0x398] sm:$0xff] %vm3035, %v2874
  %3152 = vst.msk [vmem:[%s3 + $0x3a0] sm:$0xff] %vm3035, %v2876
  %3153 = vst.msk [vmem:[%s3 + $0x3a8] sm:$0xff] %vm3035, %v2878
  %3154 = vst.msk [vmem:[%s3 + $0x3b0] sm:$0xff] %vm3035, %v2880
  %3155 = vst.msk [vmem:[%s3 + $0x3b8] sm:$0xff] %vm3035, %v2882
  %3156 = vst.msk [vmem:[%s3 + $0x3c0] sm:$0xff] %vm3035, %v2884
  %3157 = vst.msk [vmem:[%s3 + $0x3c8] sm:$0xff] %vm3035, %v2886
  %3158 = vst.msk [vmem:[%s3 + $0x3d0] sm:$0xff] %vm3035, %v2888
  %3159 = vst.msk [vmem:[%s3 + $0x3d8] sm:$0xff] %vm3035, %v2890
  %3160 = vst.msk [vmem:[%s3 + $0x3e0] sm:$0xff] %vm3035, %v2892
  %3161 = vst.msk [vmem:[%s3 + $0x3e8] sm:$0xff] %vm3035, %v2894
  %3162 = vst.msk [vmem:[%s3 + $0x3f0] sm:$0xff] %vm3035, %v2896
  %3163 = vst.msk [vmem:[%s3 + $0x3f8] sm:$0xff] %vm3035, %v2898
  %3164 = vst.msk [vmem:[%s3 + $0x400] sm:$0xff] %vm3035, %v2900
  %3165 = vst.msk [vmem:[%s3 + $0x408] sm:$0xff] %vm3035, %v2902
  %3166 = vst.msk [vmem:[%s3 + $0x410] sm:$0xff] %vm3035, %v2904
  %3167 = vst.msk [vmem:[%s3 + $0x418] sm:$0xff] %vm3035, %v2906
  %3168 = vst.msk [vmem:[%s3 + $0x420] sm:$0xff] %vm3035, %v2908
  %3169 = vst.msk [vmem:[%s3 + $0x428] sm:$0xff] %vm3035, %v2910
  %3170 = vst.msk [vmem:[%s3 + $0x430] sm:$0xff] %vm3035, %v2912
  %3171 = vst.msk [vmem:[%s3 + $0x438] sm:$0xff] %vm3035, %v2914
  %3172 = vst.msk [vmem:[%s3 + $0x440] sm:$0xff] %vm3035, %v2916
  %3173 = vst.msk [vmem:[%s3 + $0x448] sm:$0xff] %vm3035, %v2918
  %3174 = vst.msk [vmem:[%s3 + $0x450] sm:$0xff] %vm3035, %v2920
  %3175 = vst.msk [vmem:[%s3 + $0x458] sm:$0xff] %vm3035, %v2922
  %3176 = vst.msk [vmem:[%s3 + $0x460] sm:$0xff] %vm3035, %v2924
  %3177 = vst.msk [vmem:[%s3 + $0x468] sm:$0xff] %vm3035, %v2926
  %3178 = vst.msk [vmem:[%s3 + $0x470] sm:$0xff] %vm3035, %v2928
  %3179 = vst.msk [vmem:[%s3 + $0x478] sm:$0xff] %vm3035, %v2930
  %3180 = vst.msk [vmem:[%s3 + $0x480] sm:$0xff] %vm3035, %v2932
  %3181 = vst.msk [vmem:[%s3 + $0x488] sm:$0xff] %vm3035, %v2934
  %3182 = vst.msk [vmem:[%s3 + $0x490] sm:$0xff] %vm3035, %v2936
  %3183 = vst.msk [vmem:[%s3 + $0x498] sm:$0xff] %vm3035, %v2938
  %3184 = vst.msk [vmem:[%s3 + $0x4a0] sm:$0xff] %vm3035, %v2940
  %3185 = vst.msk [vmem:[%s3 + $0x4a8] sm:$0xff] %vm3035, %v2942
  %3186 = vst.msk [vmem:[%s3 + $0x4b0] sm:$0xff] %vm3035, %v2944
  %3187 = vst.msk [vmem:[%s3 + $0x4b8] sm:$0xff] %vm3035, %v2946
  %3188 = vst.msk [vmem:[%s3 + $0x4c0] sm:$0xff] %vm3035, %v2948
  %3189 = vst.msk [vmem:[%s3 + $0x4c8] sm:$0xff] %vm3035, %v2950
  %3190 = vst.msk [vmem:[%s3 + $0x4d0] sm:$0xff] %vm3035, %v2952
  %3191 = vst.msk [vmem:[%s3 + $0x4d8] sm:$0xff] %vm3035, %v2954
  %3192 = vst.msk [vmem:[%s3 + $0x4e0] sm:$0xff] %vm3035, %v2956
  %3193 = vst.msk [vmem:[%s3 + $0x4e8] sm:$0xff] %vm3035, %v2958
  %3194 = vst.msk [vmem:[%s3 + $0x4f0] sm:$0xff] %vm3035, %v2960
  %3195 = vst.msk [vmem:[%s3 + $0x4f8] sm:$0xff] %vm3035, %v2962
  %3196 = vst.msk [vmem:[%s3 + $0x500] sm:$0xff] %vm3035, %v2964
  %3197 = vst.msk [vmem:[%s3 + $0x508] sm:$0xff] %vm3035, %v2966
  %3198 = vst.msk [vmem:[%s3 + $0x510] sm:$0xff] %vm3035, %v2968
  %3199 = vst.msk [vmem:[%s3 + $0x518] sm:$0xff] %vm3035, %v2970
  %3200 = vst.msk [vmem:[%s3 + $0x520] sm:$0xff] %vm3035, %v2972
  %3201 = vst.msk [vmem:[%s3 + $0x528] sm:$0xff] %vm3035, %v2974
  %3202 = vst.msk [vmem:[%s3 + $0x530] sm:$0xff] %vm3035, %v2976
  %3203 = vst.msk [vmem:[%s3 + $0x538] sm:$0xff] %vm3035, %v2978
  %3204 = vst.msk [vmem:[%s3 + $0x540] sm:$0xff] %vm3035, %v2980
  %3205 = vst.msk [vmem:[%s3 + $0x548] sm:$0xff] %vm3035, %v2982
  %3206 = vst.msk [vmem:[%s3 + $0x550] sm:$0xff] %vm3035, %v2984
  %3207 = vst.msk [vmem:[%s3 + $0x558] sm:$0xff] %vm3035, %v2986
  %3208 = vst.msk [vmem:[%s3 + $0x560] sm:$0xff] %vm3035, %v2988
  %3209 = vst.msk [vmem:[%s3 + $0x568] sm:$0xff] %vm3035, %v2990
  %3210 = vst.msk [vmem:[%s3 + $0x570] sm:$0xff] %vm3035, %v2992
  %3211 = vst.msk [vmem:[%s3 + $0x578] sm:$0xff] %vm3035, %v2994
  %3212 = vst.msk [vmem:[%s3 + $0x580] sm:$0xff] %vm3035, %v2996
  %3213 = vst.msk [vmem:[%s3 + $0x588] sm:$0xff] %vm3035, %v2998
  %3214 = vst.msk [vmem:[%s3 + $0x590] sm:$0xff] %vm3035, %v3000
  %3215 = vst.msk [vmem:[%s3 + $0x598] sm:$0xff] %vm3035, %v3002
  %3216 = vst.msk [vmem:[%s3 + $0x5a0] sm:$0xff] %vm3035, %v3004
  %3217 = vst.msk [vmem:[%s3 + $0x5a8] sm:$0xff] %vm3035, %v3006
  %3218 = vst.msk [vmem:[%s3 + $0x5b0] sm:$0xff] %vm3035, %v3008
  %3219 = vst.msk [vmem:[%s3 + $0x5b8] sm:$0xff] %vm3035, %v3010
  %3220 = vst.msk [vmem:[%s3 + $0x5c0] sm:$0xff] %vm3035, %v3012
  %3221 = vst.msk [vmem:[%s3 + $0x5c8] sm:$0xff] %vm3035, %v3014
  %3222 = vst.msk [vmem:[%s3 + $0x5d0] sm:$0xff] %vm3035, %v3016
  %3223 = vst.msk [vmem:[%s3 + $0x5d8] sm:$0xff] %vm3035, %v3018
  %3224 = vst.msk [vmem:[%s3 + $0x5e0] sm:$0xff] %vm3035, %v3020
  %3225 = vst.msk [vmem:[%s3 + $0x5e8] sm:$0xff] %vm3035, %v3022
  %3226 = vst.msk [vmem:[%s3 + $0x5f0] sm:$0xff] %vm3035, %v3024
  %3227 = vst.msk [vmem:[%s3 + $0x5f8] sm:$0xff] %vm3035, %v3026
  %3228 = vst.msk [vmem:[%s3 + $0x600] sm:$0xff] %vm3035, %v3028
  %3229 = vst.msk [vmem:[%s3 + $0x608] sm:$0xff] %vm3035, %v3030
  %3230 = vst.msk [vmem:[%s3 + $0x610] sm:$0xff] %vm3035, %v3032
  %3231 = vst.msk [vmem:[%s3 + $0x618] sm:$0xff] %vm3035, %v3034
  // Predicated region
  $region14: #{lenet_forward.7} parent=0 // pred_check
    _
  $region15: #{lenet_forward.7} parent=0 // pred_check_branch
    %3233 = sbr.rel (0) target = $region17
  $region16: #{lenet_forward.7} parent=0 // pred_region
    _
  $region17: #{lenet_forward.7} parent=0 // pred_fallthru
    _
  // Predicated region
  $region18: #{lenet_forward.7} parent=0 // pred_check
    _
  $region19: #{lenet_forward.7} parent=0 // pred_check_branch
    %3235 = sbr.rel (0) target = $region21
  $region20: #{lenet_forward.7} parent=0 // pred_region
    _
  $region21: #{lenet_forward.7} parent=0 // pred_fallthru
    _

// kernel: lenet_forward.10
$region0: #{lenet_forward.10}
  #allocation0 [shape = 'u32[]', space=smem, size = 0x4, offset = 0x4, fixed_abs, tag = 'smem constant byte address 0x4 - core index']
  #allocation1 [shape = 'u32[144,128]{1,0:T(1,128)}', space=vmem, size = 0x12000, scoped, tag = 'internal scratch']
  %s0 = inlined_call_operand.vmem [shape: f32[2,10,5,2,16], index: 0, kind: input, shape index: {}]
  %s1 = inlined_call_operand.vmem [shape: f32[2,5,5,16], index: 1, kind: output, shape index: {}]
  %s2 = sld [smem:[#allocation0]]
  $region112: #{lenet_forward.10} parent=0
    _
  %s4 = ssub.s32 1, %s2
  %s5 = scalar_select 0, %s4, %s2
  $region1: #{lenet_forward.10} parent=0
    #allocation2 [shape = 'u8[40960]{0}', space=vmem, size = 0xa000, scoped, tag = 'input window, operand 0']
    #allocation3 [shape = 'u8[16384]{0}', space=vmem, size = 0x4000, scoped, tag = 'output window, operand 0']
    loop: start=0, step=1, limit=7
    $region2: #{lenet_forward.10} parent=1 // loop_pre_header
      _
    $region3: #{lenet_forward.10} parent=1 // loop_header
      %s7 = sphi 0, %s11
      %p8 = scmp.ge.s32.totalorder %s7, 7
      %s17 = sphi 0, %s19
      %s20 = sphi 0, %s17
      %s21 = sphi 0, %s20
      %s37 = sphi 0, %s21
      %s43 = sphi 0, %s45
      %s46 = sphi 0, %s43
      %s47 = sphi 0, %s46
      %s63 = sphi 0, %s47
    $region4: #{lenet_forward.10} parent=1 // loop_header_branch
      %10 = sbr.rel (%p8) target = $region8
    $region5: #{lenet_forward.10} parent=1 // loop_body
      %s12 = ssub.s32 %s7, 1
      %s13 = ssub.s32 %s7, 2
      %s14 = sadd.s32 %s7, 1
      %s15 = ssub.s32 %s7, %s14
      %p16 = scmp.eq.s32.totalorder %s15, 0
      %s18 = sadd.s32 %s17, 1
      %s19 = scalar_select %p16, %s17, %s18
      %p22 = pneg %p16
      %p23 = scmp.eq.s32.totalorder %s7, 4
      %p24 = por %p22, %p23
      %p25 = scmp.ne.s32.totalorder %s17, %s20
      %p26 = scmp.eq.s32.totalorder %s7, 0
      %p27 = por %p25, %p26
      %p28 = scmp.ne.s32.totalorder %s17, %s20
      %p29 = scmp.eq.s32.totalorder %s12, 4
      %p30 = por %p28, %p29
      %p31 = scmp.ne.s32.totalorder %s20, %s21
      %p32 = scmp.eq.s32.totalorder %s12, 0
      %p33 = por %p31, %p32
      %p34 = scmp.ne.s32.totalorder %s20, %s21
      %p35 = scmp.eq.s32.totalorder %s13, 4
      %p36 = por %p34, %p35
      %p38 = scmp.ne.s32.totalorder %s21, %s37
      %p39 = scmp.eq.s32.totalorder %s13, 0
      %p40 = por %p38, %p39
      %s41 = ssub.s32 %s7, %s14
      %p42 = scmp.eq.s32.totalorder %s41, 0
      %s44 = sadd.s32 %s43, 1
      %s45 = scalar_select %p42, %s43, %s44
      %p48 = pneg %p42
      %p49 = scmp.eq.s32.totalorder %s7, 4
      %p50 = por %p48, %p49
      %p51 = scmp.ne.s32.totalorder %s43, %s46
      %p52 = scmp.eq.s32.totalorder %s7, 0
      %p53 = por %p51, %p52
      %p54 = scmp.ne.s32.totalorder %s43, %s46
      %p55 = scmp.eq.s32.totalorder %s12, 4
      %p56 = por %p54, %p55
      %p57 = scmp.ne.s32.totalorder %s46, %s47
      %p58 = scmp.eq.s32.totalorder %s12, 0
      %p59 = por %p57, %p58
      %p60 = scmp.ne.s32.totalorder %s46, %s47
      %p61 = scmp.eq.s32.totalorder %s13, 4
      %p62 = por %p60, %p61
      %p64 = scmp.ne.s32.totalorder %s47, %s63
      %p65 = scmp.eq.s32.totalorder %s13, 0
      %p66 = por %p64, %p65
      %p67 = scmp.le.s32.totalorder 1, %s7
      %p68 = scmp.lt.s32.totalorder %s7, 6
      %p69 = pnand %p67, %p68
      %p70 = pneg %p69
      // Predicated region
      $region9: #{lenet_forward.10} parent=5 // pred_check
        _
      $region10: #{lenet_forward.10} parent=5 // pred_check_branch
        %72 = sbr.rel (%p69) target = $region12
      $region11: #{lenet_forward.10} parent=5 // pred_region
        %s73 = ssub.s32 %s7, 1
      $region12: #{lenet_forward.10} parent=5 // pred_fallthru
        _
      %p74 = scmp.lt.s32.totalorder %s7, 5
      // Predicated region
      $region13: #{lenet_forward.10} parent=5 // pred_check
        %p75 = pneg %p74
      $region14: #{lenet_forward.10} parent=5 // pred_check_branch
        %77 = sbr.rel (%p75) target = $region16
      $region15: #{lenet_forward.10} parent=5 // pred_region
        // Predicated region
        $region17: #{lenet_forward.10} parent=15 // pred_check
          %p78 = pneg %p27
        $region18: #{lenet_forward.10} parent=15 // pred_check_branch
          %80 = sbr.rel (%p78) target = $region20
        $region19: #{lenet_forward.10} parent=15 // pred_region
          %s81 = sand.u32 %s17, 1
          %s82 = sand.u32 %s17, 1
          %s83 = smul.addr %s82, 40
          %s84 = scalar_lea.vmem [#allocation2], %s83
          %s85 = smul.u32 2, %s7
          %s86 = smul.addr %s85, 5
          %s87 = smul.addr %s86, 2
          %s88 = scalar_lea.vmem %s0, %s87
          // Predicated region
          $region21: #{lenet_forward.10} parent=19 // pred_check
            _
          $region22: #{lenet_forward.10} parent=19 // pred_check_branch
            %90 = sbr.rel (0) target = $region24
          $region23: #{lenet_forward.10} parent=19 // pred_region
            // Predicated region
            $region25: #{lenet_forward.10} parent=23 // pred_check
              _
            $region26: #{lenet_forward.10} parent=23 // pred_check_branch
              %92 = sbr.rel target = $region28
            $region27: #{lenet_forward.10} parent=23 // pred_region
              // Predicated region
              $region40: #{lenet_forward.10} parent=27 // pred_check
                _
              $region41: #{lenet_forward.10} parent=27 // pred_check_branch
                %145 = sbr.rel (0) target = $region43
              $region42: #{lenet_forward.10} parent=27 // pred_region
                loop: start=0, step=1, limit=1
                $region44: #{lenet_forward.10} parent=42 // loop_pre_header
                  _
                $region45: #{lenet_forward.10} parent=42 // loop_header
                  %s147 = sphi 0, %s151
                  %p148 = scmp.ge.s32.totalorder %s147, 1
                  %s152 = sphi %s88, %s88
                  %s153 = sphi %s84, %s84
                $region46: #{lenet_forward.10} parent=42 // loop_header_branch
                  %150 = sbr.rel (%p148) target = $region50
                $region47: #{lenet_forward.10} parent=42 // loop_body
                  _
                $region48: #{lenet_forward.10} parent=42 // loop_footer
                  %s151 = sadd.s32 1, %s147
                $region49: #{lenet_forward.10} parent=42 // loop_footer_branch
                  %146 = sbr.rel target = $region45
                $region50: #{lenet_forward.10} parent=42 // loop_exit
                  _
                loop: start=0, step=1, limit=1
                $region51: #{lenet_forward.10} parent=42 // loop_pre_header
                  _
                $region52: #{lenet_forward.10} parent=42 // loop_header
                  %s156 = sphi 0, %s160
                  %p157 = scmp.ge.s32.totalorder %s156, 1
                  %s161 = sphi %s88, %s88
                  %s162 = sphi %s84, %s84
                $region53: #{lenet_forward.10} parent=42 // loop_header_branch
                  %159 = sbr.rel (%p157) target = $region57
                $region54: #{lenet_forward.10} parent=42 // loop_body
                  %v163 = vld [vmem:[%s161] sm:$0x3]
                  %164 = vst [vmem:[%s162] sm:$0x3] %v163
                  %v165 = vld [vmem:[%s161 + $0x2] sm:$0x3]
                  %166 = vst [vmem:[%s162 + $0x2] sm:$0x3] %v165
                  %v167 = vld [vmem:[%s161 + $0x4] sm:$0x3]
                  %168 = vst [vmem:[%s162 + $0x4] sm:$0x3] %v167
                  %v169 = vld [vmem:[%s161 + $0x6] sm:$0x3]
                  %170 = vst [vmem:[%s162 + $0x6] sm:$0x3] %v169
                  %v171 = vld [vmem:[%s161 + $0x8] sm:$0x3]
                  %172 = vst [vmem:[%s162 + $0x8] sm:$0x3] %v171
                  %v173 = vld [vmem:[%s161 + $0xa] sm:$0x3]
                  %174 = vst [vmem:[%s162 + $0xa] sm:$0x3] %v173
                  %v175 = vld [vmem:[%s161 + $0xc] sm:$0x3]
                  %176 = vst [vmem:[%s162 + $0xc] sm:$0x3] %v175
                  %v177 = vld [vmem:[%s161 + $0xe] sm:$0x3]
                  %178 = vst [vmem:[%s162 + $0xe] sm:$0x3] %v177
                  %v179 = vld [vmem:[%s161 + $0x10] sm:$0x3]
                  %180 = vst [vmem:[%s162 + $0x10] sm:$0x3] %v179
                  %v181 = vld [vmem:[%s161 + $0x12] sm:$0x3]
                  %182 = vst [vmem:[%s162 + $0x12] sm:$0x3] %v181
                  %v183 = vld [vmem:[%s161 + $0x64] sm:$0x3]
                  %184 = vst [vmem:[%s162 + $0x14] sm:$0x3] %v183
                  %v185 = vld [vmem:[%s161 + $0x66] sm:$0x3]
                  %186 = vst [vmem:[%s162 + $0x16] sm:$0x3] %v185
                  %v187 = vld [vmem:[%s161 + $0x68] sm:$0x3]
                  %188 = vst [vmem:[%s162 + $0x18] sm:$0x3] %v187
                  %v189 = vld [vmem:[%s161 + $0x6a] sm:$0x3]
                  %190 = vst [vmem:[%s162 + $0x1a] sm:$0x3] %v189
                  %v191 = vld [vmem:[%s161 + $0x6c] sm:$0x3]
                  %192 = vst [vmem:[%s162 + $0x1c] sm:$0x3] %v191
                  %v193 = vld [vmem:[%s161 + $0x6e] sm:$0x3]
                  %194 = vst [vmem:[%s162 + $0x1e] sm:$0x3] %v193
                  %v195 = vld [vmem:[%s161 + $0x70] sm:$0x3]
                  %196 = vst [vmem:[%s162 + $0x20] sm:$0x3] %v195
                  %v197 = vld [vmem:[%s161 + $0x72] sm:$0x3]
                  %198 = vst [vmem:[%s162 + $0x22] sm:$0x3] %v197
                  %v199 = vld [vmem:[%s161 + $0x74] sm:$0x3]
                  %200 = vst [vmem:[%s162 + $0x24] sm:$0x3] %v199
                  %v201 = vld [vmem:[%s161 + $0x76] sm:$0x3]
                  %202 = vst [vmem:[%s162 + $0x26] sm:$0x3] %v201
                $region55: #{lenet_forward.10} parent=42 // loop_footer
                  %s160 = sadd.s32 1, %s156
                $region56: #{lenet_forward.10} parent=42 // loop_footer_branch
                  %155 = sbr.rel target = $region52
                $region57: #{lenet_forward.10} parent=42 // loop_exit
                  _
              $region43: #{lenet_forward.10} parent=27 // pred_fallthru
                _
            $region28: #{lenet_forward.10} parent=23 // pred_fallthru
              _
            // Predicated region
            $region29: #{lenet_forward.10} parent=23 // pred_check
              _
            $region30: #{lenet_forward.10} parent=23 // pred_check_branch
              %94 = sbr.rel (0) target = $region32
            $region31: #{lenet_forward.10} parent=23 // pred_region
              loop: start=0, step=1, limit=1
              $region33: #{lenet_forward.10} parent=31 // loop_pre_header
                _
              $region34: #{lenet_forward.10} parent=31 // loop_header
                %s97 = sphi 0, %s101
                %p98 = scmp.ge.s32.totalorder %s97, 1
                %s102 = sphi %s88, %s88
                %s103 = sphi %s84, %s84
              $region35: #{lenet_forward.10} parent=31 // loop_header_branch
                %100 = sbr.rel (%p98) target = $region39
              $region36: #{lenet_forward.10} parent=31 // loop_body
                %v104 = vld [vmem:[%s102] sm:$0x3]
                %105 = vst [vmem:[%s103] sm:$0x3] %v104
                %v106 = vld [vmem:[%s102 + $0x2] sm:$0x3]
                %107 = vst [vmem:[%s103 + $0x2] sm:$0x3] %v106
                %v108 = vld [vmem:[%s102 + $0x4] sm:$0x3]
                %109 = vst [vmem:[%s103 + $0x4] sm:$0x3] %v108
                %v110 = vld [vmem:[%s102 + $0x6] sm:$0x3]
                %111 = vst [vmem:[%s103 + $0x6] sm:$0x3] %v110
                %v112 = vld [vmem:[%s102 + $0x8] sm:$0x3]
                %113 = vst [vmem:[%s103 + $0x8] sm:$0x3] %v112
                %v114 = vld [vmem:[%s102 + $0xa] sm:$0x3]
                %115 = vst [vmem:[%s103 + $0xa] sm:$0x3] %v114
                %v116 = vld [vmem:[%s102 + $0xc] sm:$0x3]
                %117 = vst [vmem:[%s103 + $0xc] sm:$0x3] %v116
                %v118 = vld [vmem:[%s102 + $0xe] sm:$0x3]
                %119 = vst [vmem:[%s103 + $0xe] sm:$0x3] %v118
                %v120 = vld [vmem:[%s102 + $0x10] sm:$0x3]
                %121 = vst [vmem:[%s103 + $0x10] sm:$0x3] %v120
                %v122 = vld [vmem:[%s102 + $0x12] sm:$0x3]
                %123 = vst [vmem:[%s103 + $0x12] sm:$0x3] %v122
                %v124 = vld [vmem:[%s102 + $0x64] sm:$0x3]
                %125 = vst [vmem:[%s103 + $0x14] sm:$0x3] %v124
                %v126 = vld [vmem:[%s102 + $0x66] sm:$0x3]
                %127 = vst [vmem:[%s103 + $0x16] sm:$0x3] %v126
                %v128 = vld [vmem:[%s102 + $0x68] sm:$0x3]
                %129 = vst [vmem:[%s103 + $0x18] sm:$0x3] %v128
                %v130 = vld [vmem:[%s102 + $0x6a] sm:$0x3]
                %131 = vst [vmem:[%s103 + $0x1a] sm:$0x3] %v130
                %v132 = vld [vmem:[%s102 + $0x6c] sm:$0x3]
                %133 = vst [vmem:[%s103 + $0x1c] sm:$0x3] %v132
                %v134 = vld [vmem:[%s102 + $0x6e] sm:$0x3]
                %135 = vst [vmem:[%s103 + $0x1e] sm:$0x3] %v134
                %v136 = vld [vmem:[%s102 + $0x70] sm:$0x3]
                %137 = vst [vmem:[%s103 + $0x20] sm:$0x3] %v136
                %v138 = vld [vmem:[%s102 + $0x72] sm:$0x3]
                %139 = vst [vmem:[%s103 + $0x22] sm:$0x3] %v138
                %v140 = vld [vmem:[%s102 + $0x74] sm:$0x3]
                %141 = vst [vmem:[%s103 + $0x24] sm:$0x3] %v140
                %v142 = vld [vmem:[%s102 + $0x76] sm:$0x3]
                %143 = vst [vmem:[%s103 + $0x26] sm:$0x3] %v142
              $region37: #{lenet_forward.10} parent=31 // loop_footer
                %s101 = sadd.s32 1, %s97
              $region38: #{lenet_forward.10} parent=31 // loop_footer_branch
                %96 = sbr.rel target = $region34
              $region39: #{lenet_forward.10} parent=31 // loop_exit
                _
            $region32: #{lenet_forward.10} parent=23 // pred_fallthru
              _
          $region24: #{lenet_forward.10} parent=19 // pred_fallthru
            _
          %203 = vnop
        $region20: #{lenet_forward.10} parent=15 // pred_fallthru
          _
      $region16: #{lenet_forward.10} parent=5 // pred_fallthru
        _
      %p204 = scmp.le.s32.totalorder 1, %s7
      %p205 = scmp.lt.s32.totalorder %s7, 6
      %p206 = pnand %p204, %p205
      %p207 = pneg %p206
      // Predicated region
      $region58: #{lenet_forward.10} parent=5 // pred_check
        _
      $region59: #{lenet_forward.10} parent=5 // pred_check_branch
        %209 = sbr.rel (%p206) target = $region61
      $region60: #{lenet_forward.10} parent=5 // pred_region
        %s210 = ssub.s32 %s7, 1
        %s211 = sand.u32 %s20, 1
        %s212 = sand.u32 %s20, 1
        %s213 = smul.addr %s212, 40
        %s214 = scalar_lea.vmem [#allocation2], %s213
        // Predicated region
        $region62: #{lenet_forward.10} parent=60 // pred_check
          %p215 = pneg %p33
        $region63: #{lenet_forward.10} parent=60 // pred_check_branch
          %217 = sbr.rel (%p215) target = $region65
        $region64: #{lenet_forward.10} parent=60 // pred_region
          _
        $region65: #{lenet_forward.10} parent=60 // pred_fallthru
          _
        %s218 = sand.u32 %s20, 1
        %s219 = sand.u32 %s20, 1
        %s220 = smul.addr %s219, 40
        %s221 = scalar_lea.vmem [#allocation2], %s220
        %p222 = pneg %p33
        %p223 = pneg %p30
        %p224 = pneg %p59
        %p225 = pneg %p56
        %s226 = sand.u32 %s46, 1
        %s227 = sand.u32 %s46, 1
        %s228 = smul.addr %s227, 16
        %s229 = scalar_lea.vmem [#allocation3], %s228
        %s230 = smul.u32 2, %s12
        %v231 = vld [vmem:[%s214] sm:$0x3]
        %v232 = vld [vmem:[%s214 + $0x2] sm:$0x3]
        %v233 = vld [vmem:[%s214 + $0x4] sm:$0x3]
        %v234 = vld [vmem:[%s214 + $0x6] sm:$0x3]
        %v235 = vld [vmem:[%s214 + $0x8] sm:$0x3]
        %v236 = vld [vmem:[%s214 + $0xa] sm:$0x3]
        %v237 = vld [vmem:[%s214 + $0xc] sm:$0x3]
        %v238 = vld [vmem:[%s214 + $0xe] sm:$0x3]
        %v239 = vld [vmem:[%s214 + $0x10] sm:$0x3]
        %v240 = vld [vmem:[%s214 + $0x12] sm:$0x3]
        %v241 = vld [vmem:[%s214 + $0x14] sm:$0x3]
        %v242 = vld [vmem:[%s214 + $0x16] sm:$0x3]
        %v243 = vld [vmem:[%s214 + $0x18] sm:$0x3]
        %v244 = vld [vmem:[%s214 + $0x1a] sm:$0x3]
        %v245 = vld [vmem:[%s214 + $0x1c] sm:$0x3]
        %v246 = vld [vmem:[%s214 + $0x1e] sm:$0x3]
        %v247 = vld [vmem:[%s214 + $0x20] sm:$0x3]
        %v248 = vld [vmem:[%s214 + $0x22] sm:$0x3]
        %v249 = vld [vmem:[%s214 + $0x24] sm:$0x3]
        %v250 = vld [vmem:[%s214 + $0x26] sm:$0x3]
        %v261 = vrot.slane %v231, 1
        %v262 = vrot.slane %v232, 1
        %v263 = vrot.slane %v233, 1
        %v264 = vrot.slane %v234, 1
        %v265 = vrot.slane %v235, 1
        %v266 = vrot.slane %v241, 1
        %v267 = vrot.slane %v242, 1
        %v268 = vrot.slane %v243, 1
        %v269 = vrot.slane %v244, 1
        %v270 = vrot.slane %v245, 1
        %v281 = vadd.f32 %v231, %v261
        %v282 = vadd.f32 %v232, %v262
        %v283 = vadd.f32 %v233, %v263
        %v284 = vadd.f32 %v234, %v264
        %v285 = vadd.f32 %v235, %v265
        %v286 = vadd.f32 %v241, %v266
        %v287 = vadd.f32 %v242, %v267
        %v288 = vadd.f32 %v243, %v268
        %v289 = vadd.f32 %v244, %v269
        %v290 = vadd.f32 %v245, %v270
        %v291 = vadd.f32 %v281, %v236
        %v292 = vadd.f32 %v282, %v237
        %v293 = vadd.f32 %v283, %v238
        %v294 = vadd.f32 %v284, %v239
        %v295 = vadd.f32 %v285, %v240
        %v296 = vadd.f32 %v286, %v246
        %v297 = vadd.f32 %v287, %v247
        %v298 = vadd.f32 %v288, %v248
        %v299 = vadd.f32 %v289, %v249
        %v300 = vadd.f32 %v290, %v250
        %v311 = vrot.slane %v236, 1
        %v312 = vrot.slane %v237, 1
        %v313 = vrot.slane %v238, 1
        %v314 = vrot.slane %v239, 1
        %v315 = vrot.slane %v240, 1
        %v316 = vrot.slane %v246, 1
        %v317 = vrot.slane %v247, 1
        %v318 = vrot.slane %v248, 1
        %v319 = vrot.slane %v249, 1
        %v320 = vrot.slane %v250, 1
        %v331 = vadd.f32 %v291, %v311
        %v332 = vadd.f32 %v292, %v312
        %v333 = vadd.f32 %v293, %v313
        %v334 = vadd.f32 %v294, %v314
        %v335 = vadd.f32 %v295, %v315
        %v336 = vadd.f32 %v296, %v316
        %v337 = vadd.f32 %v297, %v317
        %v338 = vadd.f32 %v298, %v318
        %v339 = vadd.f32 %v299, %v319
        %v340 = vadd.f32 %v300, %v320
        %v341 = vmul.f32 %v331, 0.25
        %v342 = vmul.f32 %v332, 0.25
        %v343 = vmul.f32 %v333, 0.25
        %v344 = vmul.f32 %v334, 0.25
        %v345 = vmul.f32 %v335, 0.25
        %v346 = vmul.f32 %v336, 0.25
        %v347 = vmul.f32 %v337, 0.25
        %v348 = vmul.f32 %v338, 0.25
        %v349 = vmul.f32 %v339, 0.25
        %v350 = vmul.f32 %v340, 0.25
        %v361 = vrot.slane %v342, 7
        %vm362 = vcmask 1041409
        %v363 = vsel %vm362, %v361, %v341
        %v364 = vrot.slane %v343, 6
        %vm365 = vcmask 1042434
        %v366 = vsel %vm365, %v364, %v363
        %v367 = vrot.slane %v344, 5
        %vm368 = vcmask 1043459
        %v369 = vsel %vm368, %v367, %v366
        %v370 = vrot.slane %v345, 4
        %vm371 = vcmask 1044484
        %v372 = vsel %vm371, %v370, %v369
        %v373 = vrot.slane %v347, 7
        %v374 = vsel %vm362, %v373, %v346
        %v375 = vrot.slane %v348, 6
        %v376 = vsel %vm365, %v375, %v374
        %v377 = vrot.slane %v349, 5
        %v378 = vsel %vm368, %v377, %v376
        %v379 = vrot.slane %v350, 4
        %v380 = vsel %vm371, %v379, %v378
        %vm383 = vcmask 126976
        %384 = vst.msk [vmem:[%s229] sm:$0x1f] %vm383, %v372
        %385 = vst.msk [vmem:[%s229 + $0x8] sm:$0x1f] %vm383, %v380
        %s386 = sand.u32 %s46, 1
        %s387 = sand.u32 %s46, 1
        %s388 = smul.addr %s387, 16
        %s389 = scalar_lea.vmem [#allocation3], %s388
        // Predicated region
        $region66: #{lenet_forward.10} parent=60 // pred_check
          %p390 = pneg %p56
        $region67: #{lenet_forward.10} parent=60 // pred_check_branch
          %392 = sbr.rel (%p390) target = $region69
        $region68: #{lenet_forward.10} parent=60 // pred_region
          %s393 = smul.addr %s12, 8
          %s394 = scalar_lea.vmem %s1, %s393
          // Predicated region
          $region70: #{lenet_forward.10} parent=68 // pred_check
            _
          $region71: #{lenet_forward.10} parent=68 // pred_check_branch
            %396 = sbr.rel (0) target = $region73
          $region72: #{lenet_forward.10} parent=68 // pred_region
            // Predicated region
            $region74: #{lenet_forward.10} parent=72 // pred_check
              _
            $region75: #{lenet_forward.10} parent=72 // pred_check_branch
              %398 = sbr.rel (0) target = $region77
            $region76: #{lenet_forward.10} parent=72 // pred_region
              // Predicated region
              $region89: #{lenet_forward.10} parent=76 // pred_check
                _
              $region90: #{lenet_forward.10} parent=76 // pred_check_branch
                %415 = sbr.rel (0) target = $region92
              $region91: #{lenet_forward.10} parent=76 // pred_region
                loop: start=0, step=1, limit=1
                $region93: #{lenet_forward.10} parent=91 // loop_pre_header
                  _
                $region94: #{lenet_forward.10} parent=91 // loop_header
                  %s417 = sphi 0, %s421
                  %p418 = scmp.ge.s32.totalorder %s417, 1
                  %s422 = sphi %s389, %s389
                  %s423 = sphi %s394, %s394
                $region95: #{lenet_forward.10} parent=91 // loop_header_branch
                  %420 = sbr.rel (%p418) target = $region99
                $region96: #{lenet_forward.10} parent=91 // loop_body
                  %v424 = vld [vmem:[%s422] sm:$0xff]
                  %425 = vst [vmem:[%s423] sm:$0xff] %v424
                  %v426 = vld [vmem:[%s422 + $0x8] sm:$0xff]
                  %427 = vst [vmem:[%s423 + $0x28] sm:$0xff] %v426
                $region97: #{lenet_forward.10} parent=91 // loop_footer
                  %s421 = sadd.s32 1, %s417
                $region98: #{lenet_forward.10} parent=91 // loop_footer_branch
                  %416 = sbr.rel target = $region94
                $region99: #{lenet_forward.10} parent=91 // loop_exit
                  _
              $region92: #{lenet_forward.10} parent=76 // pred_fallthru
                _
              // Predicated region
              $region100: #{lenet_forward.10} parent=76 // pred_check
                _
              $region101: #{lenet_forward.10} parent=76 // pred_check_branch
                %429 = sbr.rel target = $region103
              $region102: #{lenet_forward.10} parent=76 // pred_region
                _
              $region103: #{lenet_forward.10} parent=76 // pred_fallthru
                _
            $region77: #{lenet_forward.10} parent=72 // pred_fallthru
              _
            // Predicated region
            $region78: #{lenet_forward.10} parent=72 // pred_check
              _
            $region79: #{lenet_forward.10} parent=72 // pred_check_branch
              %400 = sbr.rel target = $region81
            $region80: #{lenet_forward.10} parent=72 // pred_region
              loop: start=0, step=1, limit=1
              $region82: #{lenet_forward.10} parent=80 // loop_pre_header
                _
              $region83: #{lenet_forward.10} parent=80 // loop_header
                %s403 = sphi 0, %s407
                %p404 = scmp.ge.s32.totalorder %s403, 1
                %s408 = sphi %s389, %s389
                %s409 = sphi %s394, %s394
              $region84: #{lenet_forward.10} parent=80 // loop_header_branch
                %406 = sbr.rel (%p404) target = $region88
              $region85: #{lenet_forward.10} parent=80 // loop_body
                %v410 = vld [vmem:[%s408] sm:$0xff]
                %411 = vst [vmem:[%s409] sm:$0xff] %v410
                %v412 = vld [vmem:[%s408 + $0x8] sm:$0xff]
                %413 = vst [vmem:[%s409 + $0x28] sm:$0xff] %v412
              $region86: #{lenet_forward.10} parent=80 // loop_footer
                %s407 = sadd.s32 1, %s403
              $region87: #{lenet_forward.10} parent=80 // loop_footer_branch
                %402 = sbr.rel target = $region83
              $region88: #{lenet_forward.10} parent=80 // loop_exit
                _
            $region81: #{lenet_forward.10} parent=72 // pred_fallthru
              _
          $region73: #{lenet_forward.10} parent=68 // pred_fallthru
            _
          %430 = vnop
        $region69: #{lenet_forward.10} parent=60 // pred_fallthru
          _
      $region61: #{lenet_forward.10} parent=5 // pred_fallthru
        _
      %p431 = scmp.le.s32.totalorder 2, %s7
      // Predicated region
      $region104: #{lenet_forward.10} parent=5 // pred_check
        %p432 = pneg %p431
      $region105: #{lenet_forward.10} parent=5 // pred_check_branch
        %434 = sbr.rel (%p432) target = $region107
      $region106: #{lenet_forward.10} parent=5 // pred_region
        %s435 = ssub.s32 %s7, 2
        // Predicated region
        $region108: #{lenet_forward.10} parent=106 // pred_check
          %p436 = pneg %p62
        $region109: #{lenet_forward.10} parent=106 // pred_check_branch
          %438 = sbr.rel (%p436) target = $region111
        $region110: #{lenet_forward.10} parent=106 // pred_region
          %s439 = sand.u32 %s47, 1
          %s440 = sand.u32 %s47, 1
          %s441 = smul.addr %s440, 16
          %s442 = scalar_lea.vmem [#allocation3], %s441
        $region111: #{lenet_forward.10} parent=106 // pred_fallthru
          _
      $region107: #{lenet_forward.10} parent=5 // pred_fallthru
        _
    $region6: #{lenet_forward.10} parent=1 // loop_footer
      %s11 = sadd.s32 1, %s7
    $region7: #{lenet_forward.10} parent=1 // loop_footer_branch
      %6 = sbr.rel target = $region3
    $region8: #{lenet_forward.10} parent=1 // loop_exit
      _

// kernel: lenet_forward.9
$region0: #{lenet_forward.9}
  #allocation0 [shape = 'u32[]', space=smem, size = 0x4, offset = 0x4, fixed_abs, tag = 'smem constant byte address 0x4 - core index']
  #allocation1 [shape = 'u32[144,128]{1,0:T(1,128)}', space=vmem, size = 0x12000, scoped, tag = 'internal scratch']
  %s0 = inlined_call_operand.vmem [shape: f32[200,150], index: 0, kind: input, shape index: {}]
  %s1 = inlined_call_operand.vmem [shape: f32[150,16], index: 1, kind: input, shape index: {}]
  %s2 = inlined_call_operand.vmem [shape: f32[1,16], index: 2, kind: input, shape index: {}]
  %s3 = inlined_call_operand.vmem [shape: f32[200,16], index: 3, kind: output, shape index: {}]
  %s4 = sld [smem:[#allocation0]]
  $region22: #{lenet_forward.9} parent=0
    _
  %s6 = ssub.s32 1, %s4
  %s7 = scalar_select 0, %s6, %s4
  // Predicated region
  $region2: #{lenet_forward.9} parent=0 // pred_check
    _
  $region3: #{lenet_forward.9} parent=0 // pred_check_branch
    %9 = sbr.rel (0) target = $region5
  $region4: #{lenet_forward.9} parent=0 // pred_region
    _
  $region5: #{lenet_forward.9} parent=0 // pred_fallthru
    _
  // Predicated region
  $region6: #{lenet_forward.9} parent=0 // pred_check
    _
  $region7: #{lenet_forward.9} parent=0 // pred_check_branch
    %11 = sbr.rel (0) target = $region9
  $region8: #{lenet_forward.9} parent=0 // pred_region
    _
  $region9: #{lenet_forward.9} parent=0 // pred_fallthru
    _
  // Predicated region
  $region10: #{lenet_forward.9} parent=0 // pred_check
    _
  $region11: #{lenet_forward.9} parent=0 // pred_check_branch
    %13 = sbr.rel (0) target = $region13
  $region12: #{lenet_forward.9} parent=0 // pred_region
    _
  $region13: #{lenet_forward.9} parent=0 // pred_fallthru
    _
  %v14 = vld [vmem:[%s0] sm:$0xff]
  %v15 = vld [vmem:[%s0 + $0x8] sm:$0xff]
  %v16 = vld [vmem:[%s0 + $0x10] sm:$0xff]
  %v17 = vld [vmem:[%s0 + $0x18] sm:$0xff]
  %v18 = vld [vmem:[%s0 + $0x20] sm:$0xff]
  %v19 = vld [vmem:[%s0 + $0x28] sm:$0xff]
  %v20 = vld [vmem:[%s0 + $0x30] sm:$0xff]
  %v21 = vld [vmem:[%s0 + $0x38] sm:$0xff]
  %v22 = vld [vmem:[%s0 + $0x40] sm:$0xff]
  %v23 = vld [vmem:[%s0 + $0x48] sm:$0xff]
  %v24 = vld [vmem:[%s0 + $0x50] sm:$0xff]
  %v25 = vld [vmem:[%s0 + $0x58] sm:$0xff]
  %v26 = vld [vmem:[%s0 + $0x60] sm:$0xff]
  %v27 = vld [vmem:[%s0 + $0x68] sm:$0xff]
  %v28 = vld [vmem:[%s0 + $0x70] sm:$0xff]
  %v29 = vld [vmem:[%s0 + $0x78] sm:$0xff]
  %v30 = vld [vmem:[%s0 + $0x80] sm:$0xff]
  %v31 = vld [vmem:[%s0 + $0x88] sm:$0xff]
  %v32 = vld [vmem:[%s0 + $0x90] sm:$0xff]
  %v33 = vld [vmem:[%s0 + $0x98] sm:$0xff]
  %v34 = vld [vmem:[%s0 + $0xa0] sm:$0xff]
  %v35 = vld [vmem:[%s0 + $0xa8] sm:$0xff]
  %v36 = vld [vmem:[%s0 + $0xb0] sm:$0xff]
  %v37 = vld [vmem:[%s0 + $0xb8] sm:$0xff]
  %v38 = vld [vmem:[%s0 + $0xc0] sm:$0xff]
  %v39 = vld [vmem:[%s0 + $0xc8] sm:$0xff]
  %v40 = vld [vmem:[%s0 + $0xd0] sm:$0xff]
  %v41 = vld [vmem:[%s0 + $0xd8] sm:$0xff]
  %v42 = vld [vmem:[%s0 + $0xe0] sm:$0xff]
  %v43 = vld [vmem:[%s0 + $0xe8] sm:$0xff]
  %v44 = vld [vmem:[%s0 + $0xf0] sm:$0xff]
  %v45 = vld [vmem:[%s0 + $0xf8] sm:$0xff]
  %v46 = vld [vmem:[%s0 + $0x100] sm:$0xff]
  %v47 = vld [vmem:[%s0 + $0x108] sm:$0xff]
  %v48 = vld [vmem:[%s0 + $0x110] sm:$0xff]
  %v49 = vld [vmem:[%s0 + $0x118] sm:$0xff]
  %v50 = vld [vmem:[%s0 + $0x120] sm:$0xff]
  %v51 = vld [vmem:[%s0 + $0x128] sm:$0xff]
  %v52 = vld [vmem:[%s0 + $0x130] sm:$0xff]
  %v53 = vld [vmem:[%s0 + $0x138] sm:$0xff]
  %v54 = vld [vmem:[%s0 + $0x140] sm:$0xff]
  %v55 = vld [vmem:[%s0 + $0x148] sm:$0xff]
  %v56 = vld [vmem:[%s0 + $0x150] sm:$0xff]
  %v57 = vld [vmem:[%s0 + $0x158] sm:$0xff]
  %v58 = vld [vmem:[%s0 + $0x160] sm:$0xff]
  %v59 = vld [vmem:[%s0 + $0x168] sm:$0xff]
  %v60 = vld [vmem:[%s0 + $0x170] sm:$0xff]
  %v61 = vld [vmem:[%s0 + $0x178] sm:$0xff]
  %v62 = vld [vmem:[%s0 + $0x180] sm:$0xff]
  %v63 = vld [vmem:[%s0 + $0x188] sm:$0xff]
  %v64 = vld [vmem:[%s1] sm:$0xff]
  %v65 = vld [vmem:[%s1 + $0x8] sm:$0xff]
  %v66 = vld [vmem:[%s1 + $0x10] sm:$0xff]
  %v67 = vld [vmem:[%s1 + $0x18] sm:$0xff]
  %v68 = vld [vmem:[%s1 + $0x20] sm:$0xff]
  %v69 = vld [vmem:[%s1 + $0x28] sm:$0xff]
  %v70 = vld [vmem:[%s1 + $0x30] sm:$0xff]
  %v71 = vld [vmem:[%s1 + $0x38] sm:$0xff]
  %v72 = vld [vmem:[%s1 + $0x40] sm:$0xff]
  %v73 = vld [vmem:[%s1 + $0x48] sm:$0xff]
  %v74 = vld [vmem:[%s1 + $0x50] sm:$0xff]
  %v75 = vld [vmem:[%s1 + $0x58] sm:$0xff]
  %v76 = vld [vmem:[%s1 + $0x60] sm:$0xff]
  %v77 = vld [vmem:[%s1 + $0x68] sm:$0xff]
  %v78 = vld [vmem:[%s1 + $0x70] sm:$0xff]
  %v79 = vld [vmem:[%s1 + $0x78] sm:$0xff]
  %v80 = vld [vmem:[%s1 + $0x80] sm:$0xff]
  %v81 = vld [vmem:[%s1 + $0x88] sm:$0xff]
  %v82 = vld [vmem:[%s1 + $0x90] sm:$0x3f]
  %v83 = vld [vmem:[%s2] sm:$0x1]
  %v85 = vlaneseq
  %v86 = vshrl.u32 %v85, 7
  %v87 = vsub.s32 0, %v86
  %v88 = vrot.slane %v83, %v87
  %vm90 = vcmask 179200
  %v92 = vsel %vm90, %v15, 0
  %v95 = vsel %vm90, %v17, 0
  %v98 = vsel %vm90, %v19, 0
  %v101 = vsel %vm90, %v21, 0
  %v104 = vsel %vm90, %v23, 0
  %v107 = vsel %vm90, %v25, 0
  %v110 = vsel %vm90, %v27, 0
  %v113 = vsel %vm90, %v29, 0
  %v116 = vsel %vm90, %v31, 0
  %v119 = vsel %vm90, %v33, 0
  %v122 = vsel %vm90, %v35, 0
  %v125 = vsel %vm90, %v37, 0
  %v128 = vsel %vm90, %v39, 0
  %v131 = vsel %vm90, %v41, 0
  %v134 = vsel %vm90, %v43, 0
  %v137 = vsel %vm90, %v45, 0
  %v140 = vsel %vm90, %v47, 0
  %v143 = vsel %vm90, %v49, 0
  %v146 = vsel %vm90, %v51, 0
  %v149 = vsel %vm90, %v53, 0
  %v152 = vsel %vm90, %v55, 0
  %v155 = vsel %vm90, %v57, 0
  %v158 = vsel %vm90, %v59, 0
  %v161 = vsel %vm90, %v61, 0
  %v164 = vsel %vm90, %v63, 0
  %vm166 = vcmask 1045504
  %v168 = vsel %vm166, %v82, 0
  %170 = vmatprep.subr.mxu0 0.0
  %171 = vmatpush1.msra.mxu0 %v64
  %172 = vmatprep.subr.mxu0 0.0
  %173 = vmatpush1.msra.mxu0 %v65
  %174 = vmatprep.subr.mxu0 0.0
  %175 = vmatpush1.msra.mxu0 %v66
  %176 = vmatprep.subr.mxu0 0.0
  %177 = vmatpush1.msra.mxu0 %v67
  %178 = vmatprep.subr.mxu0 0.0
  %179 = vmatpush1.msra.mxu0 %v68
  %180 = vmatprep.subr.mxu0 0.0
  %181 = vmatpush1.msra.mxu0 %v69
  %182 = vmatprep.subr.mxu0 0.0
  %183 = vmatpush1.msra.mxu0 %v70
  %184 = vmatprep.subr.mxu0 0.0
  %185 = vmatpush1.msra.mxu0 %v71
  %186 = vmatprep.subr.mxu0 0.0
  %187 = vmatpush1.msra.mxu0 %v72
  %188 = vmatprep.subr.mxu0 0.0
  %189 = vmatpush1.msra.mxu0 %v73
  %190 = vmatprep.subr.mxu0 0.0
  %191 = vmatpush1.msra.mxu0 %v74
  %192 = vmatprep.subr.mxu0 0.0
  %193 = vmatpush1.msra.mxu0 %v75
  %194 = vmatprep.subr.mxu0 0.0
  %195 = vmatpush1.msra.mxu0 %v76
  %196 = vmatprep.subr.mxu0 0.0
  %197 = vmatpush1.msra.mxu0 %v77
  %198 = vmatprep.subr.mxu0 0.0
  %199 = vmatpush1.msra.mxu0 %v78
  %200 = vmatprep.subr.mxu0 0.0
  %201 = vmatpush1.msra.mxu0 %v79
  %202 = vmatprep.subr.mxu0 0.0
  %203 = vmatpush1.msra.mxu0 %v80
  %204 = vmatprep.subr.mxu0 0.0
  %205 = vmatpush1.msra.mxu0 %v81
  %206 = vmatprep.subr.mxu0 0.0
  %207 = vmatpush1.msra.mxu0 %v168
  %208 = vmatprep.subr.mxu0 0.0
  %209 = vmatpush1.msra.mxu0 0.0
  %210 = vmatprep.subr.mxu0 0.0
  %211 = vmatpush1.msra.mxu0 0.0
  %212 = vmatprep.subr.mxu0 0.0
  %213 = vmatpush1.msra.mxu0 0.0
  %214 = vmatprep.subr.mxu0 0.0
  %215 = vmatpush1.msra.mxu0 0.0
  %216 = vmatprep.subr.mxu0 0.0
  %217 = vmatpush1.msra.mxu0 0.0
  %218 = vmatprep.subr.mxu0 0.0
  %219 = vmatpush1.msra.mxu0 0.0
  %220 = vmatprep.subr.mxu0 0.0
  %221 = vmatpush1.msra.mxu0 0.0
  %222 = vmatprep.subr.mxu0 0.0
  %223 = vmatpush1.msra.mxu0 0.0
  %224 = vmatprep.subr.mxu0 0.0
  %225 = vmatpush1.msra.mxu0 0.0
  %226 = vmatprep.subr.mxu0 0.0
  %227 = vmatpush1.msra.mxu0 0.0
  %228 = vmatprep.subr.mxu0 0.0
  %229 = vmatpush1.msra.mxu0 0.0
  %230 = vmatprep.subr.mxu0 0.0
  %231 = vmatpush1.msra.mxu0 0.0
  %232 = vmatprep.subr.mxu0 0.0
  %233 = vmatpush1.msra.mxu0 0.0
  %234 = vmatprep.mubr.f32.mxu0 %v92
  %235 = vmatmul.mubr.f32.gmra.mrb[0].mxu0 %v14
  %v236 = vpop.f32.mrb[0].mxu0
  %v237 = vadd.f32 %v88, %v236
  %v238 = vpop.f32.mrb[0].mxu0
  %239 = vmatprep.mubr.f32.mxu0 %v95
  %240 = vmatmul.mubr.f32.gmra.mrb[0].mxu0 %v16
  %v241 = vpop.f32.mrb[0].mxu0
  %v242 = vadd.f32 %v88, %v241
  %v243 = vpop.f32.mrb[0].mxu0
  %244 = vmatprep.mubr.f32.mxu0 %v98
  %245 = vmatmul.mubr.f32.gmra.mrb[0].mxu0 %v18
  %v246 = vpop.f32.mrb[0].mxu0
  %v247 = vadd.f32 %v88, %v246
  %v248 = vpop.f32.mrb[0].mxu0
  %249 = vmatprep.mubr.f32.mxu0 %v101
  %250 = vmatmul.mubr.f32.gmra.mrb[0].mxu0 %v20
  %v251 = vpop.f32.mrb[0].mxu0
  %v252 = vadd.f32 %v88, %v251
  %v253 = vpop.f32.mrb[0].mxu0
  %254 = vmatprep.mubr.f32.mxu0 %v104
  %255 = vmatmul.mubr.f32.gmra.mrb[0].mxu0 %v22
  %v256 = vpop.f32.mrb[0].mxu0
  %v257 = vadd.f32 %v88, %v256
  %v258 = vpop.f32.mrb[0].mxu0
  %259 = vmatprep.mubr.f32.mxu0 %v107
  %260 = vmatmul.mubr.f32.gmra.mrb[0].mxu0 %v24
  %v261 = vpop.f32.mrb[0].mxu0
  %v262 = vadd.f32 %v88, %v261
  %v263 = vpop.f32.mrb[0].mxu0
  %264 = vmatprep.mubr.f32.mxu0 %v110
  %265 = vmatmul.mubr.f32.gmra.mrb[0].mxu0 %v26
  %v266 = vpop.f32.mrb[0].mxu0
  %v267 = vadd.f32 %v88, %v266
  %v268 = vpop.f32.mrb[0].mxu0
  %269 = vmatprep.mubr.f32.mxu0 %v113
  %270 = vmatmul.mubr.f32.gmra.mrb[0].mxu0 %v28
  %v271 = vpop.f32.mrb[0].mxu0
  %v272 = vadd.f32 %v88, %v271
  %v273 = vpop.f32.mrb[0].mxu0
  %274 = vmatprep.mubr.f32.mxu0 %v116
  %275 = vmatmul.mubr.f32.gmra.mrb[0].mxu0 %v30
  %v276 = vpop.f32.mrb[0].mxu0
  %v277 = vadd.f32 %v88, %v276
  %v278 = vpop.f32.mrb[0].mxu0
  %279 = vmatprep.mubr.f32.mxu0 %v119
  %280 = vmatmul.mubr.f32.gmra.mrb[0].mxu0 %v32
  %v281 = vpop.f32.mrb[0].mxu0
  %v282 = vadd.f32 %v88, %v281
  %v283 = vpop.f32.mrb[0].mxu0
  %284 = vmatprep.mubr.f32.mxu0 %v122
  %285 = vmatmul.mubr.f32.gmra.mrb[0].mxu0 %v34
  %v286 = vpop.f32.mrb[0].mxu0
  %v287 = vadd.f32 %v88, %v286
  %v288 = vpop.f32.mrb[0].mxu0
  %289 = vmatprep.mubr.f32.mxu0 %v125
  %290 = vmatmul.mubr.f32.gmra.mrb[0].mxu0 %v36
  %v291 = vpop.f32.mrb[0].mxu0
  %v292 = vadd.f32 %v88, %v291
  %v293 = vpop.f32.mrb[0].mxu0
  %294 = vmatprep.mubr.f32.mxu0 %v128
  %295 = vmatmul.mubr.f32.gmra.mrb[0].mxu0 %v38
  %v296 = vpop.f32.mrb[0].mxu0
  %v297 = vadd.f32 %v88, %v296
  %v298 = vpop.f32.mrb[0].mxu0
  %299 = vmatprep.mubr.f32.mxu0 %v131
  %300 = vmatmul.mubr.f32.gmra.mrb[0].mxu0 %v40
  %v301 = vpop.f32.mrb[0].mxu0
  %v302 = vadd.f32 %v88, %v301
  %v303 = vpop.f32.mrb[0].mxu0
  %304 = vmatprep.mubr.f32.mxu0 %v134
  %305 = vmatmul.mubr.f32.gmra.mrb[0].mxu0 %v42
  %v306 = vpop.f32.mrb[0].mxu0
  %v307 = vadd.f32 %v88, %v306
  %v308 = vpop.f32.mrb[0].mxu0
  %309 = vmatprep.mubr.f32.mxu0 %v137
  %310 = vmatmul.mubr.f32.gmra.mrb[0].mxu0 %v44
  %v311 = vpop.f32.mrb[0].mxu0
  %v312 = vadd.f32 %v88, %v311
  %v313 = vpop.f32.mrb[0].mxu0
  %314 = vmatprep.mubr.f32.mxu0 %v140
  %315 = vmatmul.mubr.f32.gmra.mrb[0].mxu0 %v46
  %v316 = vpop.f32.mrb[0].mxu0
  %v317 = vadd.f32 %v88, %v316
  %v318 = vpop.f32.mrb[0].mxu0
  %319 = vmatprep.mubr.f32.mxu0 %v143
  %320 = vmatmul.mubr.f32.gmra.mrb[0].mxu0 %v48
  %v321 = vpop.f32.mrb[0].mxu0
  %v322 = vadd.f32 %v88, %v321
  %v323 = vpop.f32.mrb[0].mxu0
  %324 = vmatprep.mubr.f32.mxu0 %v146
  %325 = vmatmul.mubr.f32.gmra.mrb[0].mxu0 %v50
  %v326 = vpop.f32.mrb[0].mxu0
  %v327 = vadd.f32 %v88, %v326
  %v328 = vpop.f32.mrb[0].mxu0
  %329 = vmatprep.mubr.f32.mxu0 %v149
  %330 = vmatmul.mubr.f32.gmra.mrb[0].mxu0 %v52
  %v331 = vpop.f32.mrb[0].mxu0
  %v332 = vadd.f32 %v88, %v331
  %v333 = vpop.f32.mrb[0].mxu0
  %334 = vmatprep.mubr.f32.mxu0 %v152
  %335 = vmatmul.mubr.f32.gmra.mrb[0].mxu0 %v54
  %v336 = vpop.f32.mrb[0].mxu0
  %v337 = vadd.f32 %v88, %v336
  %v338 = vpop.f32.mrb[0].mxu0
  %339 = vmatprep.mubr.f32.mxu0 %v155
  %340 = vmatmul.mubr.f32.gmra.mrb[0].mxu0 %v56
  %v341 = vpop.f32.mrb[0].mxu0
  %v342 = vadd.f32 %v88, %v341
  %v343 = vpop.f32.mrb[0].mxu0
  %344 = vmatprep.mubr.f32.mxu0 %v158
  %345 = vmatmul.mubr.f32.gmra.mrb[0].mxu0 %v58
  %v346 = vpop.f32.mrb[0].mxu0
  %v347 = vadd.f32 %v88, %v346
  %v348 = vpop.f32.mrb[0].mxu0
  %349 = vmatprep.mubr.f32.mxu0 %v161
  %350 = vmatmul.mubr.f32.gmra.mrb[0].mxu0 %v60
  %v351 = vpop.f32.mrb[0].mxu0
  %v352 = vadd.f32 %v88, %v351
  %v353 = vpop.f32.mrb[0].mxu0
  %354 = vmatprep.mubr.f32.mxu0 %v164
  %355 = vmatmul.mubr.f32.gmra.mrb[0].mxu0 %v62
  %v356 = vpop.f32.mrb[0].mxu0
  %v357 = vadd.f32 %v88, %v356
  %v358 = vpop.f32.mrb[0].mxu0
  %359 = vdwg.mxu0
  %v360 = vsub.f32 0.0, %v237
  %v361 = vsub.f32 0.0, %v242
  %v362 = vsub.f32 0.0, %v247
  %v363 = vsub.f32 0.0, %v252
  %v364 = vsub.f32 0.0, %v257
  %v365 = vsub.f32 0.0, %v262
  %v366 = vsub.f32 0.0, %v267
  %v367 = vsub.f32 0.0, %v272
  %v368 = vsub.f32 0.0, %v277
  %v369 = vsub.f32 0.0, %v282
  %v370 = vsub.f32 0.0, %v287
  %v371 = vsub.f32 0.0, %v292
  %v372 = vsub.f32 0.0, %v297
  %v373 = vsub.f32 0.0, %v302
  %v374 = vsub.f32 0.0, %v307
  %v375 = vsub.f32 0.0, %v312
  %v376 = vsub.f32 0.0, %v317
  %v377 = vsub.f32 0.0, %v322
  %v378 = vsub.f32 0.0, %v327
  %v379 = vsub.f32 0.0, %v332
  %v380 = vsub.f32 0.0, %v337
  %v381 = vsub.f32 0.0, %v342
  %v382 = vsub.f32 0.0, %v347
  %v383 = vsub.f32 0.0, %v352
  %v384 = vsub.f32 0.0, %v357
  %v385 = vmul.f32 %v360, 1.442695
  %v386 = vpow.pop %v385
  %v387 = vmul.f32 %v361, 1.442695
  %v388 = vpow.pop %v387
  %v389 = vmul.f32 %v362, 1.442695
  %v390 = vpow.pop %v389
  %v391 = vmul.f32 %v363, 1.442695
  %v392 = vpow.pop %v391
  %v393 = vmul.f32 %v364, 1.442695
  %v394 = vpow.pop %v393
  %v395 = vmul.f32 %v365, 1.442695
  %v396 = vpow.pop %v395
  %v397 = vmul.f32 %v366, 1.442695
  %v398 = vpow.pop %v397
  %v399 = vmul.f32 %v367, 1.442695
  %v400 = vpow.pop %v399
  %v401 = vmul.f32 %v368, 1.442695
  %v402 = vpow.pop %v401
  %v403 = vmul.f32 %v369, 1.442695
  %v404 = vpow.pop %v403
  %v405 = vmul.f32 %v370, 1.442695
  %v406 = vpow.pop %v405
  %v407 = vmul.f32 %v371, 1.442695
  %v408 = vpow.pop %v407
  %v409 = vmul.f32 %v372, 1.442695
  %v410 = vpow.pop %v409
  %v411 = vmul.f32 %v373, 1.442695
  %v412 = vpow.pop %v411
  %v413 = vmul.f32 %v374, 1.442695
  %v414 = vpow.pop %v413
  %v415 = vmul.f32 %v375, 1.442695
  %v416 = vpow.pop %v415
  %v417 = vmul.f32 %v376, 1.442695
  %v418 = vpow.pop %v417
  %v419 = vmul.f32 %v377, 1.442695
  %v420 = vpow.pop %v419
  %v421 = vmul.f32 %v378, 1.442695
  %v422 = vpow.pop %v421
  %v423 = vmul.f32 %v379, 1.442695
  %v424 = vpow.pop %v423
  %v425 = vmul.f32 %v380, 1.442695
  %v426 = vpow.pop %v425
  %v427 = vmul.f32 %v381, 1.442695
  %v428 = vpow.pop %v427
  %v429 = vmul.f32 %v382, 1.442695
  %v430 = vpow.pop %v429
  %v431 = vmul.f32 %v383, 1.442695
  %v432 = vpow.pop %v431
  %v433 = vmul.f32 %v384, 1.442695
  %v434 = vpow.pop %v433
  %v435 = vadd.f32 %v386, 1.0
  %v436 = vadd.f32 %v388, 1.0
  %v437 = vadd.f32 %v390, 1.0
  %v438 = vadd.f32 %v392, 1.0
  %v439 = vadd.f32 %v394, 1.0
  %v440 = vadd.f32 %v396, 1.0
  %v441 = vadd.f32 %v398, 1.0
  %v442 = vadd.f32 %v400, 1.0
  %v443 = vadd.f32 %v402, 1.0
  %v444 = vadd.f32 %v404, 1.0
  %v445 = vadd.f32 %v406, 1.0
  %v446 = vadd.f32 %v408, 1.0
  %v447 = vadd.f32 %v410, 1.0
  %v448 = vadd.f32 %v412, 1.0
  %v449 = vadd.f32 %v414, 1.0
  %v450 = vadd.f32 %v416, 1.0
  %v451 = vadd.f32 %v418, 1.0
  %v452 = vadd.f32 %v420, 1.0
  %v453 = vadd.f32 %v422, 1.0
  %v454 = vadd.f32 %v424, 1.0
  %v455 = vadd.f32 %v426, 1.0
  %v456 = vadd.f32 %v428, 1.0
  %v457 = vadd.f32 %v430, 1.0
  %v458 = vadd.f32 %v432, 1.0
  %v459 = vadd.f32 %v434, 1.0
  %v460 = vrcp.pop %v435
  %v461 = vmul.f32 1.0, %v460
  %v462 = vrcp.pop %v436
  %v463 = vmul.f32 1.0, %v462
  %v464 = vrcp.pop %v437
  %v465 = vmul.f32 1.0, %v464
  %v466 = vrcp.pop %v438
  %v467 = vmul.f32 1.0, %v466
  %v468 = vrcp.pop %v439
  %v469 = vmul.f32 1.0, %v468
  %v470 = vrcp.pop %v440
  %v471 = vmul.f32 1.0, %v470
  %v472 = vrcp.pop %v441
  %v473 = vmul.f32 1.0, %v472
  %v474 = vrcp.pop %v442
  %v475 = vmul.f32 1.0, %v474
  %v476 = vrcp.pop %v443
  %v477 = vmul.f32 1.0, %v476
  %v478 = vrcp.pop %v444
  %v479 = vmul.f32 1.0, %v478
  %v480 = vrcp.pop %v445
  %v481 = vmul.f32 1.0, %v480
  %v482 = vrcp.pop %v446
  %v483 = vmul.f32 1.0, %v482
  %v484 = vrcp.pop %v447
  %v485 = vmul.f32 1.0, %v484
  %v486 = vrcp.pop %v448
  %v487 = vmul.f32 1.0, %v486
  %v488 = vrcp.pop %v449
  %v489 = vmul.f32 1.0, %v488
  %v490 = vrcp.pop %v450
  %v491 = vmul.f32 1.0, %v490
  %v492 = vrcp.pop %v451
  %v493 = vmul.f32 1.0, %v492
  %v494 = vrcp.pop %v452
  %v495 = vmul.f32 1.0, %v494
  %v496 = vrcp.pop %v453
  %v497 = vmul.f32 1.0, %v496
  %v498 = vrcp.pop %v454
  %v499 = vmul.f32 1.0, %v498
  %v500 = vrcp.pop %v455
  %v501 = vmul.f32 1.0, %v500
  %v502 = vrcp.pop %v456
  %v503 = vmul.f32 1.0, %v502
  %v504 = vrcp.pop %v457
  %v505 = vmul.f32 1.0, %v504
  %v506 = vrcp.pop %v458
  %v507 = vmul.f32 1.0, %v506
  %v508 = vrcp.pop %v459
  %v509 = vmul.f32 1.0, %v508
  %vm510 = vcmask 130048
  %511 = vst.msk [vmem:[%s3] sm:$0xff] %vm510, %v461
  %512 = vst.msk [vmem:[%s3 + $0x8] sm:$0xff] %vm510, %v463
  %513 = vst.msk [vmem:[%s3 + $0x10] sm:$0xff] %vm510, %v465
  %514 = vst.msk [vmem:[%s3 + $0x18] sm:$0xff] %vm510, %v467
  %515 = vst.msk [vmem:[%s3 + $0x20] sm:$0xff] %vm510, %v469
  %516 = vst.msk [vmem:[%s3 + $0x28] sm:$0xff] %vm510, %v471
  %517 = vst.msk [vmem:[%s3 + $0x30] sm:$0xff] %vm510, %v473
  %518 = vst.msk [vmem:[%s3 + $0x38] sm:$0xff] %vm510, %v475
  %519 = vst.msk [vmem:[%s3 + $0x40] sm:$0xff] %vm510, %v477
  %520 = vst.msk [vmem:[%s3 + $0x48] sm:$0xff] %vm510, %v479
  %521 = vst.msk [vmem:[%s3 + $0x50] sm:$0xff] %vm510, %v481
  %522 = vst.msk [vmem:[%s3 + $0x58] sm:$0xff] %vm510, %v483
  %523 = vst.msk [vmem:[%s3 + $0x60] sm:$0xff] %vm510, %v485
  %524 = vst.msk [vmem:[%s3 + $0x68] sm:$0xff] %vm510, %v487
  %525 = vst.msk [vmem:[%s3 + $0x70] sm:$0xff] %vm510, %v489
  %526 = vst.msk [vmem:[%s3 + $0x78] sm:$0xff] %vm510, %v491
  %527 = vst.msk [vmem:[%s3 + $0x80] sm:$0xff] %vm510, %v493
  %528 = vst.msk [vmem:[%s3 + $0x88] sm:$0xff] %vm510, %v495
  %529 = vst.msk [vmem:[%s3 + $0x90] sm:$0xff] %vm510, %v497
  %530 = vst.msk [vmem:[%s3 + $0x98] sm:$0xff] %vm510, %v499
  %531 = vst.msk [vmem:[%s3 + $0xa0] sm:$0xff] %vm510, %v501
  %532 = vst.msk [vmem:[%s3 + $0xa8] sm:$0xff] %vm510, %v503
  %533 = vst.msk [vmem:[%s3 + $0xb0] sm:$0xff] %vm510, %v505
  %534 = vst.msk [vmem:[%s3 + $0xb8] sm:$0xff] %vm510, %v507
  %535 = vst.msk [vmem:[%s3 + $0xc0] sm:$0xff] %vm510, %v509
  // Predicated region
  $region14: #{lenet_forward.9} parent=0 // pred_check
    _
  $region15: #{lenet_forward.9} parent=0 // pred_check_branch
    %537 = sbr.rel (0) target = $region17
  $region16: #{lenet_forward.9} parent=0 // pred_region
    _
  $region17: #{lenet_forward.9} parent=0 // pred_fallthru
    _
  // Predicated region
  $region18: #{lenet_forward.9} parent=0 // pred_check
    _
  $region19: #{lenet_forward.9} parent=0 // pred_check_branch
    %539 = sbr.rel (0) target = $region21
  $region20: #{lenet_forward.9} parent=0 // pred_region
    _
  $region21: #{lenet_forward.9} parent=0 // pred_fallthru
    _

// kernel: lenet_forward.11
$region0: #{lenet_forward.11}
  #allocation0 [shape = 'u32[]', space=smem, size = 0x4, offset = 0x4, fixed_abs, tag = 'smem constant byte address 0x4 - core index']
  #allocation1 [shape = 'u32[144,128]{1,0:T(1,128)}', space=vmem, size = 0x12000, scoped, tag = 'internal scratch']
  %s0 = inlined_call_operand.vmem [shape: f32[2,400], index: 0, kind: input, shape index: {}]
  %s1 = inlined_call_operand.vmem [shape: f32[400,120], index: 1, kind: input, shape index: {}]
  %s2 = inlined_call_operand.vmem [shape: f32[1,120], index: 2, kind: input, shape index: {}]
  %s3 = inlined_call_operand.vmem [shape: f32[2,120], index: 3, kind: output, shape index: {}]
  %s4 = sld [smem:[#allocation0]]
  $region22: #{lenet_forward.11} parent=0
    _
  %s6 = ssub.s32 1, %s4
  %s7 = scalar_select 0, %s6, %s4
  // Predicated region
  $region2: #{lenet_forward.11} parent=0 // pred_check
    _
  $region3: #{lenet_forward.11} parent=0 // pred_check_branch
    %9 = sbr.rel (0) target = $region5
  $region4: #{lenet_forward.11} parent=0 // pred_region
    _
  $region5: #{lenet_forward.11} parent=0 // pred_fallthru
    _
  // Predicated region
  $region6: #{lenet_forward.11} parent=0 // pred_check
    _
  $region7: #{lenet_forward.11} parent=0 // pred_check_branch
    %11 = sbr.rel (0) target = $region9
  $region8: #{lenet_forward.11} parent=0 // pred_region
    _
  $region9: #{lenet_forward.11} parent=0 // pred_fallthru
    _
  // Predicated region
  $region10: #{lenet_forward.11} parent=0 // pred_check
    _
  $region11: #{lenet_forward.11} parent=0 // pred_check_branch
    %13 = sbr.rel (0) target = $region13
  $region12: #{lenet_forward.11} parent=0 // pred_region
    _
  $region13: #{lenet_forward.11} parent=0 // pred_fallthru
    _
  %v14 = vld [vmem:[%s0] sm:$0xff]
  %v15 = vld [vmem:[%s1] sm:$0xff]
  %v16 = vld [vmem:[%s1 + $0x8] sm:$0xff]
  %v17 = vld [vmem:[%s1 + $0x10] sm:$0xff]
  %v18 = vld [vmem:[%s1 + $0x18] sm:$0xff]
  %v19 = vld [vmem:[%s1 + $0x20] sm:$0xff]
  %v20 = vld [vmem:[%s1 + $0x28] sm:$0xff]
  %v21 = vld [vmem:[%s1 + $0x30] sm:$0xff]
  %v22 = vld [vmem:[%s1 + $0x38] sm:$0xff]
  %v23 = vld [vmem:[%s1 + $0x40] sm:$0xff]
  %v24 = vld [vmem:[%s1 + $0x48] sm:$0xff]
  %v25 = vld [vmem:[%s1 + $0x50] sm:$0xff]
  %v26 = vld [vmem:[%s1 + $0x58] sm:$0xff]
  %v27 = vld [vmem:[%s1 + $0x60] sm:$0xff]
  %v28 = vld [vmem:[%s1 + $0x68] sm:$0xff]
  %v29 = vld [vmem:[%s1 + $0x70] sm:$0xff]
  %v30 = vld [vmem:[%s1 + $0x78] sm:$0xff]
  %v31 = vld [vmem:[%s1 + $0x80] sm:$0xff]
  %v32 = vld [vmem:[%s1 + $0x88] sm:$0xff]
  %v33 = vld [vmem:[%s1 + $0x90] sm:$0xff]
  %v34 = vld [vmem:[%s1 + $0x98] sm:$0xff]
  %v35 = vld [vmem:[%s1 + $0xa0] sm:$0xff]
  %v36 = vld [vmem:[%s1 + $0xa8] sm:$0xff]
  %v37 = vld [vmem:[%s1 + $0xb0] sm:$0xff]
  %v38 = vld [vmem:[%s1 + $0xb8] sm:$0xff]
  %v39 = vld [vmem:[%s1 + $0xc0] sm:$0xff]
  %v40 = vld [vmem:[%s1 + $0xc8] sm:$0xff]
  %v41 = vld [vmem:[%s1 + $0xd0] sm:$0xff]
  %v42 = vld [vmem:[%s1 + $0xd8] sm:$0xff]
  %v43 = vld [vmem:[%s1 + $0xe0] sm:$0xff]
  %v44 = vld [vmem:[%s1 + $0xe8] sm:$0xff]
  %v45 = vld [vmem:[%s1 + $0xf0] sm:$0xff]
  %v46 = vld [vmem:[%s1 + $0xf8] sm:$0xff]
  %v47 = vld [vmem:[%s1 + $0x100] sm:$0xff]
  %v48 = vld [vmem:[%s1 + $0x108] sm:$0xff]
  %v49 = vld [vmem:[%s1 + $0x110] sm:$0xff]
  %v50 = vld [vmem:[%s1 + $0x118] sm:$0xff]
  %v51 = vld [vmem:[%s1 + $0x120] sm:$0xff]
  %v52 = vld [vmem:[%s1 + $0x128] sm:$0xff]
  %v53 = vld [vmem:[%s1 + $0x130] sm:$0xff]
  %v54 = vld [vmem:[%s1 + $0x138] sm:$0xff]
  %v55 = vld [vmem:[%s1 + $0x140] sm:$0xff]
  %v56 = vld [vmem:[%s1 + $0x148] sm:$0xff]
  %v57 = vld [vmem:[%s1 + $0x150] sm:$0xff]
  %v58 = vld [vmem:[%s1 + $0x158] sm:$0xff]
  %v59 = vld [vmem:[%s1 + $0x160] sm:$0xff]
  %v60 = vld [vmem:[%s1 + $0x168] sm:$0xff]
  %v61 = vld [vmem:[%s1 + $0x170] sm:$0xff]
  %v62 = vld [vmem:[%s1 + $0x178] sm:$0xff]
  %v63 = vld [vmem:[%s1 + $0x180] sm:$0xff]
  %v64 = vld [vmem:[%s1 + $0x188] sm:$0xff]
  %v65 = vld [vmem:[%s2] sm:$0x1]
  %v67 = vlaneseq
  %v68 = vshrl.u32 %v67, 7
  %v69 = vsub.s32 0, %v68
  %v70 = vrot.slane %v65, %v69
  %v73 = vcombine.high %v14, %v14
  %v75 = vunpack.c.l.s4 1983009808
  %v76 = vunpack.c.0.s8 %v75
  %v77 = vlaneseq
  %v78 = vshrl.u32 %v77, 7
  %v79 = vsub.s32 %v76, %v78
  %v80 = vrot.slane %v14, %v79
  %v82 = vunpack.c.l.s4 1983009808
  %v83 = vunpack.c.0.s8 %v82
  %v84 = vlaneseq
  %v85 = vshrl.u32 %v84, 7
  %v86 = vsub.s32 %v83, %v85
  %v87 = vrot.slane %v73, %v86
  %v88 = vcombine.high %v80, %v80
  %v89 = vcombine.high %v87, %v87
  %vm93 = vcmask 130048
  %v94 = vsel %vm93, %v89, 0
  %96 = vmatprep.subr.mxu0 0.0
  %97 = vmatpush1.msra.mxu0 %v15
  %98 = vmatprep.subr.mxu0 0.0
  %99 = vmatpush1.msra.mxu0 %v16
  %100 = vmatprep.subr.mxu0 0.0
  %101 = vmatpush1.msra.mxu0 %v17
  %102 = vmatprep.subr.mxu0 0.0
  %103 = vmatpush1.msra.mxu0 %v18
  %104 = vmatprep.subr.mxu0 0.0
  %105 = vmatpush1.msra.mxu0 %v19
  %106 = vmatprep.subr.mxu0 0.0
  %107 = vmatpush1.msra.mxu0 %v20
  %108 = vmatprep.subr.mxu0 0.0
  %109 = vmatpush1.msra.mxu0 %v21
  %110 = vmatprep.subr.mxu0 0.0
  %111 = vmatpush1.msra.mxu0 %v22
  %112 = vmatprep.subr.mxu0 0.0
  %113 = vmatpush1.msra.mxu0 %v23
  %114 = vmatprep.subr.mxu0 0.0
  %115 = vmatpush1.msra.mxu0 %v24
  %116 = vmatprep.subr.mxu0 0.0
  %117 = vmatpush1.msra.mxu0 %v25
  %118 = vmatprep.subr.mxu0 0.0
  %119 = vmatpush1.msra.mxu0 %v26
  %120 = vmatprep.subr.mxu0 0.0
  %121 = vmatpush1.msra.mxu0 %v27
  %122 = vmatprep.subr.mxu0 0.0
  %123 = vmatpush1.msra.mxu0 %v28
  %124 = vmatprep.subr.mxu0 0.0
  %125 = vmatpush1.msra.mxu0 %v29
  %126 = vmatprep.subr.mxu0 0.0
  %127 = vmatpush1.msra.mxu0 %v30
  %128 = vmatprep.subr.mxu0 0.0
  %129 = vmatpush1.msra.mxu0 %v31
  %130 = vmatprep.subr.mxu0 0.0
  %131 = vmatpush1.msra.mxu0 %v32
  %132 = vmatprep.subr.mxu0 0.0
  %133 = vmatpush1.msra.mxu0 %v33
  %134 = vmatprep.subr.mxu0 0.0
  %135 = vmatpush1.msra.mxu0 %v34
  %136 = vmatprep.subr.mxu0 0.0
  %137 = vmatpush1.msra.mxu0 %v35
  %138 = vmatprep.subr.mxu0 0.0
  %139 = vmatpush1.msra.mxu0 %v36
  %140 = vmatprep.subr.mxu0 0.0
  %141 = vmatpush1.msra.mxu0 %v37
  %142 = vmatprep.subr.mxu0 0.0
  %143 = vmatpush1.msra.mxu0 %v38
  %144 = vmatprep.subr.mxu0 0.0
  %145 = vmatpush1.msra.mxu0 %v39
  %146 = vmatprep.subr.mxu0 0.0
  %147 = vmatpush1.msra.mxu0 %v40
  %148 = vmatprep.subr.mxu0 0.0
  %149 = vmatpush1.msra.mxu0 %v41
  %150 = vmatprep.subr.mxu0 0.0
  %151 = vmatpush1.msra.mxu0 %v42
  %152 = vmatprep.subr.mxu0 0.0
  %153 = vmatpush1.msra.mxu0 %v43
  %154 = vmatprep.subr.mxu0 0.0
  %155 = vmatpush1.msra.mxu0 %v44
  %156 = vmatprep.subr.mxu0 0.0
  %157 = vmatpush1.msra.mxu0 %v45
  %158 = vmatprep.subr.mxu0 0.0
  %159 = vmatpush1.msra.mxu0 %v46
  %160 = vmatprep.mubr.f32.mxu0 %v88
  %161 = vmatmul.mubr.f32.gmra.mrb[0].mxu0 %v80
  %v162 = vpop.f32.mrb[0].mxu0
  %v163 = vadd.f32 %v70, %v162
  %v164 = vpop.f32.mrb[0].mxu0
  %165 = vdwg.mxu0
  %166 = vmatprep.subr.mxu0 0.0
  %167 = vmatpush1.msra.mxu0 %v47
  %168 = vmatprep.subr.mxu0 0.0
  %169 = vmatpush1.msra.mxu0 %v48
  %170 = vmatprep.subr.mxu0 0.0
  %171 = vmatpush1.msra.mxu0 %v49
  %172 = vmatprep.subr.mxu0 0.0
  %173 = vmatpush1.msra.mxu0 %v50
  %174 = vmatprep.subr.mxu0 0.0
  %175 = vmatpush1.msra.mxu0 %v51
  %176 = vmatprep.subr.mxu0 0.0
  %177 = vmatpush1.msra.mxu0 %v52
  %178 = vmatprep.subr.mxu0 0.0
  %179 = vmatpush1.msra.mxu0 %v53
  %180 = vmatprep.subr.mxu0 0.0
  %181 = vmatpush1.msra.mxu0 %v54
  %182 = vmatprep.subr.mxu0 0.0
  %183 = vmatpush1.msra.mxu0 %v55
  %184 = vmatprep.subr.mxu0 0.0
  %185 = vmatpush1.msra.mxu0 %v56
  %186 = vmatprep.subr.mxu0 0.0
  %187 = vmatpush1.msra.mxu0 %v57
  %188 = vmatprep.subr.mxu0 0.0
  %189 = vmatpush1.msra.mxu0 %v58
  %190 = vmatprep.subr.mxu0 0.0
  %191 = vmatpush1.msra.mxu0 %v59
  %192 = vmatprep.subr.mxu0 0.0
  %193 = vmatpush1.msra.mxu0 %v60
  %194 = vmatprep.subr.mxu0 0.0
  %195 = vmatpush1.msra.mxu0 %v61
  %196 = vmatprep.subr.mxu0 0.0
  %197 = vmatpush1.msra.mxu0 %v62
  %198 = vmatprep.subr.mxu0 0.0
  %199 = vmatpush1.msra.mxu0 %v63
  %200 = vmatprep.subr.mxu0 0.0
  %201 = vmatpush1.msra.mxu0 %v64
  %202 = vmatprep.subr.mxu0 0.0
  %203 = vmatpush1.msra.mxu0 0.0
  %204 = vmatprep.subr.mxu0 0.0
  %205 = vmatpush1.msra.mxu0 0.0
  %206 = vmatprep.subr.mxu0 0.0
  %207 = vmatpush1.msra.mxu0 0.0
  %208 = vmatprep.subr.mxu0 0.0
  %209 = vmatpush1.msra.mxu0 0.0
  %210 = vmatprep.subr.mxu0 0.0
  %211 = vmatpush1.msra.mxu0 0.0
  %212 = vmatprep.subr.mxu0 0.0
  %213 = vmatpush1.msra.mxu0 0.0
  %214 = vmatprep.subr.mxu0 0.0
  %215 = vmatpush1.msra.mxu0 0.0
  %216 = vmatprep.subr.mxu0 0.0
  %217 = vmatpush1.msra.mxu0 0.0
  %218 = vmatprep.subr.mxu0 0.0
  %219 = vmatpush1.msra.mxu0 0.0
  %220 = vmatprep.subr.mxu0 0.0
  %221 = vmatpush1.msra.mxu0 0.0
  %222 = vmatprep.subr.mxu0 0.0
  %223 = vmatpush1.msra.mxu0 0.0
  %224 = vmatprep.subr.mxu0 0.0
  %225 = vmatpush1.msra.mxu0 0.0
  %226 = vmatprep.subr.mxu0 0.0
  %227 = vmatpush1.msra.mxu0 0.0
  %228 = vmatprep.subr.mxu0 0.0
  %229 = vmatpush1.msra.mxu0 0.0
  %230 = vmatprep.mubr.f32.mxu0 %v94
  %231 = vmatmul.mubr.f32.gmra.mrb[0].mxu0 %v87
  %v232 = vpop.f32.mrb[0].mxu0
  %v233 = vadd.f32 %v163, %v232
  %v234 = vpop.f32.mrb[0].mxu0
  %235 = vdwg.mxu0
  %v236 = vsub.f32 0.0, %v233
  %v237 = vmul.f32 %v236, 1.442695
  %v238 = vpow.pop %v237
  %v239 = vadd.f32 %v238, 1.0
  %v240 = vrcp.pop %v239
  %v241 = vmul.f32 1.0, %v240
  %vm242 = vcmask 975872
  %243 = vst.msk [vmem:[%s3] sm:$0x3] %vm242, %v241
  // Predicated region
  $region14: #{lenet_forward.11} parent=0 // pred_check
    _
  $region15: #{lenet_forward.11} parent=0 // pred_check_branch
    %245 = sbr.rel (0) target = $region17
  $region16: #{lenet_forward.11} parent=0 // pred_region
    _
  $region17: #{lenet_forward.11} parent=0 // pred_fallthru
    _
  // Predicated region
  $region18: #{lenet_forward.11} parent=0 // pred_check
    _
  $region19: #{lenet_forward.11} parent=0 // pred_check_branch
    %247 = sbr.rel (0) target = $region21
  $region20: #{lenet_forward.11} parent=0 // pred_region
    _
  $region21: #{lenet_forward.11} parent=0 // pred_fallthru
    _

// kernel: lenet_forward.12
$region0: #{lenet_forward.12}
  #allocation0 [shape = 'u32[]', space=smem, size = 0x4, offset = 0x4, fixed_abs, tag = 'smem constant byte address 0x4 - core index']
  #allocation1 [shape = 'u32[144,128]{1,0:T(1,128)}', space=vmem, size = 0x12000, scoped, tag = 'internal scratch']
  %s0 = inlined_call_operand.vmem [shape: f32[2,120], index: 0, kind: input, shape index: {}]
  %s1 = inlined_call_operand.vmem [shape: f32[120,84], index: 1, kind: input, shape index: {}]
  %s2 = inlined_call_operand.vmem [shape: f32[1,84], index: 2, kind: input, shape index: {}]
  %s3 = inlined_call_operand.vmem [shape: f32[2,84], index: 3, kind: output, shape index: {}]
  %s4 = sld [smem:[#allocation0]]
  $region22: #{lenet_forward.12} parent=0
    _
  %s6 = ssub.s32 1, %s4
  %s7 = scalar_select 0, %s6, %s4
  // Predicated region
  $region2: #{lenet_forward.12} parent=0 // pred_check
    _
  $region3: #{lenet_forward.12} parent=0 // pred_check_branch
    %9 = sbr.rel (0) target = $region5
  $region4: #{lenet_forward.12} parent=0 // pred_region
    _
  $region5: #{lenet_forward.12} parent=0 // pred_fallthru
    _
  // Predicated region
  $region6: #{lenet_forward.12} parent=0 // pred_check
    _
  $region7: #{lenet_forward.12} parent=0 // pred_check_branch
    %11 = sbr.rel (0) target = $region9
  $region8: #{lenet_forward.12} parent=0 // pred_region
    _
  $region9: #{lenet_forward.12} parent=0 // pred_fallthru
    _
  // Predicated region
  $region10: #{lenet_forward.12} parent=0 // pred_check
    _
  $region11: #{lenet_forward.12} parent=0 // pred_check_branch
    %13 = sbr.rel (0) target = $region13
  $region12: #{lenet_forward.12} parent=0 // pred_region
    _
  $region13: #{lenet_forward.12} parent=0 // pred_fallthru
    _
  %v14 = vld [vmem:[%s0] sm:$0x3]
  %v15 = vld [vmem:[%s1] sm:$0xff]
  %v16 = vld [vmem:[%s1 + $0x8] sm:$0xff]
  %v17 = vld [vmem:[%s1 + $0x10] sm:$0xff]
  %v18 = vld [vmem:[%s1 + $0x18] sm:$0xff]
  %v19 = vld [vmem:[%s1 + $0x20] sm:$0xff]
  %v20 = vld [vmem:[%s1 + $0x28] sm:$0xff]
  %v21 = vld [vmem:[%s1 + $0x30] sm:$0xff]
  %v22 = vld [vmem:[%s1 + $0x38] sm:$0xff]
  %v23 = vld [vmem:[%s1 + $0x40] sm:$0xff]
  %v24 = vld [vmem:[%s1 + $0x48] sm:$0xff]
  %v25 = vld [vmem:[%s1 + $0x50] sm:$0xff]
  %v26 = vld [vmem:[%s1 + $0x58] sm:$0xff]
  %v27 = vld [vmem:[%s1 + $0x60] sm:$0xff]
  %v28 = vld [vmem:[%s1 + $0x68] sm:$0xff]
  %v29 = vld [vmem:[%s1 + $0x70] sm:$0xff]
  %v30 = vld [vmem:[%s2] sm:$0x1]
  %v32 = vlaneseq
  %v33 = vshrl.u32 %v32, 7
  %v34 = vsub.s32 0, %v33
  %v35 = vrot.slane %v30, %v34
  %vm37 = vcmask 982016
  %v39 = vsel %vm37, %v14, 0
  %41 = vmatprep.subr.mxu0 0.0
  %42 = vmatpush1.msra.mxu0 %v15
  %43 = vmatprep.subr.mxu0 0.0
  %44 = vmatpush1.msra.mxu0 %v16
  %45 = vmatprep.subr.mxu0 0.0
  %46 = vmatpush1.msra.mxu0 %v17
  %47 = vmatprep.subr.mxu0 0.0
  %48 = vmatpush1.msra.mxu0 %v18
  %49 = vmatprep.subr.mxu0 0.0
  %50 = vmatpush1.msra.mxu0 %v19
  %51 = vmatprep.subr.mxu0 0.0
  %52 = vmatpush1.msra.mxu0 %v20
  %53 = vmatprep.subr.mxu0 0.0
  %54 = vmatpush1.msra.mxu0 %v21
  %55 = vmatprep.subr.mxu0 0.0
  %56 = vmatpush1.msra.mxu0 %v22
  %57 = vmatprep.subr.mxu0 0.0
  %58 = vmatpush1.msra.mxu0 %v23
  %59 = vmatprep.subr.mxu0 0.0
  %60 = vmatpush1.msra.mxu0 %v24
  %61 = vmatprep.subr.mxu0 0.0
  %62 = vmatpush1.msra.mxu0 %v25
  %63 = vmatprep.subr.mxu0 0.0
  %64 = vmatpush1.msra.mxu0 %v26
  %65 = vmatprep.subr.mxu0 0.0
  %66 = vmatpush1.msra.mxu0 %v27
  %67 = vmatprep.subr.mxu0 0.0
  %68 = vmatpush1.msra.mxu0 %v28
  %69 = vmatprep.subr.mxu0 0.0
  %70 = vmatpush1.msra.mxu0 %v29
  %71 = vmatprep.subr.mxu0 0.0
  %72 = vmatpush1.msra.mxu0 0.0
  %73 = vmatprep.subr.mxu0 0.0
  %74 = vmatpush1.msra.mxu0 0.0
  %75 = vmatprep.subr.mxu0 0.0
  %76 = vmatpush1.msra.mxu0 0.0
  %77 = vmatprep.subr.mxu0 0.0
  %78 = vmatpush1.msra.mxu0 0.0
  %79 = vmatprep.subr.mxu0 0.0
  %80 = vmatpush1.msra.mxu0 0.0
  %81 = vmatprep.subr.mxu0 0.0
  %82 = vmatpush1.msra.mxu0 0.0
  %83 = vmatprep.subr.mxu0 0.0
  %84 = vmatpush1.msra.mxu0 0.0
  %85 = vmatprep.subr.mxu0 0.0
  %86 = vmatpush1.msra.mxu0 0.0
  %87 = vmatprep.subr.mxu0 0.0
  %88 = vmatpush1.msra.mxu0 0.0
  %89 = vmatprep.subr.mxu0 0.0
  %90 = vmatpush1.msra.mxu0 0.0
  %91 = vmatprep.subr.mxu0 0.0
  %92 = vmatpush1.msra.mxu0 0.0
  %93 = vmatprep.subr.mxu0 0.0
  %94 = vmatpush1.msra.mxu0 0.0
  %95 = vmatprep.subr.mxu0 0.0
  %96 = vmatpush1.msra.mxu0 0.0
  %97 = vmatprep.subr.mxu0 0.0
  %98 = vmatpush1.msra.mxu0 0.0
  %99 = vmatprep.subr.mxu0 0.0
  %100 = vmatpush1.msra.mxu0 0.0
  %101 = vmatprep.subr.mxu0 0.0
  %102 = vmatpush1.msra.mxu0 0.0
  %103 = vmatprep.subr.mxu0 0.0
  %104 = vmatpush1.msra.mxu0 0.0
  %105 = vmatprep.mubr.f32.mxu0 0.0
  %106 = vmatmul.mubr.f32.gmra.mrb[0].mxu0 %v39
  %v107 = vpop.f32.mrb[0].mxu0
  %v108 = vadd.f32 %v35, %v107
  %v109 = vpop.f32.mrb[0].mxu0
  %110 = vdwg.mxu0
  %v111 = vsub.f32 0.0, %v108
  %v112 = vmul.f32 %v111, 1.442695
  %v113 = vpow.pop %v112
  %v114 = vadd.f32 %v113, 1.0
  %v115 = vrcp.pop %v114
  %v116 = vmul.f32 1.0, %v115
  %vm117 = vcmask 680960
  %118 = vst.msk [vmem:[%s3] sm:$0x3] %vm117, %v116
  // Predicated region
  $region14: #{lenet_forward.12} parent=0 // pred_check
    _
  $region15: #{lenet_forward.12} parent=0 // pred_check_branch
    %120 = sbr.rel (0) target = $region17
  $region16: #{lenet_forward.12} parent=0 // pred_region
    _
  $region17: #{lenet_forward.12} parent=0 // pred_fallthru
    _
  // Predicated region
  $region18: #{lenet_forward.12} parent=0 // pred_check
    _
  $region19: #{lenet_forward.12} parent=0 // pred_check_branch
    %122 = sbr.rel (0) target = $region21
  $region20: #{lenet_forward.12} parent=0 // pred_region
    _
  $region21: #{lenet_forward.12} parent=0 // pred_fallthru
    _

// kernel: lenet_forward.13
$region0: #{lenet_forward.13}
  #allocation0 [shape = 'u32[]', space=smem, size = 0x4, offset = 0x4, fixed_abs, tag = 'smem constant byte address 0x4 - core index']
  #allocation1 [shape = 'u32[144,128]{1,0:T(1,128)}', space=vmem, size = 0x12000, scoped, tag = 'internal scratch']
  %s0 = inlined_call_operand.vmem [shape: f32[2,84], index: 0, kind: input, shape index: {}]
  %s1 = inlined_call_operand.vmem [shape: f32[84,10], index: 1, kind: input, shape index: {}]
  %s2 = inlined_call_operand.vmem [shape: f32[1,10], index: 2, kind: input, shape index: {}]
  %s3 = inlined_call_operand.hbm [shape: f32[2,10], index: 3, kind: output, shape index: {}]
  %s4 = sld [smem:[#allocation0]]
  $region22: #{lenet_forward.13} parent=0
    _
  %s6 = ssub.s32 1, %s4
  %s7 = scalar_select 0, %s6, %s4
  $region1: #{lenet_forward.13} parent=0
    #allocation2 [shape = 'u8[1024]{0}', space=vmem, size = 0x400, scoped, tag = 'output window, operand 0, single buffered']
    #allocation3 [shape = 's32[1]{0}', space=sflag, size = 0x4, scoped, tag = 'scoped memory for lenet_forward.13']
    %8 = vsyncpa [#allocation3], 0
    // Predicated region
    $region2: #{lenet_forward.13} parent=1 // pred_check
      _
    $region3: #{lenet_forward.13} parent=1 // pred_check_branch
      %10 = sbr.rel (0) target = $region5
    $region4: #{lenet_forward.13} parent=1 // pred_region
      _
    $region5: #{lenet_forward.13} parent=1 // pred_fallthru
      _
    // Predicated region
    $region6: #{lenet_forward.13} parent=1 // pred_check
      _
    $region7: #{lenet_forward.13} parent=1 // pred_check_branch
      %12 = sbr.rel (0) target = $region9
    $region8: #{lenet_forward.13} parent=1 // pred_region
      _
    $region9: #{lenet_forward.13} parent=1 // pred_fallthru
      _
    // Predicated region
    $region10: #{lenet_forward.13} parent=1 // pred_check
      _
    $region11: #{lenet_forward.13} parent=1 // pred_check_branch
      %14 = sbr.rel (0) target = $region13
    $region12: #{lenet_forward.13} parent=1 // pred_region
      _
    $region13: #{lenet_forward.13} parent=1 // pred_fallthru
      _
    %v15 = vld [vmem:[%s0] sm:$0x3]
    %v16 = vld [vmem:[%s1] sm:$0xff]
    %v17 = vld [vmem:[%s1 + $0x8] sm:$0xff]
    %v18 = vld [vmem:[%s1 + $0x10] sm:$0xff]
    %v19 = vld [vmem:[%s1 + $0x18] sm:$0xff]
    %v20 = vld [vmem:[%s1 + $0x20] sm:$0xff]
    %v21 = vld [vmem:[%s1 + $0x28] sm:$0xff]
    %v22 = vld [vmem:[%s1 + $0x30] sm:$0xff]
    %v23 = vld [vmem:[%s1 + $0x38] sm:$0xff]
    %v24 = vld [vmem:[%s1 + $0x40] sm:$0xff]
    %v25 = vld [vmem:[%s1 + $0x48] sm:$0xff]
    %v26 = vld [vmem:[%s1 + $0x50] sm:$0xf]
    %v27 = vld [vmem:[%s2] sm:$0x1]
    %v29 = vlaneseq
    %v30 = vshrl.u32 %v29, 7
    %v31 = vsub.s32 0, %v30
    %v32 = vrot.slane %v27, %v31
    %vm34 = vcmask 687104
    %v36 = vsel %vm34, %v15, 0
    %vm38 = vcmask 1043456
    %v40 = vsel %vm38, %v26, 0
    %42 = vmatprep.subr.mxu0 0.0
    %43 = vmatpush1.msra.mxu0 %v16
    %44 = vmatprep.subr.mxu0 0.0
    %45 = vmatpush1.msra.mxu0 %v17
    %46 = vmatprep.subr.mxu0 0.0
    %47 = vmatpush1.msra.mxu0 %v18
    %48 = vmatprep.subr.mxu0 0.0
    %49 = vmatpush1.msra.mxu0 %v19
    %50 = vmatprep.subr.mxu0 0.0
    %51 = vmatpush1.msra.mxu0 %v20
    %52 = vmatprep.subr.mxu0 0.0
    %53 = vmatpush1.msra.mxu0 %v21
    %54 = vmatprep.subr.mxu0 0.0
    %55 = vmatpush1.msra.mxu0 %v22
    %56 = vmatprep.subr.mxu0 0.0
    %57 = vmatpush1.msra.mxu0 %v23
    %58 = vmatprep.subr.mxu0 0.0
    %59 = vmatpush1.msra.mxu0 %v24
    %60 = vmatprep.subr.mxu0 0.0
    %61 = vmatpush1.msra.mxu0 %v25
    %62 = vmatprep.subr.mxu0 0.0
    %63 = vmatpush1.msra.mxu0 %v40
    %64 = vmatprep.subr.mxu0 0.0
    %65 = vmatpush1.msra.mxu0 0.0
    %66 = vmatprep.subr.mxu0 0.0
    %67 = vmatpush1.msra.mxu0 0.0
    %68 = vmatprep.subr.mxu0 0.0
    %69 = vmatpush1.msra.mxu0 0.0
    %70 = vmatprep.subr.mxu0 0.0
    %71 = vmatpush1.msra.mxu0 0.0
    %72 = vmatprep.subr.mxu0 0.0
    %73 = vmatpush1.msra.mxu0 0.0
    %74 = vmatprep.subr.mxu0 0.0
    %75 = vmatpush1.msra.mxu0 0.0
    %76 = vmatprep.subr.mxu0 0.0
    %77 = vmatpush1.msra.mxu0 0.0
    %78 = vmatprep.subr.mxu0 0.0
    %79 = vmatpush1.msra.mxu0 0.0
    %80 = vmatprep.subr.mxu0 0.0
    %81 = vmatpush1.msra.mxu0 0.0
    %82 = vmatprep.subr.mxu0 0.0
    %83 = vmatpush1.msra.mxu0 0.0
    %84 = vmatprep.subr.mxu0 0.0
    %85 = vmatpush1.msra.mxu0 0.0
    %86 = vmatprep.subr.mxu0 0.0
    %87 = vmatpush1.msra.mxu0 0.0
    %88 = vmatprep.subr.mxu0 0.0
    %89 = vmatpush1.msra.mxu0 0.0
    %90 = vmatprep.subr.mxu0 0.0
    %91 = vmatpush1.msra.mxu0 0.0
    %92 = vmatprep.subr.mxu0 0.0
    %93 = vmatpush1.msra.mxu0 0.0
    %94 = vmatprep.subr.mxu0 0.0
    %95 = vmatpush1.msra.mxu0 0.0
    %96 = vmatprep.subr.mxu0 0.0
    %97 = vmatpush1.msra.mxu0 0.0
    %98 = vmatprep.subr.mxu0 0.0
    %99 = vmatpush1.msra.mxu0 0.0
    %100 = vmatprep.subr.mxu0 0.0
    %101 = vmatpush1.msra.mxu0 0.0
    %102 = vmatprep.subr.mxu0 0.0
    %103 = vmatpush1.msra.mxu0 0.0
    %104 = vmatprep.subr.mxu0 0.0
    %105 = vmatpush1.msra.mxu0 0.0
    %106 = vmatprep.mubr.f32.mxu0 0.0
    %107 = vmatmul.mubr.f32.gmra.mrb[0].mxu0 %v36
    %v108 = vpop.f32.mrb[0].mxu0
    %v109 = vadd.f32 %v32, %v108
    %v110 = vpop.f32.mrb[0].mxu0
    %111 = vdwg.mxu0
    %vm112 = vcmask 74752
    %113 = vst.msk [vmem:[#allocation2] sm:$0x3] %vm112, %v109
    // Predicated region
    $region14: #{lenet_forward.13} parent=1 // pred_check
      _
    $region15: #{lenet_forward.13} parent=1 // pred_check_branch
      %115 = sbr.rel (0) target = $region17
    $region16: #{lenet_forward.13} parent=1 // pred_region
      %s117 = ssub.s32 32, 32
      %118 = vsyncadd [#allocation3], %s117
      %s120 = sshll.u32 [#allocation2], 4
      %s121 = int_to_ptr.vmem [resolvable:$true] %s120
      %123 = dma.vmem_to_hbm [thread:$0]  %s121, 32, %s3, [#allocation3]
    $region17: #{lenet_forward.13} parent=1 // pred_fallthru
      _
    // Predicated region
    $region18: #{lenet_forward.13} parent=1 // pred_check
      _
    $region19: #{lenet_forward.13} parent=1 // pred_check_branch
      %125 = sbr.rel (0) target = $region21
    $region20: #{lenet_forward.13} parent=1 // pred_region
      %126 = dma.done [#allocation3], 32
    $region21: #{lenet_forward.13} parent=1 // pred_fallthru
      _
    %127 = vsyncpa [#allocation3], 1

</llo_original>
